<compile_context>
chip_gen: v5e
topology: v5e:2x2
jax: 0.10.0
libtpu: 0.0.40
codegen_flags: <defaults>
</compile_context>

<pallas_src>
import math
import numpy as np
import jax
import jax.numpy as jnp
from jax.experimental import pallas as pl
from jax.experimental.pallas import tpu as pltpu

LN_EPS = 1e-5   # PyTorch nn.LayerNorm default
LANE = 128
SUBLANE = 8


def _round_up(x, m):
    return ((x + m - 1) // m) * m


def _pick_affine_dtype():
    """bf16 LN-affine/ReLU where the VPU has native bf16 (v6e/v7x); f32 on v5e & older."""
    try:
        kind = jax.devices()[0].device_kind.lower()
    except Exception:
        return jnp.float32
    if any(v in kind for v in ("v2", "v3", "v4", "v5")):
        return jnp.float32
    return jnp.bfloat16


# ---------------------------------------------------------------------------
# Fused kernel (built per MLP architecture; layer count is static).
# ---------------------------------------------------------------------------
def _make_mlp_kernel(n_hidden, hidden_dims, mxu_dtype, affine_dtype):
    """refs = (x, [w, b, gamma, beta] * n_hidden, w_out, b_out, o)."""
    hidden_dims = list(hidden_dims)
    affine_is_f32 = (np.dtype(affine_dtype) == np.dtype(np.float32))

    def kernel(*refs):
        x_ref = refs[0]
        o_ref = refs[-1]
        p = refs[1:-1]

        h = x_ref[...]                               # (tb, in_pad), bf16
        k = 0
        for li in range(n_hidden):
            w_ref, b_ref, g_ref, beta_ref = p[k], p[k + 1], p[k + 2], p[k + 3]
            k += 4

            # Linear: bf16 MXU operands, f32 accumulation. (h already bf16 on v6e/v7x.)
            lhs = h if h.dtype == np.dtype(mxu_dtype) else h.astype(mxu_dtype)
            y = jnp.dot(lhs, w_ref[...], preferred_element_type=jnp.float32)
            y = y + b_ref[...]                       # (1, d_pad) f32 broadcast

            # LayerNorm over the valid feature width, f32 math, no runtime mask:
            # padded lanes of y are exactly 0 (zero-padded W columns + bias), so
            #   mean      = sum_all(y) / d_valid
            #   sum(c^2)  = sum_all((y-mean)^2) - (d_pad - d_valid) * mean^2
            d_pad = y.shape[-1]
            d_valid = hidden_dims[li]
            inv_d = jnp.float32(1.0 / d_valid)
            mean = jnp.sum(y, axis=-1, keepdims=True) * inv_d
            c = y - mean
            ssq = jnp.sum(c * c, axis=-1, keepdims=True)
            if d_valid != d_pad:
                ssq = ssq - jnp.float32(d_pad - d_valid) * (mean * mean)
            var = jnp.maximum(ssq * inv_d, 0.0)
            y_norm = c * jax.lax.rsqrt(var + LN_EPS)          # f32 (rsqrt -> EUP slot)

            # Affine + ReLU. gamma/beta are zero in padded lanes -> padded lanes of h = 0.
            g = g_ref[...]
            be = beta_ref[...]
            if not affine_is_f32:                    # v6e/v7x: bf16 VPU path
                y_norm = y_norm.astype(affine_dtype)
                g = g.astype(affine_dtype)
                be = be.astype(affine_dtype)
            h = jnp.maximum(y_norm * g + be, 0.0)

        # Final Linear (no norm, no activation).
        w_ref, b_ref = p[k], p[k + 1]
        lhs = h if h.dtype == np.dtype(mxu_dtype) else h.astype(mxu_dtype)
        y = jnp.dot(lhs, w_ref[...], preferred_element_type=jnp.float32)
        o_ref[...] = (y + b_ref[...]).astype(o_ref.dtype)

    return kernel


# ---------------------------------------------------------------------------
# Parameter init (mirrors the PyTorch module with init_type='kaiming').
# ---------------------------------------------------------------------------
def init_mlp_params(key, input_dim, output_dim, hidden_dims):
    """Weights stored as (in_dim, out_dim) (transposed vs torch's (out, in)).
    kaiming_normal_ on (out, in) -> std = sqrt(2 / in_dim); bias ~ N(0, 1e-6).
    LayerNorm: gamma = 1, beta = 0."""
    if isinstance(hidden_dims, int):
        hidden_dims = [hidden_dims]
    dims = [input_dim] + list(hidden_dims) + [output_dim]
    params = []
    for in_dim, out_dim in zip(dims[:-1], dims[1:]):
        key, kw, kb = jax.random.split(key, 3)
        std = math.sqrt(2.0 / in_dim)
        w = jax.random.normal(kw, (in_dim, out_dim), dtype=jnp.float32) * std
        b = jax.random.normal(kb, (out_dim,), dtype=jnp.float32) * 1e-6
        params.append({"w": w, "b": b})
    norms = [
        {"gamma": jnp.ones((d,), jnp.float32), "beta": jnp.zeros((d,), jnp.float32)}
        for d in hidden_dims
    ]
    return params, norms, list(hidden_dims)


def pack_mlp_params(params, norms, input_dim, output_dim, hidden_dims,
                    mxu_dtype=jnp.bfloat16):
    """Zero-pad all feature dims to 128-lane multiples, store weights in bf16 and
    bias/gamma/beta as (1, dim_pad) f32. Done once (not per forward call)."""
    dims = [input_dim] + list(hidden_dims) + [output_dim]
    padded = [max(LANE, _round_up(d, LANE)) for d in dims]
    flat = []
    n_hidden = len(hidden_dims)
    for li, (in_d, out_d) in enumerate(zip(dims[:-1], dims[1:])):
        in_p, out_p = padded[li], padded[li + 1]
        w = jnp.zeros((in_p, out_p), jnp.float32).at[:in_d, :out_d].set(params[li]["w"])
        b = jnp.zeros((1, out_p), jnp.float32).at[0, :out_d].set(params[li]["b"])
        flat.append(w.astype(mxu_dtype))
        flat.append(b)
        if li < n_hidden:
            g = jnp.zeros((1, out_p), jnp.float32).at[0, :out_d].set(norms[li]["gamma"])
            be = jnp.zeros((1, out_p), jnp.float32).at[0, :out_d].set(norms[li]["beta"])
            flat.append(g)
            flat.append(be)
    return flat, padded


# ---------------------------------------------------------------------------
# Forward pass: single fused pallas_call, batch-tiled grid.
# ---------------------------------------------------------------------------
def mlp_forward(x, packed, padded_dims, input_dim, output_dim, hidden_dims,
                mxu_dtype=jnp.bfloat16, batch_tile=256, affine_dtype=None):
    if affine_dtype is None:
        affine_dtype = _pick_affine_dtype()

    B = x.shape[0]
    n_hidden = len(hidden_dims)
    in_pad, out_pad = padded_dims[0], padded_dims[-1]
    mxu_bytes = np.dtype(mxu_dtype).itemsize

    # --- Batch tile: multiple of 128 (MXU M rows + bf16 sublane packing). ---------------
    tb = max(LANE, min(_round_up(batch_tile, LANE), _round_up(B, LANE)))
    B_pad = _round_up(B, tb)
    # v7x megacore: prefer >= 2 grid steps so the "parallel" axis shards across both TCs.
    if B_pad // tb < 2 and tb >= 2 * LANE:
        tb = max(LANE, (tb // (2 * LANE)) * LANE)
        B_pad = _round_up(B, tb)
    grid = (B_pad // tb,)

    # --- Input: bf16, pad only if needed (single fused pad, no zeros().at[].set()). -----
    if B_pad == B and in_pad == input_dim:
        x_p = x if x.dtype == np.dtype(mxu_dtype) else x.astype(mxu_dtype)
    else:
        x_p = jnp.pad(x.astype(mxu_dtype),
                      ((0, B_pad - B), (0, in_pad - input_dim)))

    out_specs = pl.BlockSpec((tb, out_pad), lambda i: (i, 0))

    def _build_in_specs(single_buffer_weights):
        specs = [pl.BlockSpec((tb, in_pad), lambda i: (i, 0))]
        for arr in packed:
            if single_buffer_weights:
                # Constant index_map -> one resident buffer is enough; halves weight VMEM.
                specs.append(pl.BlockSpec(arr.shape, lambda i: (0, 0),
                                          pipeline_mode=pl.Buffered(1)))
            else:
                specs.append(pl.BlockSpec(arr.shape, lambda i: (0, 0)))
        return specs

    # --- Scoped VMEM budget: weights (assume worst-case 2 buffers) + 2x IO tiles + temps.
    weight_bytes = sum(int(a.size) * a.dtype.itemsize for a in packed)
    io_bytes = 2 * (tb * in_pad * mxu_bytes + tb * out_pad * 4)
    act_bytes = 6 * tb * max(padded_dims) * 4          # rough per-layer f32 temporaries
    vmem_need = 2 * weight_bytes + io_bytes + act_bytes
    vmem_limit = int(min(64 * 1024 * 1024, max(32 * 1024 * 1024, int(vmem_need * 1.3))))

    # Advisory cost estimate for XLA scheduling.
    flops = 2 * B_pad * sum(padded_dims[i] * padded_dims[i + 1]
                            for i in range(len(padded_dims) - 1))
    bytes_accessed = int(B_pad * in_pad * mxu_bytes
                         + weight_bytes
                         + B_pad * out_pad * 4)
    cost = pl.CostEstimate(flops=flops,
                           transcendentals=B_pad * n_hidden,
                           bytes_accessed=bytes_accessed)

    kernel = _make_mlp_kernel(n_hidden, hidden_dims, mxu_dtype, affine_dtype)

    def _run(single_buffer_weights):
        out = pl.pallas_call(
            kernel,
            out_shape=jax.ShapeDtypeStruct((B_pad, out_pad), jnp.float32),
            grid=grid,
            in_specs=_build_in_specs(single_buffer_weights),
            out_specs=out_specs,
            compiler_params=pltpu.CompilerParams(
                dimension_semantics=("parallel",),     # batch axis -> both TCs on v7x
                vmem_limit_bytes=vmem_limit),
            cost_estimate=cost,
        )(x_p, *packed)
        return jax.block_until_ready(out)

    try:
        out = _run(True)        # single-buffered resident weights (preferred)
    except Exception:
        out = _run(False)       # fallback: default double-buffering (always supported)

    return out[:B, :output_dim]


# ---------------------------------------------------------------------------
# Pure-JAX reference (same math: bf16 MXU operands, f32 LN) for the check.
# ---------------------------------------------------------------------------
def mlp_reference(x, params, norms, mxu_dtype=jnp.bfloat16):
    h = x
    n_hidden = len(norms)
    for i in range(n_hidden):
        y = jnp.dot(h.astype(mxu_dtype), params[i]["w"].astype(mxu_dtype),
                    preferred_element_type=jnp.float32) + params[i]["b"]
        mean = jnp.mean(y, axis=-1, keepdims=True)
        var = jnp.mean((y - mean) ** 2, axis=-1, keepdims=True)
        y = (y - mean) / jnp.sqrt(var + LN_EPS)
        y = y * norms[i]["gamma"] + norms[i]["beta"]
        h = jnp.maximum(y, 0.0)
    return jnp.dot(h.astype(mxu_dtype), params[-1]["w"].astype(mxu_dtype),
                   preferred_element_type=jnp.float32) + params[-1]["b"]


if __name__ == "__main__":
    key = jax.random.PRNGKey(0)
    k_x, k_p = jax.random.split(key)

    batch = 8
    input_dim = 16
    hidden_dims = [32, 32]
    output_dim = 8

    x = jax.random.normal(k_x, (batch, input_dim), dtype=jnp.float32)
    params, norms, hidden_dims = init_mlp_params(k_p, input_dim, output_dim, hidden_dims)
    packed, padded_dims = pack_mlp_params(params, norms, input_dim, output_dim, hidden_dims)

    out = mlp_forward(x, packed, padded_dims, input_dim, output_dim, hidden_dims)
    out = jax.block_until_ready(out)

    ref = mlp_reference(x, params, norms)
    assert out.shape == (batch, output_dim), out.shape
    assert jnp.allclose(out, ref, atol=2e-3, rtol=2e-3), "mismatch vs reference"

    print("KERNEL_OK")
</pallas_src>

<mosaic_0001>
module attributes {stable_mosaic.version = 11 : i64} {
  func.func @kernel(%arg0: i32, %arg1: memref<128x128xbf16, #tpu.memory_space<vmem>>, %arg2: memref<128x128xbf16, #tpu.memory_space<vmem>>, %arg3: memref<1x128xf32, #tpu.memory_space<vmem>>, %arg4: memref<1x128xf32, #tpu.memory_space<vmem>>, %arg5: memref<1x128xf32, #tpu.memory_space<vmem>>, %arg6: memref<128x128xbf16, #tpu.memory_space<vmem>>, %arg7: memref<1x128xf32, #tpu.memory_space<vmem>>, %arg8: memref<1x128xf32, #tpu.memory_space<vmem>>, %arg9: memref<1x128xf32, #tpu.memory_space<vmem>>, %arg10: memref<128x128xbf16, #tpu.memory_space<vmem>>, %arg11: memref<1x128xf32, #tpu.memory_space<vmem>>, %arg12: memref<128x128xf32, #tpu.memory_space<vmem>>) attributes {dimension_semantics = [#tpu.dimension_semantics<parallel>], iteration_bounds = array<i64: 1>, scalar_prefetch = 0 : i64, scratch_operands = 0 : i64, tpu.core_type = #tpu.core_type<tc>, window_params = [{transform_indices = @transform_0, window_bounds = array<i64: 128, 128>}, {pipeline_mode = #tpu.pipeline_mode<synchronous>, transform_indices = @transform_1, window_bounds = array<i64: 128, 128>}, {pipeline_mode = #tpu.pipeline_mode<synchronous>, transform_indices = @transform_2, window_bounds = array<i64: 1, 128>}, {pipeline_mode = #tpu.pipeline_mode<synchronous>, transform_indices = @transform_3, window_bounds = array<i64: 1, 128>}, {pipeline_mode = #tpu.pipeline_mode<synchronous>, transform_indices = @transform_4, window_bounds = array<i64: 1, 128>}, {pipeline_mode = #tpu.pipeline_mode<synchronous>, transform_indices = @transform_5, window_bounds = array<i64: 128, 128>}, {pipeline_mode = #tpu.pipeline_mode<synchronous>, transform_indices = @transform_6, window_bounds = array<i64: 1, 128>}, {pipeline_mode = #tpu.pipeline_mode<synchronous>, transform_indices = @transform_7, window_bounds = array<i64: 1, 128>}, {pipeline_mode = #tpu.pipeline_mode<synchronous>, transform_indices = @transform_8, window_bounds = array<i64: 1, 128>}, {pipeline_mode = #tpu.pipeline_mode<synchronous>, transform_indices = @transform_9, window_bounds = array<i64: 128, 128>}, {pipeline_mode = #tpu.pipeline_mode<synchronous>, transform_indices = @transform_10, window_bounds = array<i64: 1, 128>}, {transform_indices = @transform_11, window_bounds = array<i64: 128, 128>}]} {
    %c0 = arith.constant 0 : index
    %c0_0 = arith.constant 0 : index
    %0 = vector.load %arg1[%c0, %c0_0] : memref<128x128xbf16, #tpu.memory_space<vmem>>, vector<128x128xbf16>
    %c0_1 = arith.constant 0 : index
    %c0_2 = arith.constant 0 : index
    %1 = vector.load %arg2[%c0_1, %c0_2] : memref<128x128xbf16, #tpu.memory_space<vmem>>, vector<128x128xbf16>
    %cst = arith.constant dense<0.000000e+00> : vector<128x128xf32>
    %2 = tpu.matmul %0, %1, %cst {dimension_numbers = #tpu.dot_dimension_numbers<[1], [0], [0], [1], [0, 0, 1, 1], [], []>} : vector<128x128xbf16>, vector<128x128xbf16>, vector<128x128xf32> -> vector<128x128xf32>
    %c0_3 = arith.constant 0 : index
    %c0_4 = arith.constant 0 : index
    %3 = vector.load %arg3[%c0_3, %c0_4] : memref<1x128xf32, #tpu.memory_space<vmem>>, vector<1x128xf32>
    %4 = vector.broadcast %3 : vector<1x128xf32> to vector<128x128xf32>
    %5 = arith.addf %2, %4 : vector<128x128xf32>
    %cst_5 = arith.constant dense<0.000000e+00> : vector<128xf32>
    %6 = vector.multi_reduction <add>, %5, %cst_5 [1] : vector<128x128xf32> to vector<128xf32>
    %7 = vector.shape_cast %6 : vector<128xf32> to vector<128x1xf32>
    %cst_6 = arith.constant 3.125000e-02 : f32
    %8 = vector.broadcast %cst_6 : f32 to vector<128x1xf32>
    %9 = arith.mulf %7, %8 : vector<128x1xf32>
    %10 = vector.broadcast %9 : vector<128x1xf32> to vector<128x128xf32>
    %11 = arith.subf %5, %10 : vector<128x128xf32>
    %12 = arith.mulf %11, %11 : vector<128x128xf32>
    %cst_7 = arith.constant dense<0.000000e+00> : vector<128xf32>
    %13 = vector.multi_reduction <add>, %12, %cst_7 [1] : vector<128x128xf32> to vector<128xf32>
    %14 = vector.shape_cast %13 : vector<128xf32> to vector<128x1xf32>
    %15 = arith.mulf %9, %9 : vector<128x1xf32>
    %cst_8 = arith.constant 9.600000e+01 : f32
    %16 = vector.broadcast %cst_8 : f32 to vector<128x1xf32>
    %17 = arith.mulf %16, %15 : vector<128x1xf32>
    %18 = arith.subf %14, %17 : vector<128x1xf32>
    %cst_9 = arith.constant 3.125000e-02 : f32
    %19 = vector.broadcast %cst_9 : f32 to vector<128x1xf32>
    %20 = arith.mulf %18, %19 : vector<128x1xf32>
    %cst_10 = arith.constant 0.000000e+00 : f32
    %21 = vector.broadcast %cst_10 : f32 to vector<128x1xf32>
    %22 = arith.maximumf %20, %21 : vector<128x1xf32>
    %cst_11 = arith.constant 9.99999974E-6 : f32
    %23 = vector.broadcast %cst_11 : f32 to vector<128x1xf32>
    %24 = arith.addf %22, %23 : vector<128x1xf32>
    %25 = math.rsqrt %24 : vector<128x1xf32>
    %26 = vector.broadcast %25 : vector<128x1xf32> to vector<128x128xf32>
    %27 = arith.mulf %11, %26 : vector<128x128xf32>
    %c0_12 = arith.constant 0 : index
    %c0_13 = arith.constant 0 : index
    %28 = vector.load %arg4[%c0_12, %c0_13] : memref<1x128xf32, #tpu.memory_space<vmem>>, vector<1x128xf32>
    %c0_14 = arith.constant 0 : index
    %c0_15 = arith.constant 0 : index
    %29 = vector.load %arg5[%c0_14, %c0_15] : memref<1x128xf32, #tpu.memory_space<vmem>>, vector<1x128xf32>
    %30 = arith.truncf %27 : vector<128x128xf32> to vector<128x128xbf16>
    %31 = arith.truncf %28 : vector<1x128xf32> to vector<1x128xbf16>
    %32 = arith.truncf %29 : vector<1x128xf32> to vector<1x128xbf16>
    %33 = vector.broadcast %31 : vector<1x128xbf16> to vector<128x128xbf16>
    %34 = arith.mulf %30, %33 : vector<128x128xbf16>
    %35 = vector.broadcast %32 : vector<1x128xbf16> to vector<128x128xbf16>
    %36 = arith.addf %34, %35 : vector<128x128xbf16>
    %cst_16 = arith.constant 0.000000e+00 : bf16
    %37 = vector.broadcast %cst_16 : bf16 to vector<128x128xbf16>
    %38 = arith.maximumf %36, %37 : vector<128x128xbf16>
    %c0_17 = arith.constant 0 : index
    %c0_18 = arith.constant 0 : index
    %39 = vector.load %arg6[%c0_17, %c0_18] : memref<128x128xbf16, #tpu.memory_space<vmem>>, vector<128x128xbf16>
    %cst_19 = arith.constant dense<0.000000e+00> : vector<128x128xf32>
    %40 = tpu.matmul %38, %39, %cst_19 {dimension_numbers = #tpu.dot_dimension_numbers<[1], [0], [0], [1], [0, 0, 1, 1], [], []>} : vector<128x128xbf16>, vector<128x128xbf16>, vector<128x128xf32> -> vector<128x128xf32>
    %c0_20 = arith.constant 0 : index
    %c0_21 = arith.constant 0 : index
    %41 = vector.load %arg7[%c0_20, %c0_21] : memref<1x128xf32, #tpu.memory_space<vmem>>, vector<1x128xf32>
    %42 = vector.broadcast %41 : vector<1x128xf32> to vector<128x128xf32>
    %43 = arith.addf %40, %42 : vector<128x128xf32>
    %cst_22 = arith.constant dense<0.000000e+00> : vector<128xf32>
    %44 = vector.multi_reduction <add>, %43, %cst_22 [1] : vector<128x128xf32> to vector<128xf32>
    %45 = vector.shape_cast %44 : vector<128xf32> to vector<128x1xf32>
    %cst_23 = arith.constant 3.125000e-02 : f32
    %46 = vector.broadcast %cst_23 : f32 to vector<128x1xf32>
    %47 = arith.mulf %45, %46 : vector<128x1xf32>
    %48 = vector.broadcast %47 : vector<128x1xf32> to vector<128x128xf32>
    %49 = arith.subf %43, %48 : vector<128x128xf32>
    %50 = arith.mulf %49, %49 : vector<128x128xf32>
    %cst_24 = arith.constant dense<0.000000e+00> : vector<128xf32>
    %51 = vector.multi_reduction <add>, %50, %cst_24 [1] : vector<128x128xf32> to vector<128xf32>
    %52 = vector.shape_cast %51 : vector<128xf32> to vector<128x1xf32>
    %53 = arith.mulf %47, %47 : vector<128x1xf32>
    %cst_25 = arith.constant 9.600000e+01 : f32
    %54 = vector.broadcast %cst_25 : f32 to vector<128x1xf32>
    %55 = arith.mulf %54, %53 : vector<128x1xf32>
    %56 = arith.subf %52, %55 : vector<128x1xf32>
    %cst_26 = arith.constant 3.125000e-02 : f32
    %57 = vector.broadcast %cst_26 : f32 to vector<128x1xf32>
    %58 = arith.mulf %56, %57 : vector<128x1xf32>
    %cst_27 = arith.constant 0.000000e+00 : f32
    %59 = vector.broadcast %cst_27 : f32 to vector<128x1xf32>
    %60 = arith.maximumf %58, %59 : vector<128x1xf32>
    %cst_28 = arith.constant 9.99999974E-6 : f32
    %61 = vector.broadcast %cst_28 : f32 to vector<128x1xf32>
    %62 = arith.addf %60, %61 : vector<128x1xf32>
    %63 = math.rsqrt %62 : vector<128x1xf32>
    %64 = vector.broadcast %63 : vector<128x1xf32> to vector<128x128xf32>
    %65 = arith.mulf %49, %64 : vector<128x128xf32>
    %c0_29 = arith.constant 0 : index
    %c0_30 = arith.constant 0 : index
    %66 = vector.load %arg8[%c0_29, %c0_30] : memref<1x128xf32, #tpu.memory_space<vmem>>, vector<1x128xf32>
    %c0_31 = arith.constant 0 : index
    %c0_32 = arith.constant 0 : index
    %67 = vector.load %arg9[%c0_31, %c0_32] : memref<1x128xf32, #tpu.memory_space<vmem>>, vector<1x128xf32>
    %68 = arith.truncf %65 : vector<128x128xf32> to vector<128x128xbf16>
    %69 = arith.truncf %66 : vector<1x128xf32> to vector<1x128xbf16>
    %70 = arith.truncf %67 : vector<1x128xf32> to vector<1x128xbf16>
    %71 = vector.broadcast %69 : vector<1x128xbf16> to vector<128x128xbf16>
    %72 = arith.mulf %68, %71 : vector<128x128xbf16>
    %73 = vector.broadcast %70 : vector<1x128xbf16> to vector<128x128xbf16>
    %74 = arith.addf %72, %73 : vector<128x128xbf16>
    %cst_33 = arith.constant 0.000000e+00 : bf16
    %75 = vector.broadcast %cst_33 : bf16 to vector<128x128xbf16>
    %76 = arith.maximumf %74, %75 : vector<128x128xbf16>
    %c0_34 = arith.constant 0 : index
    %c0_35 = arith.constant 0 : index
    %77 = vector.load %arg10[%c0_34, %c0_35] : memref<128x128xbf16, #tpu.memory_space<vmem>>, vector<128x128xbf16>
    %cst_36 = arith.constant dense<0.000000e+00> : vector<128x128xf32>
    %78 = tpu.matmul %76, %77, %cst_36 {dimension_numbers = #tpu.dot_dimension_numbers<[1], [0], [0], [1], [0, 0, 1, 1], [], []>} : vector<128x128xbf16>, vector<128x128xbf16>, vector<128x128xf32> -> vector<128x128xf32>
    %c0_37 = arith.constant 0 : index
    %c0_38 = arith.constant 0 : index
    %79 = vector.load %arg11[%c0_37, %c0_38] : memref<1x128xf32, #tpu.memory_space<vmem>>, vector<1x128xf32>
    %80 = vector.broadcast %79 : vector<1x128xf32> to vector<128x128xf32>
    %81 = arith.addf %78, %80 : vector<128x128xf32>
    %c0_39 = arith.constant 0 : index
    %c0_40 = arith.constant 0 : index
    %82 = vector.load %arg12[%c0_39, %c0_40] : memref<128x128xf32, #tpu.memory_space<vmem>>, vector<128x128xf32>
    tpu.vector_store %arg12[%c0_39, %c0_40], %81 {strides = array<i32>} : memref<128x128xf32, #tpu.memory_space<vmem>>, vector<128x128xf32>,
    return
  }
  func.func @transform_0(%arg0: i32) -> (i32, i32) {
    %c0_i32 = arith.constant 0 : i32
    %c0_i32_0 = arith.constant 0 : i32
    return %arg0, %c0_i32 : i32, i32
  }
  func.func @transform_1(%arg0: i32) -> (i32, i32) {
    %c0_i32 = arith.constant 0 : i32
    %c0_i32_0 = arith.constant 0 : i32
    %c0_i32_1 = arith.constant 0 : i32
    return %c0_i32, %c0_i32_0 : i32, i32
  }
  func.func @transform_2(%arg0: i32) -> (i32, i32) {
    %c0_i32 = arith.constant 0 : i32
    %c0_i32_0 = arith.constant 0 : i32
    %c0_i32_1 = arith.constant 0 : i32
    return %c0_i32, %c0_i32_0 : i32, i32
  }
  func.func @transform_3(%arg0: i32) -> (i32, i32) {
    %c0_i32 = arith.constant 0 : i32
    %c0_i32_0 = arith.constant 0 : i32
    %c0_i32_1 = arith.constant 0 : i32
    return %c0_i32, %c0_i32_0 : i32, i32
  }
  func.func @transform_4(%arg0: i32) -> (i32, i32) {
    %c0_i32 = arith.constant 0 : i32
    %c0_i32_0 = arith.constant 0 : i32
    %c0_i32_1 = arith.constant 0 : i32
    return %c0_i32, %c0_i32_0 : i32, i32
  }
  func.func @transform_5(%arg0: i32) -> (i32, i32) {
    %c0_i32 = arith.constant 0 : i32
    %c0_i32_0 = arith.constant 0 : i32
    %c0_i32_1 = arith.constant 0 : i32
    return %c0_i32, %c0_i32_0 : i32, i32
  }
  func.func @transform_6(%arg0: i32) -> (i32, i32) {
    %c0_i32 = arith.constant 0 : i32
    %c0_i32_0 = arith.constant 0 : i32
    %c0_i32_1 = arith.constant 0 : i32
    return %c0_i32, %c0_i32_0 : i32, i32
  }
  func.func @transform_7(%arg0: i32) -> (i32, i32) {
    %c0_i32 = arith.constant 0 : i32
    %c0_i32_0 = arith.constant 0 : i32
    %c0_i32_1 = arith.constant 0 : i32
    return %c0_i32, %c0_i32_0 : i32, i32
  }
  func.func @transform_8(%arg0: i32) -> (i32, i32) {
    %c0_i32 = arith.constant 0 : i32
    %c0_i32_0 = arith.constant 0 : i32
    %c0_i32_1 = arith.constant 0 : i32
    return %c0_i32, %c0_i32_0 : i32, i32
  }
  func.func @transform_9(%arg0: i32) -> (i32, i32) {
    %c0_i32 = arith.constant 0 : i32
    %c0_i32_0 = arith.constant 0 : i32
    %c0_i32_1 = arith.constant 0 : i32
    return %c0_i32, %c0_i32_0 : i32, i32
  }
  func.func @transform_10(%arg0: i32) -> (i32, i32) {
    %c0_i32 = arith.constant 0 : i32
    %c0_i32_0 = arith.constant 0 : i32
    %c0_i32_1 = arith.constant 0 : i32
    return %c0_i32, %c0_i32_0 : i32, i32
  }
  func.func @transform_11(%arg0: i32) -> (i32, i32) {
    %c0_i32 = arith.constant 0 : i32
    %c0_i32_0 = arith.constant 0 : i32
    return %arg0, %c0_i32 : i32, i32
  }
}

module attributes {stable_mosaic.version = 11 : i64} {
  func.func @kernel(%arg0: i32, %arg1: memref<128x128xbf16, #tpu.memory_space<vmem>>, %arg2: memref<128x128xbf16, #tpu.memory_space<vmem>>, %arg3: memref<1x128xf32, #tpu.memory_space<vmem>>, %arg4: memref<1x128xf32, #tpu.memory_space<vmem>>, %arg5: memref<1x128xf32, #tpu.memory_space<vmem>>, %arg6: memref<128x128xbf16, #tpu.memory_space<vmem>>, %arg7: memref<1x128xf32, #tpu.memory_space<vmem>>, %arg8: memref<1x128xf32, #tpu.memory_space<vmem>>, %arg9: memref<1x128xf32, #tpu.memory_space<vmem>>, %arg10: memref<128x128xbf16, #tpu.memory_space<vmem>>, %arg11: memref<1x128xf32, #tpu.memory_space<vmem>>, %arg12: memref<128x128xf32, #tpu.memory_space<vmem>>) attributes {dimension_semantics = [#tpu.dimension_semantics<parallel>], iteration_bounds = array<i64: 1>, scalar_prefetch = 0 : i64, scratch_operands = 0 : i64, tpu.core_type = #tpu.core_type<tc>, window_params = [{transform_indices = @transform_0, window_bounds = array<i64: 128, 128>}, {pipeline_mode = #tpu.pipeline_mode<synchronous>, transform_indices = @transform_1, window_bounds = array<i64: 128, 128>}, {pipeline_mode = #tpu.pipeline_mode<synchronous>, transform_indices = @transform_2, window_bounds = array<i64: 1, 128>}, {pipeline_mode = #tpu.pipeline_mode<synchronous>, transform_indices = @transform_3, window_bounds = array<i64: 1, 128>}, {pipeline_mode = #tpu.pipeline_mode<synchronous>, transform_indices = @transform_4, window_bounds = array<i64: 1, 128>}, {pipeline_mode = #tpu.pipeline_mode<synchronous>, transform_indices = @transform_5, window_bounds = array<i64: 128, 128>}, {pipeline_mode = #tpu.pipeline_mode<synchronous>, transform_indices = @transform_6, window_bounds = array<i64: 1, 128>}, {pipeline_mode = #tpu.pipeline_mode<synchronous>, transform_indices = @transform_7, window_bounds = array<i64: 1, 128>}, {pipeline_mode = #tpu.pipeline_mode<synchronous>, transform_indices = @transform_8, window_bounds = array<i64: 1, 128>}, {pipeline_mode = #tpu.pipeline_mode<synchronous>, transform_indices = @transform_9, window_bounds = array<i64: 128, 128>}, {pipeline_mode = #tpu.pipeline_mode<synchronous>, transform_indices = @transform_10, window_bounds = array<i64: 1, 128>}, {transform_indices = @transform_11, window_bounds = array<i64: 128, 128>}]} {
    %c0 = arith.constant 0 : index
    %c0_0 = arith.constant 0 : index
    %0 = vector.load %arg1[%c0, %c0_0] : memref<128x128xbf16, #tpu.memory_space<vmem>>, vector<128x128xbf16>
    %c0_1 = arith.constant 0 : index
    %c0_2 = arith.constant 0 : index
    %1 = vector.load %arg2[%c0_1, %c0_2] : memref<128x128xbf16, #tpu.memory_space<vmem>>, vector<128x128xbf16>
    %cst = arith.constant dense<0.000000e+00> : vector<128x128xf32>
    %2 = tpu.matmul %0, %1, %cst {dimension_numbers = #tpu.dot_dimension_numbers<[1], [0], [0], [1], [0, 0, 1, 1], [], []>} : vector<128x128xbf16>, vector<128x128xbf16>, vector<128x128xf32> -> vector<128x128xf32>
    %c0_3 = arith.constant 0 : index
    %c0_4 = arith.constant 0 : index
    %3 = vector.load %arg3[%c0_3, %c0_4] : memref<1x128xf32, #tpu.memory_space<vmem>>, vector<1x128xf32>
    %4 = vector.broadcast %3 : vector<1x128xf32> to vector<128x128xf32>
    %5 = arith.addf %2, %4 : vector<128x128xf32>
    %cst_5 = arith.constant dense<0.000000e+00> : vector<128xf32>
    %6 = vector.multi_reduction <add>, %5, %cst_5 [1] : vector<128x128xf32> to vector<128xf32>
    %7 = vector.shape_cast %6 : vector<128xf32> to vector<128x1xf32>
    %cst_6 = arith.constant 3.125000e-02 : f32
    %8 = vector.broadcast %cst_6 : f32 to vector<128x1xf32>
    %9 = arith.mulf %7, %8 : vector<128x1xf32>
    %10 = vector.broadcast %9 : vector<128x1xf32> to vector<128x128xf32>
    %11 = arith.subf %5, %10 : vector<128x128xf32>
    %12 = arith.mulf %11, %11 : vector<128x128xf32>
    %cst_7 = arith.constant dense<0.000000e+00> : vector<128xf32>
    %13 = vector.multi_reduction <add>, %12, %cst_7 [1] : vector<128x128xf32> to vector<128xf32>
    %14 = vector.shape_cast %13 : vector<128xf32> to vector<128x1xf32>
    %15 = arith.mulf %9, %9 : vector<128x1xf32>
    %cst_8 = arith.constant 9.600000e+01 : f32
    %16 = vector.broadcast %cst_8 : f32 to vector<128x1xf32>
    %17 = arith.mulf %16, %15 : vector<128x1xf32>
    %18 = arith.subf %14, %17 : vector<128x1xf32>
    %cst_9 = arith.constant 3.125000e-02 : f32
    %19 = vector.broadcast %cst_9 : f32 to vector<128x1xf32>
    %20 = arith.mulf %18, %19 : vector<128x1xf32>
    %cst_10 = arith.constant 0.000000e+00 : f32
    %21 = vector.broadcast %cst_10 : f32 to vector<128x1xf32>
    %22 = arith.maximumf %20, %21 : vector<128x1xf32>
    %cst_11 = arith.constant 9.99999974E-6 : f32
    %23 = vector.broadcast %cst_11 : f32 to vector<128x1xf32>
    %24 = arith.addf %22, %23 : vector<128x1xf32>
    %25 = math.rsqrt %24 : vector<128x1xf32>
    %26 = vector.broadcast %25 : vector<128x1xf32> to vector<128x128xf32>
    %27 = arith.mulf %11, %26 : vector<128x128xf32>
    %c0_12 = arith.constant 0 : index
    %c0_13 = arith.constant 0 : index
    %28 = vector.load %arg4[%c0_12, %c0_13] : memref<1x128xf32, #tpu.memory_space<vmem>>, vector<1x128xf32>
    %c0_14 = arith.constant 0 : index
    %c0_15 = arith.constant 0 : index
    %29 = vector.load %arg5[%c0_14, %c0_15] : memref<1x128xf32, #tpu.memory_space<vmem>>, vector<1x128xf32>
    %30 = arith.truncf %27 : vector<128x128xf32> to vector<128x128xbf16>
    %31 = arith.truncf %28 : vector<1x128xf32> to vector<1x128xbf16>
    %32 = arith.truncf %29 : vector<1x128xf32> to vector<1x128xbf16>
    %33 = vector.broadcast %31 : vector<1x128xbf16> to vector<128x128xbf16>
    %34 = arith.mulf %30, %33 : vector<128x128xbf16>
    %35 = vector.broadcast %32 : vector<1x128xbf16> to vector<128x128xbf16>
    %36 = arith.addf %34, %35 : vector<128x128xbf16>
    %cst_16 = arith.constant 0.000000e+00 : bf16
    %37 = vector.broadcast %cst_16 : bf16 to vector<128x128xbf16>
    %38 = arith.maximumf %36, %37 : vector<128x128xbf16>
    %c0_17 = arith.constant 0 : index
    %c0_18 = arith.constant 0 : index
    %39 = vector.load %arg6[%c0_17, %c0_18] : memref<128x128xbf16, #tpu.memory_space<vmem>>, vector<128x128xbf16>
    %cst_19 = arith.constant dense<0.000000e+00> : vector<128x128xf32>
    %40 = tpu.matmul %38, %39, %cst_19 {dimension_numbers = #tpu.dot_dimension_numbers<[1], [0], [0], [1], [0, 0, 1, 1], [], []>} : vector<128x128xbf16>, vector<128x128xbf16>, vector<128x128xf32> -> vector<128x128xf32>
    %c0_20 = arith.constant 0 : index
    %c0_21 = arith.constant 0 : index
    %41 = vector.load %arg7[%c0_20, %c0_21] : memref<1x128xf32, #tpu.memory_space<vmem>>, vector<1x128xf32>
    %42 = vector.broadcast %41 : vector<1x128xf32> to vector<128x128xf32>
    %43 = arith.addf %40, %42 : vector<128x128xf32>
    %cst_22 = arith.constant dense<0.000000e+00> : vector<128xf32>
    %44 = vector.multi_reduction <add>, %43, %cst_22 [1] : vector<128x128xf32> to vector<128xf32>
    %45 = vector.shape_cast %44 : vector<128xf32> to vector<128x1xf32>
    %cst_23 = arith.constant 3.125000e-02 : f32
    %46 = vector.broadcast %cst_23 : f32 to vector<128x1xf32>
    %47 = arith.mulf %45, %46 : vector<128x1xf32>
    %48 = vector.broadcast %47 : vector<128x1xf32> to vector<128x128xf32>
    %49 = arith.subf %43, %48 : vector<128x128xf32>
    %50 = arith.mulf %49, %49 : vector<128x128xf32>
    %cst_24 = arith.constant dense<0.000000e+00> : vector<128xf32>
    %51 = vector.multi_reduction <add>, %50, %cst_24 [1] : vector<128x128xf32> to vector<128xf32>
    %52 = vector.shape_cast %51 : vector<128xf32> to vector<128x1xf32>
    %53 = arith.mulf %47, %47 : vector<128x1xf32>
    %cst_25 = arith.constant 9.600000e+01 : f32
    %54 = vector.broadcast %cst_25 : f32 to vector<128x1xf32>
    %55 = arith.mulf %54, %53 : vector<128x1xf32>
    %56 = arith.subf %52, %55 : vector<128x1xf32>
    %cst_26 = arith.constant 3.125000e-02 : f32
    %57 = vector.broadcast %cst_26 : f32 to vector<128x1xf32>
    %58 = arith.mulf %56, %57 : vector<128x1xf32>
    %cst_27 = arith.constant 0.000000e+00 : f32
    %59 = vector.broadcast %cst_27 : f32 to vector<128x1xf32>
    %60 = arith.maximumf %58, %59 : vector<128x1xf32>
    %cst_28 = arith.constant 9.99999974E-6 : f32
    %61 = vector.broadcast %cst_28 : f32 to vector<128x1xf32>
    %62 = arith.addf %60, %61 : vector<128x1xf32>
    %63 = math.rsqrt %62 : vector<128x1xf32>
    %64 = vector.broadcast %63 : vector<128x1xf32> to vector<128x128xf32>
    %65 = arith.mulf %49, %64 : vector<128x128xf32>
    %c0_29 = arith.constant 0 : index
    %c0_30 = arith.constant 0 : index
    %66 = vector.load %arg8[%c0_29, %c0_30] : memref<1x128xf32, #tpu.memory_space<vmem>>, vector<1x128xf32>
    %c0_31 = arith.constant 0 : index
    %c0_32 = arith.constant 0 : index
    %67 = vector.load %arg9[%c0_31, %c0_32] : memref<1x128xf32, #tpu.memory_space<vmem>>, vector<1x128xf32>
    %68 = arith.truncf %65 : vector<128x128xf32> to vector<128x128xbf16>
    %69 = arith.truncf %66 : vector<1x128xf32> to vector<1x128xbf16>
    %70 = arith.truncf %67 : vector<1x128xf32> to vector<1x128xbf16>
    %71 = vector.broadcast %69 : vector<1x128xbf16> to vector<128x128xbf16>
    %72 = arith.mulf %68, %71 : vector<128x128xbf16>
    %73 = vector.broadcast %70 : vector<1x128xbf16> to vector<128x128xbf16>
    %74 = arith.addf %72, %73 : vector<128x128xbf16>
    %cst_33 = arith.constant 0.000000e+00 : bf16
    %75 = vector.broadcast %cst_33 : bf16 to vector<128x128xbf16>
    %76 = arith.maximumf %74, %75 : vector<128x128xbf16>
    %c0_34 = arith.constant 0 : index
    %c0_35 = arith.constant 0 : index
    %77 = vector.load %arg10[%c0_34, %c0_35] : memref<128x128xbf16, #tpu.memory_space<vmem>>, vector<128x128xbf16>
    %cst_36 = arith.constant dense<0.000000e+00> : vector<128x128xf32>
    %78 = tpu.matmul %76, %77, %cst_36 {dimension_numbers = #tpu.dot_dimension_numbers<[1], [0], [0], [1], [0, 0, 1, 1], [], []>} : vector<128x128xbf16>, vector<128x128xbf16>, vector<128x128xf32> -> vector<128x128xf32>
    %c0_37 = arith.constant 0 : index
    %c0_38 = arith.constant 0 : index
    %79 = vector.load %arg11[%c0_37, %c0_38] : memref<1x128xf32, #tpu.memory_space<vmem>>, vector<1x128xf32>
    %80 = vector.broadcast %79 : vector<1x128xf32> to vector<128x128xf32>
    %81 = arith.addf %78, %80 : vector<128x128xf32>
    %c0_39 = arith.constant 0 : index
    %c0_40 = arith.constant 0 : index
    %82 = vector.load %arg12[%c0_39, %c0_40] : memref<128x128xf32, #tpu.memory_space<vmem>>, vector<128x128xf32>
    tpu.vector_store %arg12[%c0_39, %c0_40], %81 {strides = array<i32>} : memref<128x128xf32, #tpu.memory_space<vmem>>, vector<128x128xf32>,
    return
  }
  func.func @transform_0(%arg0: i32) -> (i32, i32) {
    %c0_i32 = arith.constant 0 : i32
    %c0_i32_0 = arith.constant 0 : i32
    return %arg0, %c0_i32 : i32, i32
  }
  func.func @transform_1(%arg0: i32) -> (i32, i32) {
    %c0_i32 = arith.constant 0 : i32
    %c0_i32_0 = arith.constant 0 : i32
    %c0_i32_1 = arith.constant 0 : i32
    return %c0_i32, %c0_i32_0 : i32, i32
  }
  func.func @transform_2(%arg0: i32) -> (i32, i32) {
    %c0_i32 = arith.constant 0 : i32
    %c0_i32_0 = arith.constant 0 : i32
    %c0_i32_1 = arith.constant 0 : i32
    return %c0_i32, %c0_i32_0 : i32, i32
  }
  func.func @transform_3(%arg0: i32) -> (i32, i32) {
    %c0_i32 = arith.constant 0 : i32
    %c0_i32_0 = arith.constant 0 : i32
    %c0_i32_1 = arith.constant 0 : i32
    return %c0_i32, %c0_i32_0 : i32, i32
  }
  func.func @transform_4(%arg0: i32) -> (i32, i32) {
    %c0_i32 = arith.constant 0 : i32
    %c0_i32_0 = arith.constant 0 : i32
    %c0_i32_1 = arith.constant 0 : i32
    return %c0_i32, %c0_i32_0 : i32, i32
  }
  func.func @transform_5(%arg0: i32) -> (i32, i32) {
    %c0_i32 = arith.constant 0 : i32
    %c0_i32_0 = arith.constant 0 : i32
    %c0_i32_1 = arith.constant 0 : i32
    return %c0_i32, %c0_i32_0 : i32, i32
  }
  func.func @transform_6(%arg0: i32) -> (i32, i32) {
    %c0_i32 = arith.constant 0 : i32
    %c0_i32_0 = arith.constant 0 : i32
    %c0_i32_1 = arith.constant 0 : i32
    return %c0_i32, %c0_i32_0 : i32, i32
  }
  func.func @transform_7(%arg0: i32) -> (i32, i32) {
    %c0_i32 = arith.constant 0 : i32
    %c0_i32_0 = arith.constant 0 : i32
    %c0_i32_1 = arith.constant 0 : i32
    return %c0_i32, %c0_i32_0 : i32, i32
  }
  func.func @transform_8(%arg0: i32) -> (i32, i32) {
    %c0_i32 = arith.constant 0 : i32
    %c0_i32_0 = arith.constant 0 : i32
    %c0_i32_1 = arith.constant 0 : i32
    return %c0_i32, %c0_i32_0 : i32, i32
  }
  func.func @transform_9(%arg0: i32) -> (i32, i32) {
    %c0_i32 = arith.constant 0 : i32
    %c0_i32_0 = arith.constant 0 : i32
    %c0_i32_1 = arith.constant 0 : i32
    return %c0_i32, %c0_i32_0 : i32, i32
  }
  func.func @transform_10(%arg0: i32) -> (i32, i32) {
    %c0_i32 = arith.constant 0 : i32
    %c0_i32_0 = arith.constant 0 : i32
    %c0_i32_1 = arith.constant 0 : i32
    return %c0_i32, %c0_i32_0 : i32, i32
  }
  func.func @transform_11(%arg0: i32) -> (i32, i32) {
    %c0_i32 = arith.constant 0 : i32
    %c0_i32_0 = arith.constant 0 : i32
    return %arg0, %c0_i32 : i32, i32
  }
}

</mosaic_0001>

<llo_original>
// kernel: tpu_custom_call.1
$region0: #{tpu_custom_call.1}
  #allocation0 [shape = 'u32[]', space=smem, size = 0x4, offset = 0x4, fixed_abs, tag = 'smem constant byte address 0x4 - core index']
  #allocation1 [shape = 'u32[72,128]{1,0:T(1,128)}', space=vmem, size = 0x9000, scoped, tag = 'internal scratch']
  %s0 = inlined_call_operand.hbm [shape: bf16[128,128], index: 0, kind: input, shape index: {}]
  %s1 = inlined_call_operand.hbm [shape: bf16[128,128], index: 1, kind: input, shape index: {}]
  %s2 = inlined_call_operand.vmem [shape: f32[1,128], index: 2, kind: input, shape index: {}]
  %s3 = inlined_call_operand.vmem [shape: f32[1,128], index: 3, kind: input, shape index: {}]
  %s4 = inlined_call_operand.vmem [shape: f32[1,128], index: 4, kind: input, shape index: {}]
  %s5 = inlined_call_operand.hbm [shape: bf16[128,128], index: 5, kind: input, shape index: {}]
  %s6 = inlined_call_operand.vmem [shape: f32[1,128], index: 6, kind: input, shape index: {}]
  %s7 = inlined_call_operand.vmem [shape: f32[1,128], index: 7, kind: input, shape index: {}]
  %s8 = inlined_call_operand.vmem [shape: f32[1,128], index: 8, kind: input, shape index: {}]
  %s9 = inlined_call_operand.hbm [shape: bf16[128,128], index: 9, kind: input, shape index: {}]
  %s10 = inlined_call_operand.vmem [shape: f32[1,128], index: 10, kind: input, shape index: {}]
  %s11 = inlined_call_operand.hbm [shape: f32[128,128], index: 11, kind: output, shape index: {}]
  %s12 = sld [smem:[#allocation0]]
  $region70: #{tpu_custom_call.1} parent=0
    _
  %s14 = ssub.s32 1, %s12
  %s15 = scalar_select 0, %s14, %s12
  $region1: #{tpu_custom_call.1} parent=0
    #allocation2 [shape = 'u8[32768]{0}', space=vmem, size = 0x8000, scoped, tag = 'input window, operand 0, single buffered']
    #allocation3 [shape = 's32[1]{0}', space=sflag, size = 0x4, scoped, tag = 'scoped memory for tpu_custom_call.1']
    #allocation4 [shape = 's32[1]{0}', space=sflag, size = 0x4, scoped, tag = 'scoped memory for tpu_custom_call.1']
    #allocation5 [shape = 'u8[32768]{0}', space=vmem, size = 0x8000, scoped, tag = 'input window, operand 1, single buffered']
    #allocation6 [shape = 's32[1]{0}', space=sflag, size = 0x4, scoped, tag = 'scoped memory for tpu_custom_call.1']
    #allocation7 [shape = 'u8[32768]{0}', space=vmem, size = 0x8000, scoped, tag = 'input window, operand 5, single buffered']
    #allocation8 [shape = 'u8[32768]{0}', space=vmem, size = 0x8000, scoped, tag = 'input window, operand 9, single buffered']
    #allocation9 [shape = 's32[1]{0}', space=sflag, size = 0x4, scoped, tag = 'scoped memory for tpu_custom_call.1']
    #allocation10 [shape = 'u8[65536]{0}', space=vmem, size = 0x10000, scoped, tag = 'output window, operand 0, single buffered']
    %16 = vsyncpa [#allocation3], 0
    %17 = vsyncpa [#allocation6], 0
    %18 = vsyncpa [#allocation9], 0
    %19 = vsyncpa [#allocation4], 0
    // Predicated region
    $region2: #{tpu_custom_call.1} parent=1 // pred_check
      _
    $region3: #{tpu_custom_call.1} parent=1 // pred_check_branch
      %21 = sbr.rel (0) target = $region5
    $region4: #{tpu_custom_call.1} parent=1 // pred_region
      %23 = vsyncadd [#allocation3], 0
      %s24 = sshll.u32 %s0, 4
      %s25 = int_to_ptr.hbm [resolvable:$true] %s24
      %s26 = sshll.u32 [#allocation2], 4
      %s27 = int_to_ptr.vmem [resolvable:$true] %s26
      %32 = dma.hbm_to_vmem [thread:$0]  %s25, 1024, %s27, [#allocation3], 64, 64, 4
    $region5: #{tpu_custom_call.1} parent=1 // pred_fallthru
      _
    // Predicated region
    $region6: #{tpu_custom_call.1} parent=1 // pred_check
      _
    $region7: #{tpu_custom_call.1} parent=1 // pred_check_branch
      %34 = sbr.rel (0) target = $region9
    $region8: #{tpu_custom_call.1} parent=1 // pred_region
      %36 = vsyncadd [#allocation6], 0
      %s37 = sshll.u32 %s1, 4
      %s38 = int_to_ptr.hbm [resolvable:$true] %s37
      %s39 = sshll.u32 [#allocation5], 4
      %s40 = int_to_ptr.vmem [resolvable:$true] %s39
      %45 = dma.hbm_to_vmem [thread:$0]  %s38, 1024, %s40, [#allocation6], 64, 64, 4
    $region9: #{tpu_custom_call.1} parent=1 // pred_fallthru
      _
    // Predicated region
    $region10: #{tpu_custom_call.1} parent=1 // pred_check
      _
    $region11: #{tpu_custom_call.1} parent=1 // pred_check_branch
      %47 = sbr.rel (0) target = $region13
    $region12: #{tpu_custom_call.1} parent=1 // pred_region
      _
    $region13: #{tpu_custom_call.1} parent=1 // pred_fallthru
      _
    // Predicated region
    $region14: #{tpu_custom_call.1} parent=1 // pred_check
      _
    $region15: #{tpu_custom_call.1} parent=1 // pred_check_branch
      %49 = sbr.rel (0) target = $region17
    $region16: #{tpu_custom_call.1} parent=1 // pred_region
      _
    $region17: #{tpu_custom_call.1} parent=1 // pred_fallthru
      _
    // Predicated region
    $region18: #{tpu_custom_call.1} parent=1 // pred_check
      _
    $region19: #{tpu_custom_call.1} parent=1 // pred_check_branch
      %51 = sbr.rel (0) target = $region21
    $region20: #{tpu_custom_call.1} parent=1 // pred_region
      _
    $region21: #{tpu_custom_call.1} parent=1 // pred_fallthru
      _
    // Predicated region
    $region22: #{tpu_custom_call.1} parent=1 // pred_check
      _
    $region23: #{tpu_custom_call.1} parent=1 // pred_check_branch
      %53 = sbr.rel (0) target = $region25
    $region24: #{tpu_custom_call.1} parent=1 // pred_region
      %55 = vsyncadd [#allocation6], 0
      %s56 = sshll.u32 %s5, 4
      %s57 = int_to_ptr.hbm [resolvable:$true] %s56
      %s58 = sshll.u32 [#allocation7], 4
      %s59 = int_to_ptr.vmem [resolvable:$true] %s58
      %64 = dma.hbm_to_vmem [thread:$0]  %s57, 1024, %s59, [#allocation6], 64, 64, 4
    $region25: #{tpu_custom_call.1} parent=1 // pred_fallthru
      _
    // Predicated region
    $region26: #{tpu_custom_call.1} parent=1 // pred_check
      _
    $region27: #{tpu_custom_call.1} parent=1 // pred_check_branch
      %66 = sbr.rel (0) target = $region29
    $region28: #{tpu_custom_call.1} parent=1 // pred_region
      _
    $region29: #{tpu_custom_call.1} parent=1 // pred_fallthru
      _
    // Predicated region
    $region30: #{tpu_custom_call.1} parent=1 // pred_check
      _
    $region31: #{tpu_custom_call.1} parent=1 // pred_check_branch
      %68 = sbr.rel (0) target = $region33
    $region32: #{tpu_custom_call.1} parent=1 // pred_region
      _
    $region33: #{tpu_custom_call.1} parent=1 // pred_fallthru
      _
    // Predicated region
    $region34: #{tpu_custom_call.1} parent=1 // pred_check
      _
    $region35: #{tpu_custom_call.1} parent=1 // pred_check_branch
      %70 = sbr.rel (0) target = $region37
    $region36: #{tpu_custom_call.1} parent=1 // pred_region
      _
    $region37: #{tpu_custom_call.1} parent=1 // pred_fallthru
      _
    // Predicated region
    $region38: #{tpu_custom_call.1} parent=1 // pred_check
      _
    $region39: #{tpu_custom_call.1} parent=1 // pred_check_branch
      %72 = sbr.rel (0) target = $region41
    $region40: #{tpu_custom_call.1} parent=1 // pred_region
      %74 = vsyncadd [#allocation9], 0
      %s75 = sshll.u32 %s9, 4
      %s76 = int_to_ptr.hbm [resolvable:$true] %s75
      %s77 = sshll.u32 [#allocation8], 4
      %s78 = int_to_ptr.vmem [resolvable:$true] %s77
      %83 = dma.hbm_to_vmem [thread:$0]  %s76, 1024, %s78, [#allocation9], 64, 64, 4
    $region41: #{tpu_custom_call.1} parent=1 // pred_fallthru
      _
    // Predicated region
    $region42: #{tpu_custom_call.1} parent=1 // pred_check
      _
    $region43: #{tpu_custom_call.1} parent=1 // pred_check_branch
      %85 = sbr.rel (0) target = $region45
    $region44: #{tpu_custom_call.1} parent=1 // pred_region
      _
    $region45: #{tpu_custom_call.1} parent=1 // pred_fallthru
      _
    // Predicated region
    $region46: #{tpu_custom_call.1} parent=1 // pred_check
      _
    $region47: #{tpu_custom_call.1} parent=1 // pred_check_branch
      %87 = sbr.rel (0) target = $region49
    $region48: #{tpu_custom_call.1} parent=1 // pred_region
      %89 = dma.done [#allocation3], 1024
    $region49: #{tpu_custom_call.1} parent=1 // pred_fallthru
      _
    // Predicated region
    $region50: #{tpu_custom_call.1} parent=1 // pred_check
      _
    $region51: #{tpu_custom_call.1} parent=1 // pred_check_branch
      %91 = sbr.rel (0) target = $region53
    $region52: #{tpu_custom_call.1} parent=1 // pred_region
      %93 = dma.done [#allocation6], 1024
    $region53: #{tpu_custom_call.1} parent=1 // pred_fallthru
      _
    // Predicated region
    $region54: #{tpu_custom_call.1} parent=1 // pred_check
      _
    $region55: #{tpu_custom_call.1} parent=1 // pred_check_branch
      %95 = sbr.rel (0) target = $region57
    $region56: #{tpu_custom_call.1} parent=1 // pred_region
      %97 = dma.done [#allocation6], 1024
    $region57: #{tpu_custom_call.1} parent=1 // pred_fallthru
      _
    // Predicated region
    $region58: #{tpu_custom_call.1} parent=1 // pred_check
      _
    $region59: #{tpu_custom_call.1} parent=1 // pred_check_branch
      %99 = sbr.rel (0) target = $region61
    $region60: #{tpu_custom_call.1} parent=1 // pred_region
      %101 = dma.done [#allocation9], 1024
    $region61: #{tpu_custom_call.1} parent=1 // pred_fallthru
      _
    %v102 = vld [vmem:[#allocation2] sm:$0xf]
    %v103 = vld [vmem:[#allocation2 + $0x4] sm:$0xf]
    %v104 = vld [vmem:[#allocation2 + $0x8] sm:$0xf]
    %v105 = vld [vmem:[#allocation2 + $0xc] sm:$0xf]
    %v106 = vld [vmem:[#allocation2 + $0x10] sm:$0xf]
    %v107 = vld [vmem:[#allocation2 + $0x14] sm:$0xf]
    %v108 = vld [vmem:[#allocation2 + $0x18] sm:$0xf]
    %v109 = vld [vmem:[#allocation2 + $0x1c] sm:$0xf]
    %v110 = vld [vmem:[#allocation2 + $0x20] sm:$0xf]
    %v111 = vld [vmem:[#allocation2 + $0x24] sm:$0xf]
    %v112 = vld [vmem:[#allocation2 + $0x28] sm:$0xf]
    %v113 = vld [vmem:[#allocation2 + $0x2c] sm:$0xf]
    %v114 = vld [vmem:[#allocation2 + $0x30] sm:$0xf]
    %v115 = vld [vmem:[#allocation2 + $0x34] sm:$0xf]
    %v116 = vld [vmem:[#allocation2 + $0x38] sm:$0xf]
    %v117 = vld [vmem:[#allocation2 + $0x3c] sm:$0xf]
    %v118 = vld [vmem:[#allocation5] sm:$0xf]
    %v119 = vld [vmem:[#allocation5 + $0x4] sm:$0xf]
    %v120 = vld [vmem:[#allocation5 + $0x8] sm:$0xf]
    %v121 = vld [vmem:[#allocation5 + $0xc] sm:$0xf]
    %v122 = vld [vmem:[#allocation5 + $0x10] sm:$0xf]
    %v123 = vld [vmem:[#allocation5 + $0x14] sm:$0xf]
    %v124 = vld [vmem:[#allocation5 + $0x18] sm:$0xf]
    %v125 = vld [vmem:[#allocation5 + $0x1c] sm:$0xf]
    %v126 = vld [vmem:[#allocation5 + $0x20] sm:$0xf]
    %v127 = vld [vmem:[#allocation5 + $0x24] sm:$0xf]
    %v128 = vld [vmem:[#allocation5 + $0x28] sm:$0xf]
    %v129 = vld [vmem:[#allocation5 + $0x2c] sm:$0xf]
    %v130 = vld [vmem:[#allocation5 + $0x30] sm:$0xf]
    %v131 = vld [vmem:[#allocation5 + $0x34] sm:$0xf]
    %v132 = vld [vmem:[#allocation5 + $0x38] sm:$0xf]
    %v133 = vld [vmem:[#allocation5 + $0x3c] sm:$0xf]
    %v134 = vld [vmem:[%s2] sm:$0x1]
    %v136 = vperm.slane %v134, 0
    %v154 = vunpack.c.l.b16 %v102
    %v155 = vunpack.c.l.b16 %v103
    %v156 = vunpack.c.l.b16 %v104
    %v157 = vunpack.c.l.b16 %v105
    %v158 = vunpack.c.l.b16 %v106
    %v159 = vunpack.c.l.b16 %v107
    %v160 = vunpack.c.l.b16 %v108
    %v161 = vunpack.c.l.b16 %v109
    %v162 = vunpack.c.l.b16 %v110
    %v163 = vunpack.c.l.b16 %v111
    %v164 = vunpack.c.l.b16 %v112
    %v165 = vunpack.c.l.b16 %v113
    %v166 = vunpack.c.l.b16 %v114
    %v167 = vunpack.c.l.b16 %v115
    %v168 = vunpack.c.l.b16 %v116
    %v169 = vunpack.c.l.b16 %v117
    %v170 = vpack.c.b16 %v155, %v154
    %v171 = vpack.c.b16 %v157, %v156
    %v172 = vpack.c.b16 %v159, %v158
    %v173 = vpack.c.b16 %v161, %v160
    %v174 = vpack.c.b16 %v163, %v162
    %v175 = vpack.c.b16 %v165, %v164
    %v176 = vpack.c.b16 %v167, %v166
    %v177 = vpack.c.b16 %v169, %v168
    %v202 = vunpack.c.l.b16 %v118
    %v203 = vunpack.c.l.b16 %v119
    %v204 = vunpack.c.l.b16 %v120
    %v205 = vunpack.c.l.b16 %v121
    %v206 = vunpack.c.l.b16 %v122
    %v207 = vunpack.c.l.b16 %v123
    %v208 = vunpack.c.l.b16 %v124
    %v209 = vunpack.c.l.b16 %v125
    %v210 = vunpack.c.l.b16 %v126
    %v211 = vunpack.c.l.b16 %v127
    %v212 = vunpack.c.l.b16 %v128
    %v213 = vunpack.c.l.b16 %v129
    %v214 = vunpack.c.l.b16 %v130
    %v215 = vunpack.c.l.b16 %v131
    %v216 = vunpack.c.l.b16 %v132
    %v217 = vunpack.c.l.b16 %v133
    %v218 = vpack.c.b16 %v203, %v202
    %v219 = vpack.c.b16 %v205, %v204
    %v220 = vpack.c.b16 %v207, %v206
    %v221 = vpack.c.b16 %v209, %v208
    %v222 = vpack.c.b16 %v211, %v210
    %v223 = vpack.c.b16 %v213, %v212
    %v224 = vpack.c.b16 %v215, %v214
    %v225 = vpack.c.b16 %v217, %v216
    %234 = vmatpush.bf16.msra.mxu0 %v225
    %235 = vmatpush.bf16.msra.mxu0 %v224
    %236 = vmatpush.bf16.msra.mxu0 %v223
    %237 = vmatpush.bf16.msra.mxu0 %v222
    %238 = vmatpush.bf16.msra.mxu0 %v221
    %239 = vmatpush.bf16.msra.mxu0 %v220
    %240 = vmatpush.bf16.msra.mxu0 %v219
    %241 = vmatpush.bf16.msra.mxu0 %v218
    %242 = vmatmul.bf16.gmra.mxu0 %v170
    %v243 = vpop.f32.mrf.mxu0
    %v244 = vadd.f32 %v136, %v243
    %v245 = vpop.f32.mrf.mxu0
    %v246 = vadd.f32 %v136, %v245
    %247 = vmatmul.bf16.gmra.mxu0 %v171
    %v248 = vpop.f32.mrf.mxu0
    %v249 = vadd.f32 %v136, %v248
    %v250 = vpop.f32.mrf.mxu0
    %v251 = vadd.f32 %v136, %v250
    %252 = vmatmul.bf16.gmra.mxu0 %v172
    %v253 = vpop.f32.mrf.mxu0
    %v254 = vadd.f32 %v136, %v253
    %v255 = vpop.f32.mrf.mxu0
    %v256 = vadd.f32 %v136, %v255
    %257 = vmatmul.bf16.gmra.mxu0 %v173
    %v258 = vpop.f32.mrf.mxu0
    %v259 = vadd.f32 %v136, %v258
    %v260 = vpop.f32.mrf.mxu0
    %v261 = vadd.f32 %v136, %v260
    %262 = vmatmul.bf16.gmra.mxu0 %v174
    %v263 = vpop.f32.mrf.mxu0
    %v264 = vadd.f32 %v136, %v263
    %v265 = vpop.f32.mrf.mxu0
    %v266 = vadd.f32 %v136, %v265
    %267 = vmatmul.bf16.gmra.mxu0 %v175
    %v268 = vpop.f32.mrf.mxu0
    %v269 = vadd.f32 %v136, %v268
    %v270 = vpop.f32.mrf.mxu0
    %v271 = vadd.f32 %v136, %v270
    %272 = vmatmul.bf16.gmra.mxu0 %v176
    %v273 = vpop.f32.mrf.mxu0
    %v274 = vadd.f32 %v136, %v273
    %v275 = vpop.f32.mrf.mxu0
    %v276 = vadd.f32 %v136, %v275
    %277 = vmatmul.bf16.gmra.mxu0 %v177
    %v278 = vpop.f32.mrf.mxu0
    %v279 = vadd.f32 %v136, %v278
    %v280 = vpop.f32.mrf.mxu0
    %v281 = vadd.f32 %v136, %v280
    %282 = vdwg.mxu0
    %283 = vadd.xlane.f32.xlu0 %v244
    %v284 = vpop.xlane.xlu0 %283
    %285 = vadd.xlane.f32.xlu0 %v246
    %v286 = vpop.xlane.xlu0 %285
    %287 = vadd.xlane.f32.xlu0 %v249
    %v288 = vpop.xlane.xlu0 %287
    %289 = vadd.xlane.f32.xlu0 %v251
    %v290 = vpop.xlane.xlu0 %289
    %291 = vadd.xlane.f32.xlu0 %v254
    %v292 = vpop.xlane.xlu0 %291
    %293 = vadd.xlane.f32.xlu0 %v256
    %v294 = vpop.xlane.xlu0 %293
    %295 = vadd.xlane.f32.xlu0 %v259
    %v296 = vpop.xlane.xlu0 %295
    %297 = vadd.xlane.f32.xlu0 %v261
    %v298 = vpop.xlane.xlu0 %297
    %299 = vadd.xlane.f32.xlu0 %v264
    %v300 = vpop.xlane.xlu0 %299
    %301 = vadd.xlane.f32.xlu0 %v266
    %v302 = vpop.xlane.xlu0 %301
    %303 = vadd.xlane.f32.xlu0 %v269
    %v304 = vpop.xlane.xlu0 %303
    %305 = vadd.xlane.f32.xlu0 %v271
    %v306 = vpop.xlane.xlu0 %305
    %307 = vadd.xlane.f32.xlu0 %v274
    %v308 = vpop.xlane.xlu0 %307
    %309 = vadd.xlane.f32.xlu0 %v276
    %v310 = vpop.xlane.xlu0 %309
    %311 = vadd.xlane.f32.xlu0 %v279
    %v312 = vpop.xlane.xlu0 %311
    %313 = vadd.xlane.f32.xlu0 %v281
    %v314 = vpop.xlane.xlu0 %313
    %v315 = vmul.f32 %v284, 0.03125
    %v316 = vmul.f32 %v286, 0.03125
    %v317 = vmul.f32 %v288, 0.03125
    %v318 = vmul.f32 %v290, 0.03125
    %v319 = vmul.f32 %v292, 0.03125
    %v320 = vmul.f32 %v294, 0.03125
    %v321 = vmul.f32 %v296, 0.03125
    %v322 = vmul.f32 %v298, 0.03125
    %v323 = vmul.f32 %v300, 0.03125
    %v324 = vmul.f32 %v302, 0.03125
    %v325 = vmul.f32 %v304, 0.03125
    %v326 = vmul.f32 %v306, 0.03125
    %v327 = vmul.f32 %v308, 0.03125
    %v328 = vmul.f32 %v310, 0.03125
    %v329 = vmul.f32 %v312, 0.03125
    %v330 = vmul.f32 %v314, 0.03125
    %v331 = vsub.f32 %v244, %v315
    %v332 = vsub.f32 %v246, %v316
    %v333 = vsub.f32 %v249, %v317
    %v334 = vsub.f32 %v251, %v318
    %v335 = vsub.f32 %v254, %v319
    %v336 = vsub.f32 %v256, %v320
    %v337 = vsub.f32 %v259, %v321
    %v338 = vsub.f32 %v261, %v322
    %v339 = vsub.f32 %v264, %v323
    %v340 = vsub.f32 %v266, %v324
    %v341 = vsub.f32 %v269, %v325
    %v342 = vsub.f32 %v271, %v326
    %v343 = vsub.f32 %v274, %v327
    %v344 = vsub.f32 %v276, %v328
    %v345 = vsub.f32 %v279, %v329
    %v346 = vsub.f32 %v281, %v330
    %v347 = vmul.f32 %v331, %v331
    %v348 = vmul.f32 %v332, %v332
    %v349 = vmul.f32 %v333, %v333
    %v350 = vmul.f32 %v334, %v334
    %v351 = vmul.f32 %v335, %v335
    %v352 = vmul.f32 %v336, %v336
    %v353 = vmul.f32 %v337, %v337
    %v354 = vmul.f32 %v338, %v338
    %v355 = vmul.f32 %v339, %v339
    %v356 = vmul.f32 %v340, %v340
    %v357 = vmul.f32 %v341, %v341
    %v358 = vmul.f32 %v342, %v342
    %v359 = vmul.f32 %v343, %v343
    %v360 = vmul.f32 %v344, %v344
    %v361 = vmul.f32 %v345, %v345
    %v362 = vmul.f32 %v346, %v346
    %363 = vadd.xlane.f32.xlu0 %v347
    %v364 = vpop.xlane.xlu0 %363
    %365 = vadd.xlane.f32.xlu0 %v348
    %v366 = vpop.xlane.xlu0 %365
    %367 = vadd.xlane.f32.xlu0 %v349
    %v368 = vpop.xlane.xlu0 %367
    %369 = vadd.xlane.f32.xlu0 %v350
    %v370 = vpop.xlane.xlu0 %369
    %371 = vadd.xlane.f32.xlu0 %v351
    %v372 = vpop.xlane.xlu0 %371
    %373 = vadd.xlane.f32.xlu0 %v352
    %v374 = vpop.xlane.xlu0 %373
    %375 = vadd.xlane.f32.xlu0 %v353
    %v376 = vpop.xlane.xlu0 %375
    %377 = vadd.xlane.f32.xlu0 %v354
    %v378 = vpop.xlane.xlu0 %377
    %379 = vadd.xlane.f32.xlu0 %v355
    %v380 = vpop.xlane.xlu0 %379
    %381 = vadd.xlane.f32.xlu0 %v356
    %v382 = vpop.xlane.xlu0 %381
    %383 = vadd.xlane.f32.xlu0 %v357
    %v384 = vpop.xlane.xlu0 %383
    %385 = vadd.xlane.f32.xlu0 %v358
    %v386 = vpop.xlane.xlu0 %385
    %387 = vadd.xlane.f32.xlu0 %v359
    %v388 = vpop.xlane.xlu0 %387
    %389 = vadd.xlane.f32.xlu0 %v360
    %v390 = vpop.xlane.xlu0 %389
    %391 = vadd.xlane.f32.xlu0 %v361
    %v392 = vpop.xlane.xlu0 %391
    %393 = vadd.xlane.f32.xlu0 %v362
    %v394 = vpop.xlane.xlu0 %393
    %v395 = vmul.f32 %v315, %v315
    %v396 = vmul.f32 %v316, %v316
    %v397 = vmul.f32 %v317, %v317
    %v398 = vmul.f32 %v318, %v318
    %v399 = vmul.f32 %v319, %v319
    %v400 = vmul.f32 %v320, %v320
    %v401 = vmul.f32 %v321, %v321
    %v402 = vmul.f32 %v322, %v322
    %v403 = vmul.f32 %v323, %v323
    %v404 = vmul.f32 %v324, %v324
    %v405 = vmul.f32 %v325, %v325
    %v406 = vmul.f32 %v326, %v326
    %v407 = vmul.f32 %v327, %v327
    %v408 = vmul.f32 %v328, %v328
    %v409 = vmul.f32 %v329, %v329
    %v410 = vmul.f32 %v330, %v330
    %v411 = vmul.f32 %v395, 96.0
    %v412 = vmul.f32 %v396, 96.0
    %v413 = vmul.f32 %v397, 96.0
    %v414 = vmul.f32 %v398, 96.0
    %v415 = vmul.f32 %v399, 96.0
    %v416 = vmul.f32 %v400, 96.0
    %v417 = vmul.f32 %v401, 96.0
    %v418 = vmul.f32 %v402, 96.0
    %v419 = vmul.f32 %v403, 96.0
    %v420 = vmul.f32 %v404, 96.0
    %v421 = vmul.f32 %v405, 96.0
    %v422 = vmul.f32 %v406, 96.0
    %v423 = vmul.f32 %v407, 96.0
    %v424 = vmul.f32 %v408, 96.0
    %v425 = vmul.f32 %v409, 96.0
    %v426 = vmul.f32 %v410, 96.0
    %v427 = vsub.f32 %v364, %v411
    %v428 = vsub.f32 %v366, %v412
    %v429 = vsub.f32 %v368, %v413
    %v430 = vsub.f32 %v370, %v414
    %v431 = vsub.f32 %v372, %v415
    %v432 = vsub.f32 %v374, %v416
    %v433 = vsub.f32 %v376, %v417
    %v434 = vsub.f32 %v378, %v418
    %v435 = vsub.f32 %v380, %v419
    %v436 = vsub.f32 %v382, %v420
    %v437 = vsub.f32 %v384, %v421
    %v438 = vsub.f32 %v386, %v422
    %v439 = vsub.f32 %v388, %v423
    %v440 = vsub.f32 %v390, %v424
    %v441 = vsub.f32 %v392, %v425
    %v442 = vsub.f32 %v394, %v426
    %v443 = vmul.f32 %v427, 0.03125
    %v444 = vmul.f32 %v428, 0.03125
    %v445 = vmul.f32 %v429, 0.03125
    %v446 = vmul.f32 %v430, 0.03125
    %v447 = vmul.f32 %v431, 0.03125
    %v448 = vmul.f32 %v432, 0.03125
    %v449 = vmul.f32 %v433, 0.03125
    %v450 = vmul.f32 %v434, 0.03125
    %v451 = vmul.f32 %v435, 0.03125
    %v452 = vmul.f32 %v436, 0.03125
    %v453 = vmul.f32 %v437, 0.03125
    %v454 = vmul.f32 %v438, 0.03125
    %v455 = vmul.f32 %v439, 0.03125
    %v456 = vmul.f32 %v440, 0.03125
    %v457 = vmul.f32 %v441, 0.03125
    %v458 = vmul.f32 %v442, 0.03125
    %v459 = vmax.f32 %v443, 0.0
    %v460 = vmax.f32 %v444, 0.0
    %v461 = vmax.f32 %v445, 0.0
    %v462 = vmax.f32 %v446, 0.0
    %v463 = vmax.f32 %v447, 0.0
    %v464 = vmax.f32 %v448, 0.0
    %v465 = vmax.f32 %v449, 0.0
    %v466 = vmax.f32 %v450, 0.0
    %v467 = vmax.f32 %v451, 0.0
    %v468 = vmax.f32 %v452, 0.0
    %v469 = vmax.f32 %v453, 0.0
    %v470 = vmax.f32 %v454, 0.0
    %v471 = vmax.f32 %v455, 0.0
    %v472 = vmax.f32 %v456, 0.0
    %v473 = vmax.f32 %v457, 0.0
    %v474 = vmax.f32 %v458, 0.0
    %v475 = vadd.f32 %v459, 1e-05
    %v476 = vadd.f32 %v460, 1e-05
    %v477 = vadd.f32 %v461, 1e-05
    %v478 = vadd.f32 %v462, 1e-05
    %v479 = vadd.f32 %v463, 1e-05
    %v480 = vadd.f32 %v464, 1e-05
    %v481 = vadd.f32 %v465, 1e-05
    %v482 = vadd.f32 %v466, 1e-05
    %v483 = vadd.f32 %v467, 1e-05
    %v484 = vadd.f32 %v468, 1e-05
    %v485 = vadd.f32 %v469, 1e-05
    %v486 = vadd.f32 %v470, 1e-05
    %v487 = vadd.f32 %v471, 1e-05
    %v488 = vadd.f32 %v472, 1e-05
    %v489 = vadd.f32 %v473, 1e-05
    %v490 = vadd.f32 %v474, 1e-05
    %v491 = vrsqrt.pop %v475
    %v492 = vmul.f32 %v491, %v475
    %v493 = vmul.f32 %v492, %v491
    %v494 = vmul.f32 0.5, %v493
    %v495 = vsub.f32 1.5, %v494
    %v496 = vmul.f32 %v491, %v495
    %vm497 = vweird.f32 %v475
    %vm498 = vweird.f32 %v491
    %vm499 = vmor %vm497, %vm498
    %v500 = vsel %vm499, %v491, %v496
    %v501 = vrsqrt.pop %v476
    %v502 = vmul.f32 %v501, %v476
    %v503 = vmul.f32 %v502, %v501
    %v504 = vmul.f32 0.5, %v503
    %v505 = vsub.f32 1.5, %v504
    %v506 = vmul.f32 %v501, %v505
    %vm507 = vweird.f32 %v476
    %vm508 = vweird.f32 %v501
    %vm509 = vmor %vm507, %vm508
    %v510 = vsel %vm509, %v501, %v506
    %v511 = vrsqrt.pop %v477
    %v512 = vmul.f32 %v511, %v477
    %v513 = vmul.f32 %v512, %v511
    %v514 = vmul.f32 0.5, %v513
    %v515 = vsub.f32 1.5, %v514
    %v516 = vmul.f32 %v511, %v515
    %vm517 = vweird.f32 %v477
    %vm518 = vweird.f32 %v511
    %vm519 = vmor %vm517, %vm518
    %v520 = vsel %vm519, %v511, %v516
    %v521 = vrsqrt.pop %v478
    %v522 = vmul.f32 %v521, %v478
    %v523 = vmul.f32 %v522, %v521
    %v524 = vmul.f32 0.5, %v523
    %v525 = vsub.f32 1.5, %v524
    %v526 = vmul.f32 %v521, %v525
    %vm527 = vweird.f32 %v478
    %vm528 = vweird.f32 %v521
    %vm529 = vmor %vm527, %vm528
    %v530 = vsel %vm529, %v521, %v526
    %v531 = vrsqrt.pop %v479
    %v532 = vmul.f32 %v531, %v479
    %v533 = vmul.f32 %v532, %v531
    %v534 = vmul.f32 0.5, %v533
    %v535 = vsub.f32 1.5, %v534
    %v536 = vmul.f32 %v531, %v535
    %vm537 = vweird.f32 %v479
    %vm538 = vweird.f32 %v531
    %vm539 = vmor %vm537, %vm538
    %v540 = vsel %vm539, %v531, %v536
    %v541 = vrsqrt.pop %v480
    %v542 = vmul.f32 %v541, %v480
    %v543 = vmul.f32 %v542, %v541
    %v544 = vmul.f32 0.5, %v543
    %v545 = vsub.f32 1.5, %v544
    %v546 = vmul.f32 %v541, %v545
    %vm547 = vweird.f32 %v480
    %vm548 = vweird.f32 %v541
    %vm549 = vmor %vm547, %vm548
    %v550 = vsel %vm549, %v541, %v546
    %v551 = vrsqrt.pop %v481
    %v552 = vmul.f32 %v551, %v481
    %v553 = vmul.f32 %v552, %v551
    %v554 = vmul.f32 0.5, %v553
    %v555 = vsub.f32 1.5, %v554
    %v556 = vmul.f32 %v551, %v555
    %vm557 = vweird.f32 %v481
    %vm558 = vweird.f32 %v551
    %vm559 = vmor %vm557, %vm558
    %v560 = vsel %vm559, %v551, %v556
    %v561 = vrsqrt.pop %v482
    %v562 = vmul.f32 %v561, %v482
    %v563 = vmul.f32 %v562, %v561
    %v564 = vmul.f32 0.5, %v563
    %v565 = vsub.f32 1.5, %v564
    %v566 = vmul.f32 %v561, %v565
    %vm567 = vweird.f32 %v482
    %vm568 = vweird.f32 %v561
    %vm569 = vmor %vm567, %vm568
    %v570 = vsel %vm569, %v561, %v566
    %v571 = vrsqrt.pop %v483
    %v572 = vmul.f32 %v571, %v483
    %v573 = vmul.f32 %v572, %v571
    %v574 = vmul.f32 0.5, %v573
    %v575 = vsub.f32 1.5, %v574
    %v576 = vmul.f32 %v571, %v575
    %vm577 = vweird.f32 %v483
    %vm578 = vweird.f32 %v571
    %vm579 = vmor %vm577, %vm578
    %v580 = vsel %vm579, %v571, %v576
    %v581 = vrsqrt.pop %v484
    %v582 = vmul.f32 %v581, %v484
    %v583 = vmul.f32 %v582, %v581
    %v584 = vmul.f32 0.5, %v583
    %v585 = vsub.f32 1.5, %v584
    %v586 = vmul.f32 %v581, %v585
    %vm587 = vweird.f32 %v484
    %vm588 = vweird.f32 %v581
    %vm589 = vmor %vm587, %vm588
    %v590 = vsel %vm589, %v581, %v586
    %v591 = vrsqrt.pop %v485
    %v592 = vmul.f32 %v591, %v485
    %v593 = vmul.f32 %v592, %v591
    %v594 = vmul.f32 0.5, %v593
    %v595 = vsub.f32 1.5, %v594
    %v596 = vmul.f32 %v591, %v595
    %vm597 = vweird.f32 %v485
    %vm598 = vweird.f32 %v591
    %vm599 = vmor %vm597, %vm598
    %v600 = vsel %vm599, %v591, %v596
    %v601 = vrsqrt.pop %v486
    %v602 = vmul.f32 %v601, %v486
    %v603 = vmul.f32 %v602, %v601
    %v604 = vmul.f32 0.5, %v603
    %v605 = vsub.f32 1.5, %v604
    %v606 = vmul.f32 %v601, %v605
    %vm607 = vweird.f32 %v486
    %vm608 = vweird.f32 %v601
    %vm609 = vmor %vm607, %vm608
    %v610 = vsel %vm609, %v601, %v606
    %v611 = vrsqrt.pop %v487
    %v612 = vmul.f32 %v611, %v487
    %v613 = vmul.f32 %v612, %v611
    %v614 = vmul.f32 0.5, %v613
    %v615 = vsub.f32 1.5, %v614
    %v616 = vmul.f32 %v611, %v615
    %vm617 = vweird.f32 %v487
    %vm618 = vweird.f32 %v611
    %vm619 = vmor %vm617, %vm618
    %v620 = vsel %vm619, %v611, %v616
    %v621 = vrsqrt.pop %v488
    %v622 = vmul.f32 %v621, %v488
    %v623 = vmul.f32 %v622, %v621
    %v624 = vmul.f32 0.5, %v623
    %v625 = vsub.f32 1.5, %v624
    %v626 = vmul.f32 %v621, %v625
    %vm627 = vweird.f32 %v488
    %vm628 = vweird.f32 %v621
    %vm629 = vmor %vm627, %vm628
    %v630 = vsel %vm629, %v621, %v626
    %v631 = vrsqrt.pop %v489
    %v632 = vmul.f32 %v631, %v489
    %v633 = vmul.f32 %v632, %v631
    %v634 = vmul.f32 0.5, %v633
    %v635 = vsub.f32 1.5, %v634
    %v636 = vmul.f32 %v631, %v635
    %vm637 = vweird.f32 %v489
    %vm638 = vweird.f32 %v631
    %vm639 = vmor %vm637, %vm638
    %v640 = vsel %vm639, %v631, %v636
    %v641 = vrsqrt.pop %v490
    %v642 = vmul.f32 %v641, %v490
    %v643 = vmul.f32 %v642, %v641
    %v644 = vmul.f32 0.5, %v643
    %v645 = vsub.f32 1.5, %v644
    %v646 = vmul.f32 %v641, %v645
    %vm647 = vweird.f32 %v490
    %vm648 = vweird.f32 %v641
    %vm649 = vmor %vm647, %vm648
    %v650 = vsel %vm649, %v641, %v646
    %v651 = vmul.f32 %v331, %v500
    %v652 = vmul.f32 %v332, %v510
    %v653 = vmul.f32 %v333, %v520
    %v654 = vmul.f32 %v334, %v530
    %v655 = vmul.f32 %v335, %v540
    %v656 = vmul.f32 %v336, %v550
    %v657 = vmul.f32 %v337, %v560
    %v658 = vmul.f32 %v338, %v570
    %v659 = vmul.f32 %v339, %v580
    %v660 = vmul.f32 %v340, %v590
    %v661 = vmul.f32 %v341, %v600
    %v662 = vmul.f32 %v342, %v610
    %v663 = vmul.f32 %v343, %v620
    %v664 = vmul.f32 %v344, %v630
    %v665 = vmul.f32 %v345, %v640
    %v666 = vmul.f32 %v346, %v650
    %v667 = vld [vmem:[%s3] sm:$0x1]
    %v668 = vld [vmem:[%s4] sm:$0x1]
    %v669 = vpack.c.bf16 %v651, %v651
    %v670 = vpack.c.bf16 %v652, %v652
    %v671 = vpack.c.bf16 %v653, %v653
    %v672 = vpack.c.bf16 %v654, %v654
    %v673 = vpack.c.bf16 %v655, %v655
    %v674 = vpack.c.bf16 %v656, %v656
    %v675 = vpack.c.bf16 %v657, %v657
    %v676 = vpack.c.bf16 %v658, %v658
    %v677 = vpack.c.bf16 %v659, %v659
    %v678 = vpack.c.bf16 %v660, %v660
    %v679 = vpack.c.bf16 %v661, %v661
    %v680 = vpack.c.bf16 %v662, %v662
    %v681 = vpack.c.bf16 %v663, %v663
    %v682 = vpack.c.bf16 %v664, %v664
    %v683 = vpack.c.bf16 %v665, %v665
    %v684 = vpack.c.bf16 %v666, %v666
    %v685 = vpack.c.bf16 %v667, %v667
    %v686 = vpack.c.bf16 %v668, %v668
    %v688 = vpack.i.b16 %v685, %v685
    %v690 = vperm.slane %v688, 0
    %v691 = vunpack.c.l.bf16 %v669
    %v692 = vunpack.c.l.bf16 %v670
    %v693 = vunpack.c.l.bf16 %v671
    %v694 = vunpack.c.l.bf16 %v672
    %v695 = vunpack.c.l.bf16 %v673
    %v696 = vunpack.c.l.bf16 %v674
    %v697 = vunpack.c.l.bf16 %v675
    %v698 = vunpack.c.l.bf16 %v676
    %v699 = vunpack.c.l.bf16 %v677
    %v700 = vunpack.c.l.bf16 %v678
    %v701 = vunpack.c.l.bf16 %v679
    %v702 = vunpack.c.l.bf16 %v680
    %v703 = vunpack.c.l.bf16 %v681
    %v704 = vunpack.c.l.bf16 %v682
    %v705 = vunpack.c.l.bf16 %v683
    %v706 = vunpack.c.l.bf16 %v684
    %v707 = vunpack.c.l.bf16 %v690
    %v708 = vmul.f32 %v691, %v707
    %v709 = vmul.f32 %v692, %v707
    %v710 = vmul.f32 %v693, %v707
    %v711 = vmul.f32 %v694, %v707
    %v712 = vmul.f32 %v695, %v707
    %v713 = vmul.f32 %v696, %v707
    %v714 = vmul.f32 %v697, %v707
    %v715 = vmul.f32 %v698, %v707
    %v716 = vmul.f32 %v699, %v707
    %v717 = vmul.f32 %v700, %v707
    %v718 = vmul.f32 %v701, %v707
    %v719 = vmul.f32 %v702, %v707
    %v720 = vmul.f32 %v703, %v707
    %v721 = vmul.f32 %v704, %v707
    %v722 = vmul.f32 %v705, %v707
    %v723 = vmul.f32 %v706, %v707
    %v724 = vpack.c.bf16 %v708, %v708
    %v725 = vpack.c.bf16 %v709, %v709
    %v726 = vpack.c.bf16 %v710, %v710
    %v727 = vpack.c.bf16 %v711, %v711
    %v728 = vpack.c.bf16 %v712, %v712
    %v729 = vpack.c.bf16 %v713, %v713
    %v730 = vpack.c.bf16 %v714, %v714
    %v731 = vpack.c.bf16 %v715, %v715
    %v732 = vpack.c.bf16 %v716, %v716
    %v733 = vpack.c.bf16 %v717, %v717
    %v734 = vpack.c.bf16 %v718, %v718
    %v735 = vpack.c.bf16 %v719, %v719
    %v736 = vpack.c.bf16 %v720, %v720
    %v737 = vpack.c.bf16 %v721, %v721
    %v738 = vpack.c.bf16 %v722, %v722
    %v739 = vpack.c.bf16 %v723, %v723
    %v741 = vpack.i.b16 %v686, %v686
    %v743 = vperm.slane %v741, 0
    %v744 = vunpack.c.l.bf16 %v724
    %v745 = vunpack.c.l.bf16 %v725
    %v746 = vunpack.c.l.bf16 %v726
    %v747 = vunpack.c.l.bf16 %v727
    %v748 = vunpack.c.l.bf16 %v728
    %v749 = vunpack.c.l.bf16 %v729
    %v750 = vunpack.c.l.bf16 %v730
    %v751 = vunpack.c.l.bf16 %v731
    %v752 = vunpack.c.l.bf16 %v732
    %v753 = vunpack.c.l.bf16 %v733
    %v754 = vunpack.c.l.bf16 %v734
    %v755 = vunpack.c.l.bf16 %v735
    %v756 = vunpack.c.l.bf16 %v736
    %v757 = vunpack.c.l.bf16 %v737
    %v758 = vunpack.c.l.bf16 %v738
    %v759 = vunpack.c.l.bf16 %v739
    %v760 = vunpack.c.l.bf16 %v743
    %v761 = vadd.f32 %v744, %v760
    %v762 = vadd.f32 %v745, %v760
    %v763 = vadd.f32 %v746, %v760
    %v764 = vadd.f32 %v747, %v760
    %v765 = vadd.f32 %v748, %v760
    %v766 = vadd.f32 %v749, %v760
    %v767 = vadd.f32 %v750, %v760
    %v768 = vadd.f32 %v751, %v760
    %v769 = vadd.f32 %v752, %v760
    %v770 = vadd.f32 %v753, %v760
    %v771 = vadd.f32 %v754, %v760
    %v772 = vadd.f32 %v755, %v760
    %v773 = vadd.f32 %v756, %v760
    %v774 = vadd.f32 %v757, %v760
    %v775 = vadd.f32 %v758, %v760
    %v776 = vadd.f32 %v759, %v760
    %v777 = vpack.c.bf16 %v761, %v761
    %v778 = vpack.c.bf16 %v762, %v762
    %v779 = vpack.c.bf16 %v763, %v763
    %v780 = vpack.c.bf16 %v764, %v764
    %v781 = vpack.c.bf16 %v765, %v765
    %v782 = vpack.c.bf16 %v766, %v766
    %v783 = vpack.c.bf16 %v767, %v767
    %v784 = vpack.c.bf16 %v768, %v768
    %v785 = vpack.c.bf16 %v769, %v769
    %v786 = vpack.c.bf16 %v770, %v770
    %v787 = vpack.c.bf16 %v771, %v771
    %v788 = vpack.c.bf16 %v772, %v772
    %v789 = vpack.c.bf16 %v773, %v773
    %v790 = vpack.c.bf16 %v774, %v774
    %v791 = vpack.c.bf16 %v775, %v775
    %v792 = vpack.c.bf16 %v776, %v776
    %v793 = vunpack.c.l.bf16 %v777
    %v794 = vunpack.c.l.bf16 %v778
    %v795 = vunpack.c.l.bf16 %v779
    %v796 = vunpack.c.l.bf16 %v780
    %v797 = vunpack.c.l.bf16 %v781
    %v798 = vunpack.c.l.bf16 %v782
    %v799 = vunpack.c.l.bf16 %v783
    %v800 = vunpack.c.l.bf16 %v784
    %v801 = vunpack.c.l.bf16 %v785
    %v802 = vunpack.c.l.bf16 %v786
    %v803 = vunpack.c.l.bf16 %v787
    %v804 = vunpack.c.l.bf16 %v788
    %v805 = vunpack.c.l.bf16 %v789
    %v806 = vunpack.c.l.bf16 %v790
    %v807 = vunpack.c.l.bf16 %v791
    %v808 = vunpack.c.l.bf16 %v792
    %v809 = vmax.f32 %v793, 0.0
    %v810 = vmax.f32 %v794, 0.0
    %v811 = vmax.f32 %v795, 0.0
    %v812 = vmax.f32 %v796, 0.0
    %v813 = vmax.f32 %v797, 0.0
    %v814 = vmax.f32 %v798, 0.0
    %v815 = vmax.f32 %v799, 0.0
    %v816 = vmax.f32 %v800, 0.0
    %v817 = vmax.f32 %v801, 0.0
    %v818 = vmax.f32 %v802, 0.0
    %v819 = vmax.f32 %v803, 0.0
    %v820 = vmax.f32 %v804, 0.0
    %v821 = vmax.f32 %v805, 0.0
    %v822 = vmax.f32 %v806, 0.0
    %v823 = vmax.f32 %v807, 0.0
    %v824 = vmax.f32 %v808, 0.0
    %v825 = vpack.c.bf16 %v810, %v809
    %v826 = vpack.c.bf16 %v812, %v811
    %v827 = vpack.c.bf16 %v814, %v813
    %v828 = vpack.c.bf16 %v816, %v815
    %v829 = vpack.c.bf16 %v818, %v817
    %v830 = vpack.c.bf16 %v820, %v819
    %v831 = vpack.c.bf16 %v822, %v821
    %v832 = vpack.c.bf16 %v824, %v823
    %v833 = vld [vmem:[#allocation7] sm:$0xf]
    %v834 = vld [vmem:[#allocation7 + $0x4] sm:$0xf]
    %v835 = vld [vmem:[#allocation7 + $0x8] sm:$0xf]
    %v836 = vld [vmem:[#allocation7 + $0xc] sm:$0xf]
    %v837 = vld [vmem:[#allocation7 + $0x10] sm:$0xf]
    %v838 = vld [vmem:[#allocation7 + $0x14] sm:$0xf]
    %v839 = vld [vmem:[#allocation7 + $0x18] sm:$0xf]
    %v840 = vld [vmem:[#allocation7 + $0x1c] sm:$0xf]
    %v841 = vld [vmem:[#allocation7 + $0x20] sm:$0xf]
    %v842 = vld [vmem:[#allocation7 + $0x24] sm:$0xf]
    %v843 = vld [vmem:[#allocation7 + $0x28] sm:$0xf]
    %v844 = vld [vmem:[#allocation7 + $0x2c] sm:$0xf]
    %v845 = vld [vmem:[#allocation7 + $0x30] sm:$0xf]
    %v846 = vld [vmem:[#allocation7 + $0x34] sm:$0xf]
    %v847 = vld [vmem:[#allocation7 + $0x38] sm:$0xf]
    %v848 = vld [vmem:[#allocation7 + $0x3c] sm:$0xf]
    %v849 = vld [vmem:[%s6] sm:$0x1]
    %v851 = vperm.slane %v849, 0
    %v869 = vunpack.c.l.b16 %v833
    %v870 = vunpack.c.l.b16 %v834
    %v871 = vunpack.c.l.b16 %v835
    %v872 = vunpack.c.l.b16 %v836
    %v873 = vunpack.c.l.b16 %v837
    %v874 = vunpack.c.l.b16 %v838
    %v875 = vunpack.c.l.b16 %v839
    %v876 = vunpack.c.l.b16 %v840
    %v877 = vunpack.c.l.b16 %v841
    %v878 = vunpack.c.l.b16 %v842
    %v879 = vunpack.c.l.b16 %v843
    %v880 = vunpack.c.l.b16 %v844
    %v881 = vunpack.c.l.b16 %v845
    %v882 = vunpack.c.l.b16 %v846
    %v883 = vunpack.c.l.b16 %v847
    %v884 = vunpack.c.l.b16 %v848
    %v885 = vpack.c.b16 %v870, %v869
    %v886 = vpack.c.b16 %v872, %v871
    %v887 = vpack.c.b16 %v874, %v873
    %v888 = vpack.c.b16 %v876, %v875
    %v889 = vpack.c.b16 %v878, %v877
    %v890 = vpack.c.b16 %v880, %v879
    %v891 = vpack.c.b16 %v882, %v881
    %v892 = vpack.c.b16 %v884, %v883
    %901 = vmatpush.bf16.msra.mxu0 %v892
    %902 = vmatpush.bf16.msra.mxu0 %v891
    %903 = vmatpush.bf16.msra.mxu0 %v890
    %904 = vmatpush.bf16.msra.mxu0 %v889
    %905 = vmatpush.bf16.msra.mxu0 %v888
    %906 = vmatpush.bf16.msra.mxu0 %v887
    %907 = vmatpush.bf16.msra.mxu0 %v886
    %908 = vmatpush.bf16.msra.mxu0 %v885
    %909 = vmatmul.bf16.gmra.mxu0 %v825
    %v910 = vpop.f32.mrf.mxu0
    %v911 = vadd.f32 %v851, %v910
    %v912 = vpop.f32.mrf.mxu0
    %v913 = vadd.f32 %v851, %v912
    %914 = vmatmul.bf16.gmra.mxu0 %v826
    %v915 = vpop.f32.mrf.mxu0
    %v916 = vadd.f32 %v851, %v915
    %v917 = vpop.f32.mrf.mxu0
    %v918 = vadd.f32 %v851, %v917
    %919 = vmatmul.bf16.gmra.mxu0 %v827
    %v920 = vpop.f32.mrf.mxu0
    %v921 = vadd.f32 %v851, %v920
    %v922 = vpop.f32.mrf.mxu0
    %v923 = vadd.f32 %v851, %v922
    %924 = vmatmul.bf16.gmra.mxu0 %v828
    %v925 = vpop.f32.mrf.mxu0
    %v926 = vadd.f32 %v851, %v925
    %v927 = vpop.f32.mrf.mxu0
    %v928 = vadd.f32 %v851, %v927
    %929 = vmatmul.bf16.gmra.mxu0 %v829
    %v930 = vpop.f32.mrf.mxu0
    %v931 = vadd.f32 %v851, %v930
    %v932 = vpop.f32.mrf.mxu0
    %v933 = vadd.f32 %v851, %v932
    %934 = vmatmul.bf16.gmra.mxu0 %v830
    %v935 = vpop.f32.mrf.mxu0
    %v936 = vadd.f32 %v851, %v935
    %v937 = vpop.f32.mrf.mxu0
    %v938 = vadd.f32 %v851, %v937
    %939 = vmatmul.bf16.gmra.mxu0 %v831
    %v940 = vpop.f32.mrf.mxu0
    %v941 = vadd.f32 %v851, %v940
    %v942 = vpop.f32.mrf.mxu0
    %v943 = vadd.f32 %v851, %v942
    %944 = vmatmul.bf16.gmra.mxu0 %v832
    %v945 = vpop.f32.mrf.mxu0
    %v946 = vadd.f32 %v851, %v945
    %v947 = vpop.f32.mrf.mxu0
    %v948 = vadd.f32 %v851, %v947
    %949 = vdwg.mxu0
    %950 = vadd.xlane.f32.xlu0 %v911
    %v951 = vpop.xlane.xlu0 %950
    %952 = vadd.xlane.f32.xlu0 %v913
    %v953 = vpop.xlane.xlu0 %952
    %954 = vadd.xlane.f32.xlu0 %v916
    %v955 = vpop.xlane.xlu0 %954
    %956 = vadd.xlane.f32.xlu0 %v918
    %v957 = vpop.xlane.xlu0 %956
    %958 = vadd.xlane.f32.xlu0 %v921
    %v959 = vpop.xlane.xlu0 %958
    %960 = vadd.xlane.f32.xlu0 %v923
    %v961 = vpop.xlane.xlu0 %960
    %962 = vadd.xlane.f32.xlu0 %v926
    %v963 = vpop.xlane.xlu0 %962
    %964 = vadd.xlane.f32.xlu0 %v928
    %v965 = vpop.xlane.xlu0 %964
    %966 = vadd.xlane.f32.xlu0 %v931
    %v967 = vpop.xlane.xlu0 %966
    %968 = vadd.xlane.f32.xlu0 %v933
    %v969 = vpop.xlane.xlu0 %968
    %970 = vadd.xlane.f32.xlu0 %v936
    %v971 = vpop.xlane.xlu0 %970
    %972 = vadd.xlane.f32.xlu0 %v938
    %v973 = vpop.xlane.xlu0 %972
    %974 = vadd.xlane.f32.xlu0 %v941
    %v975 = vpop.xlane.xlu0 %974
    %976 = vadd.xlane.f32.xlu0 %v943
    %v977 = vpop.xlane.xlu0 %976
    %978 = vadd.xlane.f32.xlu0 %v946
    %v979 = vpop.xlane.xlu0 %978
    %980 = vadd.xlane.f32.xlu0 %v948
    %v981 = vpop.xlane.xlu0 %980
    %v982 = vmul.f32 %v951, 0.03125
    %v983 = vmul.f32 %v953, 0.03125
    %v984 = vmul.f32 %v955, 0.03125
    %v985 = vmul.f32 %v957, 0.03125
    %v986 = vmul.f32 %v959, 0.03125
    %v987 = vmul.f32 %v961, 0.03125
    %v988 = vmul.f32 %v963, 0.03125
    %v989 = vmul.f32 %v965, 0.03125
    %v990 = vmul.f32 %v967, 0.03125
    %v991 = vmul.f32 %v969, 0.03125
    %v992 = vmul.f32 %v971, 0.03125
    %v993 = vmul.f32 %v973, 0.03125
    %v994 = vmul.f32 %v975, 0.03125
    %v995 = vmul.f32 %v977, 0.03125
    %v996 = vmul.f32 %v979, 0.03125
    %v997 = vmul.f32 %v981, 0.03125
    %v998 = vsub.f32 %v911, %v982
    %v999 = vsub.f32 %v913, %v983
    %v1000 = vsub.f32 %v916, %v984
    %v1001 = vsub.f32 %v918, %v985
    %v1002 = vsub.f32 %v921, %v986
    %v1003 = vsub.f32 %v923, %v987
    %v1004 = vsub.f32 %v926, %v988
    %v1005 = vsub.f32 %v928, %v989
    %v1006 = vsub.f32 %v931, %v990
    %v1007 = vsub.f32 %v933, %v991
    %v1008 = vsub.f32 %v936, %v992
    %v1009 = vsub.f32 %v938, %v993
    %v1010 = vsub.f32 %v941, %v994
    %v1011 = vsub.f32 %v943, %v995
    %v1012 = vsub.f32 %v946, %v996
    %v1013 = vsub.f32 %v948, %v997
    %v1014 = vmul.f32 %v998, %v998
    %v1015 = vmul.f32 %v999, %v999
    %v1016 = vmul.f32 %v1000, %v1000
    %v1017 = vmul.f32 %v1001, %v1001
    %v1018 = vmul.f32 %v1002, %v1002
    %v1019 = vmul.f32 %v1003, %v1003
    %v1020 = vmul.f32 %v1004, %v1004
    %v1021 = vmul.f32 %v1005, %v1005
    %v1022 = vmul.f32 %v1006, %v1006
    %v1023 = vmul.f32 %v1007, %v1007
    %v1024 = vmul.f32 %v1008, %v1008
    %v1025 = vmul.f32 %v1009, %v1009
    %v1026 = vmul.f32 %v1010, %v1010
    %v1027 = vmul.f32 %v1011, %v1011
    %v1028 = vmul.f32 %v1012, %v1012
    %v1029 = vmul.f32 %v1013, %v1013
    %1030 = vadd.xlane.f32.xlu0 %v1014
    %v1031 = vpop.xlane.xlu0 %1030
    %1032 = vadd.xlane.f32.xlu0 %v1015
    %v1033 = vpop.xlane.xlu0 %1032
    %1034 = vadd.xlane.f32.xlu0 %v1016
    %v1035 = vpop.xlane.xlu0 %1034
    %1036 = vadd.xlane.f32.xlu0 %v1017
    %v1037 = vpop.xlane.xlu0 %1036
    %1038 = vadd.xlane.f32.xlu0 %v1018
    %v1039 = vpop.xlane.xlu0 %1038
    %1040 = vadd.xlane.f32.xlu0 %v1019
    %v1041 = vpop.xlane.xlu0 %1040
    %1042 = vadd.xlane.f32.xlu0 %v1020
    %v1043 = vpop.xlane.xlu0 %1042
    %1044 = vadd.xlane.f32.xlu0 %v1021
    %v1045 = vpop.xlane.xlu0 %1044
    %1046 = vadd.xlane.f32.xlu0 %v1022
    %v1047 = vpop.xlane.xlu0 %1046
    %1048 = vadd.xlane.f32.xlu0 %v1023
    %v1049 = vpop.xlane.xlu0 %1048
    %1050 = vadd.xlane.f32.xlu0 %v1024
    %v1051 = vpop.xlane.xlu0 %1050
    %1052 = vadd.xlane.f32.xlu0 %v1025
    %v1053 = vpop.xlane.xlu0 %1052
    %1054 = vadd.xlane.f32.xlu0 %v1026
    %v1055 = vpop.xlane.xlu0 %1054
    %1056 = vadd.xlane.f32.xlu0 %v1027
    %v1057 = vpop.xlane.xlu0 %1056
    %1058 = vadd.xlane.f32.xlu0 %v1028
    %v1059 = vpop.xlane.xlu0 %1058
    %1060 = vadd.xlane.f32.xlu0 %v1029
    %v1061 = vpop.xlane.xlu0 %1060
    %v1062 = vmul.f32 %v982, %v982
    %v1063 = vmul.f32 %v983, %v983
    %v1064 = vmul.f32 %v984, %v984
    %v1065 = vmul.f32 %v985, %v985
    %v1066 = vmul.f32 %v986, %v986
    %v1067 = vmul.f32 %v987, %v987
    %v1068 = vmul.f32 %v988, %v988
    %v1069 = vmul.f32 %v989, %v989
    %v1070 = vmul.f32 %v990, %v990
    %v1071 = vmul.f32 %v991, %v991
    %v1072 = vmul.f32 %v992, %v992
    %v1073 = vmul.f32 %v993, %v993
    %v1074 = vmul.f32 %v994, %v994
    %v1075 = vmul.f32 %v995, %v995
    %v1076 = vmul.f32 %v996, %v996
    %v1077 = vmul.f32 %v997, %v997
    %v1078 = vmul.f32 %v1062, 96.0
    %v1079 = vmul.f32 %v1063, 96.0
    %v1080 = vmul.f32 %v1064, 96.0
    %v1081 = vmul.f32 %v1065, 96.0
    %v1082 = vmul.f32 %v1066, 96.0
    %v1083 = vmul.f32 %v1067, 96.0
    %v1084 = vmul.f32 %v1068, 96.0
    %v1085 = vmul.f32 %v1069, 96.0
    %v1086 = vmul.f32 %v1070, 96.0
    %v1087 = vmul.f32 %v1071, 96.0
    %v1088 = vmul.f32 %v1072, 96.0
    %v1089 = vmul.f32 %v1073, 96.0
    %v1090 = vmul.f32 %v1074, 96.0
    %v1091 = vmul.f32 %v1075, 96.0
    %v1092 = vmul.f32 %v1076, 96.0
    %v1093 = vmul.f32 %v1077, 96.0
    %v1094 = vsub.f32 %v1031, %v1078
    %v1095 = vsub.f32 %v1033, %v1079
    %v1096 = vsub.f32 %v1035, %v1080
    %v1097 = vsub.f32 %v1037, %v1081
    %v1098 = vsub.f32 %v1039, %v1082
    %v1099 = vsub.f32 %v1041, %v1083
    %v1100 = vsub.f32 %v1043, %v1084
    %v1101 = vsub.f32 %v1045, %v1085
    %v1102 = vsub.f32 %v1047, %v1086
    %v1103 = vsub.f32 %v1049, %v1087
    %v1104 = vsub.f32 %v1051, %v1088
    %v1105 = vsub.f32 %v1053, %v1089
    %v1106 = vsub.f32 %v1055, %v1090
    %v1107 = vsub.f32 %v1057, %v1091
    %v1108 = vsub.f32 %v1059, %v1092
    %v1109 = vsub.f32 %v1061, %v1093
    %v1110 = vmul.f32 %v1094, 0.03125
    %v1111 = vmul.f32 %v1095, 0.03125
    %v1112 = vmul.f32 %v1096, 0.03125
    %v1113 = vmul.f32 %v1097, 0.03125
    %v1114 = vmul.f32 %v1098, 0.03125
    %v1115 = vmul.f32 %v1099, 0.03125
    %v1116 = vmul.f32 %v1100, 0.03125
    %v1117 = vmul.f32 %v1101, 0.03125
    %v1118 = vmul.f32 %v1102, 0.03125
    %v1119 = vmul.f32 %v1103, 0.03125
    %v1120 = vmul.f32 %v1104, 0.03125
    %v1121 = vmul.f32 %v1105, 0.03125
    %v1122 = vmul.f32 %v1106, 0.03125
    %v1123 = vmul.f32 %v1107, 0.03125
    %v1124 = vmul.f32 %v1108, 0.03125
    %v1125 = vmul.f32 %v1109, 0.03125
    %v1126 = vmax.f32 %v1110, 0.0
    %v1127 = vmax.f32 %v1111, 0.0
    %v1128 = vmax.f32 %v1112, 0.0
    %v1129 = vmax.f32 %v1113, 0.0
    %v1130 = vmax.f32 %v1114, 0.0
    %v1131 = vmax.f32 %v1115, 0.0
    %v1132 = vmax.f32 %v1116, 0.0
    %v1133 = vmax.f32 %v1117, 0.0
    %v1134 = vmax.f32 %v1118, 0.0
    %v1135 = vmax.f32 %v1119, 0.0
    %v1136 = vmax.f32 %v1120, 0.0
    %v1137 = vmax.f32 %v1121, 0.0
    %v1138 = vmax.f32 %v1122, 0.0
    %v1139 = vmax.f32 %v1123, 0.0
    %v1140 = vmax.f32 %v1124, 0.0
    %v1141 = vmax.f32 %v1125, 0.0
    %v1142 = vadd.f32 %v1126, 1e-05
    %v1143 = vadd.f32 %v1127, 1e-05
    %v1144 = vadd.f32 %v1128, 1e-05
    %v1145 = vadd.f32 %v1129, 1e-05
    %v1146 = vadd.f32 %v1130, 1e-05
    %v1147 = vadd.f32 %v1131, 1e-05
    %v1148 = vadd.f32 %v1132, 1e-05
    %v1149 = vadd.f32 %v1133, 1e-05
    %v1150 = vadd.f32 %v1134, 1e-05
    %v1151 = vadd.f32 %v1135, 1e-05
    %v1152 = vadd.f32 %v1136, 1e-05
    %v1153 = vadd.f32 %v1137, 1e-05
    %v1154 = vadd.f32 %v1138, 1e-05
    %v1155 = vadd.f32 %v1139, 1e-05
    %v1156 = vadd.f32 %v1140, 1e-05
    %v1157 = vadd.f32 %v1141, 1e-05
    %v1158 = vrsqrt.pop %v1142
    %v1159 = vmul.f32 %v1158, %v1142
    %v1160 = vmul.f32 %v1159, %v1158
    %v1161 = vmul.f32 0.5, %v1160
    %v1162 = vsub.f32 1.5, %v1161
    %v1163 = vmul.f32 %v1158, %v1162
    %vm1164 = vweird.f32 %v1142
    %vm1165 = vweird.f32 %v1158
    %vm1166 = vmor %vm1164, %vm1165
    %v1167 = vsel %vm1166, %v1158, %v1163
    %v1168 = vrsqrt.pop %v1143
    %v1169 = vmul.f32 %v1168, %v1143
    %v1170 = vmul.f32 %v1169, %v1168
    %v1171 = vmul.f32 0.5, %v1170
    %v1172 = vsub.f32 1.5, %v1171
    %v1173 = vmul.f32 %v1168, %v1172
    %vm1174 = vweird.f32 %v1143
    %vm1175 = vweird.f32 %v1168
    %vm1176 = vmor %vm1174, %vm1175
    %v1177 = vsel %vm1176, %v1168, %v1173
    %v1178 = vrsqrt.pop %v1144
    %v1179 = vmul.f32 %v1178, %v1144
    %v1180 = vmul.f32 %v1179, %v1178
    %v1181 = vmul.f32 0.5, %v1180
    %v1182 = vsub.f32 1.5, %v1181
    %v1183 = vmul.f32 %v1178, %v1182
    %vm1184 = vweird.f32 %v1144
    %vm1185 = vweird.f32 %v1178
    %vm1186 = vmor %vm1184, %vm1185
    %v1187 = vsel %vm1186, %v1178, %v1183
    %v1188 = vrsqrt.pop %v1145
    %v1189 = vmul.f32 %v1188, %v1145
    %v1190 = vmul.f32 %v1189, %v1188
    %v1191 = vmul.f32 0.5, %v1190
    %v1192 = vsub.f32 1.5, %v1191
    %v1193 = vmul.f32 %v1188, %v1192
    %vm1194 = vweird.f32 %v1145
    %vm1195 = vweird.f32 %v1188
    %vm1196 = vmor %vm1194, %vm1195
    %v1197 = vsel %vm1196, %v1188, %v1193
    %v1198 = vrsqrt.pop %v1146
    %v1199 = vmul.f32 %v1198, %v1146
    %v1200 = vmul.f32 %v1199, %v1198
    %v1201 = vmul.f32 0.5, %v1200
    %v1202 = vsub.f32 1.5, %v1201
    %v1203 = vmul.f32 %v1198, %v1202
    %vm1204 = vweird.f32 %v1146
    %vm1205 = vweird.f32 %v1198
    %vm1206 = vmor %vm1204, %vm1205
    %v1207 = vsel %vm1206, %v1198, %v1203
    %v1208 = vrsqrt.pop %v1147
    %v1209 = vmul.f32 %v1208, %v1147
    %v1210 = vmul.f32 %v1209, %v1208
    %v1211 = vmul.f32 0.5, %v1210
    %v1212 = vsub.f32 1.5, %v1211
    %v1213 = vmul.f32 %v1208, %v1212
    %vm1214 = vweird.f32 %v1147
    %vm1215 = vweird.f32 %v1208
    %vm1216 = vmor %vm1214, %vm1215
    %v1217 = vsel %vm1216, %v1208, %v1213
    %v1218 = vrsqrt.pop %v1148
    %v1219 = vmul.f32 %v1218, %v1148
    %v1220 = vmul.f32 %v1219, %v1218
    %v1221 = vmul.f32 0.5, %v1220
    %v1222 = vsub.f32 1.5, %v1221
    %v1223 = vmul.f32 %v1218, %v1222
    %vm1224 = vweird.f32 %v1148
    %vm1225 = vweird.f32 %v1218
    %vm1226 = vmor %vm1224, %vm1225
    %v1227 = vsel %vm1226, %v1218, %v1223
    %v1228 = vrsqrt.pop %v1149
    %v1229 = vmul.f32 %v1228, %v1149
    %v1230 = vmul.f32 %v1229, %v1228
    %v1231 = vmul.f32 0.5, %v1230
    %v1232 = vsub.f32 1.5, %v1231
    %v1233 = vmul.f32 %v1228, %v1232
    %vm1234 = vweird.f32 %v1149
    %vm1235 = vweird.f32 %v1228
    %vm1236 = vmor %vm1234, %vm1235
    %v1237 = vsel %vm1236, %v1228, %v1233
    %v1238 = vrsqrt.pop %v1150
    %v1239 = vmul.f32 %v1238, %v1150
    %v1240 = vmul.f32 %v1239, %v1238
    %v1241 = vmul.f32 0.5, %v1240
    %v1242 = vsub.f32 1.5, %v1241
    %v1243 = vmul.f32 %v1238, %v1242
    %vm1244 = vweird.f32 %v1150
    %vm1245 = vweird.f32 %v1238
    %vm1246 = vmor %vm1244, %vm1245
    %v1247 = vsel %vm1246, %v1238, %v1243
    %v1248 = vrsqrt.pop %v1151
    %v1249 = vmul.f32 %v1248, %v1151
    %v1250 = vmul.f32 %v1249, %v1248
    %v1251 = vmul.f32 0.5, %v1250
    %v1252 = vsub.f32 1.5, %v1251
    %v1253 = vmul.f32 %v1248, %v1252
    %vm1254 = vweird.f32 %v1151
    %vm1255 = vweird.f32 %v1248
    %vm1256 = vmor %vm1254, %vm1255
    %v1257 = vsel %vm1256, %v1248, %v1253
    %v1258 = vrsqrt.pop %v1152
    %v1259 = vmul.f32 %v1258, %v1152
    %v1260 = vmul.f32 %v1259, %v1258
    %v1261 = vmul.f32 0.5, %v1260
    %v1262 = vsub.f32 1.5, %v1261
    %v1263 = vmul.f32 %v1258, %v1262
    %vm1264 = vweird.f32 %v1152
    %vm1265 = vweird.f32 %v1258
    %vm1266 = vmor %vm1264, %vm1265
    %v1267 = vsel %vm1266, %v1258, %v1263
    %v1268 = vrsqrt.pop %v1153
    %v1269 = vmul.f32 %v1268, %v1153
    %v1270 = vmul.f32 %v1269, %v1268
    %v1271 = vmul.f32 0.5, %v1270
    %v1272 = vsub.f32 1.5, %v1271
    %v1273 = vmul.f32 %v1268, %v1272
    %vm1274 = vweird.f32 %v1153
    %vm1275 = vweird.f32 %v1268
    %vm1276 = vmor %vm1274, %vm1275
    %v1277 = vsel %vm1276, %v1268, %v1273
    %v1278 = vrsqrt.pop %v1154
    %v1279 = vmul.f32 %v1278, %v1154
    %v1280 = vmul.f32 %v1279, %v1278
    %v1281 = vmul.f32 0.5, %v1280
    %v1282 = vsub.f32 1.5, %v1281
    %v1283 = vmul.f32 %v1278, %v1282
    %vm1284 = vweird.f32 %v1154
    %vm1285 = vweird.f32 %v1278
    %vm1286 = vmor %vm1284, %vm1285
    %v1287 = vsel %vm1286, %v1278, %v1283
    %v1288 = vrsqrt.pop %v1155
    %v1289 = vmul.f32 %v1288, %v1155
    %v1290 = vmul.f32 %v1289, %v1288
    %v1291 = vmul.f32 0.5, %v1290
    %v1292 = vsub.f32 1.5, %v1291
    %v1293 = vmul.f32 %v1288, %v1292
    %vm1294 = vweird.f32 %v1155
    %vm1295 = vweird.f32 %v1288
    %vm1296 = vmor %vm1294, %vm1295
    %v1297 = vsel %vm1296, %v1288, %v1293
    %v1298 = vrsqrt.pop %v1156
    %v1299 = vmul.f32 %v1298, %v1156
    %v1300 = vmul.f32 %v1299, %v1298
    %v1301 = vmul.f32 0.5, %v1300
    %v1302 = vsub.f32 1.5, %v1301
    %v1303 = vmul.f32 %v1298, %v1302
    %vm1304 = vweird.f32 %v1156
    %vm1305 = vweird.f32 %v1298
    %vm1306 = vmor %vm1304, %vm1305
    %v1307 = vsel %vm1306, %v1298, %v1303
    %v1308 = vrsqrt.pop %v1157
    %v1309 = vmul.f32 %v1308, %v1157
    %v1310 = vmul.f32 %v1309, %v1308
    %v1311 = vmul.f32 0.5, %v1310
    %v1312 = vsub.f32 1.5, %v1311
    %v1313 = vmul.f32 %v1308, %v1312
    %vm1314 = vweird.f32 %v1157
    %vm1315 = vweird.f32 %v1308
    %vm1316 = vmor %vm1314, %vm1315
    %v1317 = vsel %vm1316, %v1308, %v1313
    %v1318 = vmul.f32 %v998, %v1167
    %v1319 = vmul.f32 %v999, %v1177
    %v1320 = vmul.f32 %v1000, %v1187
    %v1321 = vmul.f32 %v1001, %v1197
    %v1322 = vmul.f32 %v1002, %v1207
    %v1323 = vmul.f32 %v1003, %v1217
    %v1324 = vmul.f32 %v1004, %v1227
    %v1325 = vmul.f32 %v1005, %v1237
    %v1326 = vmul.f32 %v1006, %v1247
    %v1327 = vmul.f32 %v1007, %v1257
    %v1328 = vmul.f32 %v1008, %v1267
    %v1329 = vmul.f32 %v1009, %v1277
    %v1330 = vmul.f32 %v1010, %v1287
    %v1331 = vmul.f32 %v1011, %v1297
    %v1332 = vmul.f32 %v1012, %v1307
    %v1333 = vmul.f32 %v1013, %v1317
    %v1334 = vld [vmem:[%s7] sm:$0x1]
    %v1335 = vld [vmem:[%s8] sm:$0x1]
    %v1336 = vpack.c.bf16 %v1318, %v1318
    %v1337 = vpack.c.bf16 %v1319, %v1319
    %v1338 = vpack.c.bf16 %v1320, %v1320
    %v1339 = vpack.c.bf16 %v1321, %v1321
    %v1340 = vpack.c.bf16 %v1322, %v1322
    %v1341 = vpack.c.bf16 %v1323, %v1323
    %v1342 = vpack.c.bf16 %v1324, %v1324
    %v1343 = vpack.c.bf16 %v1325, %v1325
    %v1344 = vpack.c.bf16 %v1326, %v1326
    %v1345 = vpack.c.bf16 %v1327, %v1327
    %v1346 = vpack.c.bf16 %v1328, %v1328
    %v1347 = vpack.c.bf16 %v1329, %v1329
    %v1348 = vpack.c.bf16 %v1330, %v1330
    %v1349 = vpack.c.bf16 %v1331, %v1331
    %v1350 = vpack.c.bf16 %v1332, %v1332
    %v1351 = vpack.c.bf16 %v1333, %v1333
    %v1352 = vpack.c.bf16 %v1334, %v1334
    %v1353 = vpack.c.bf16 %v1335, %v1335
    %v1355 = vpack.i.b16 %v1352, %v1352
    %v1357 = vperm.slane %v1355, 0
    %v1358 = vunpack.c.l.bf16 %v1336
    %v1359 = vunpack.c.l.bf16 %v1337
    %v1360 = vunpack.c.l.bf16 %v1338
    %v1361 = vunpack.c.l.bf16 %v1339
    %v1362 = vunpack.c.l.bf16 %v1340
    %v1363 = vunpack.c.l.bf16 %v1341
    %v1364 = vunpack.c.l.bf16 %v1342
    %v1365 = vunpack.c.l.bf16 %v1343
    %v1366 = vunpack.c.l.bf16 %v1344
    %v1367 = vunpack.c.l.bf16 %v1345
    %v1368 = vunpack.c.l.bf16 %v1346
    %v1369 = vunpack.c.l.bf16 %v1347
    %v1370 = vunpack.c.l.bf16 %v1348
    %v1371 = vunpack.c.l.bf16 %v1349
    %v1372 = vunpack.c.l.bf16 %v1350
    %v1373 = vunpack.c.l.bf16 %v1351
    %v1374 = vunpack.c.l.bf16 %v1357
    %v1375 = vmul.f32 %v1358, %v1374
    %v1376 = vmul.f32 %v1359, %v1374
    %v1377 = vmul.f32 %v1360, %v1374
    %v1378 = vmul.f32 %v1361, %v1374
    %v1379 = vmul.f32 %v1362, %v1374
    %v1380 = vmul.f32 %v1363, %v1374
    %v1381 = vmul.f32 %v1364, %v1374
    %v1382 = vmul.f32 %v1365, %v1374
    %v1383 = vmul.f32 %v1366, %v1374
    %v1384 = vmul.f32 %v1367, %v1374
    %v1385 = vmul.f32 %v1368, %v1374
    %v1386 = vmul.f32 %v1369, %v1374
    %v1387 = vmul.f32 %v1370, %v1374
    %v1388 = vmul.f32 %v1371, %v1374
    %v1389 = vmul.f32 %v1372, %v1374
    %v1390 = vmul.f32 %v1373, %v1374
    %v1391 = vpack.c.bf16 %v1375, %v1375
    %v1392 = vpack.c.bf16 %v1376, %v1376
    %v1393 = vpack.c.bf16 %v1377, %v1377
    %v1394 = vpack.c.bf16 %v1378, %v1378
    %v1395 = vpack.c.bf16 %v1379, %v1379
    %v1396 = vpack.c.bf16 %v1380, %v1380
    %v1397 = vpack.c.bf16 %v1381, %v1381
    %v1398 = vpack.c.bf16 %v1382, %v1382
    %v1399 = vpack.c.bf16 %v1383, %v1383
    %v1400 = vpack.c.bf16 %v1384, %v1384
    %v1401 = vpack.c.bf16 %v1385, %v1385
    %v1402 = vpack.c.bf16 %v1386, %v1386
    %v1403 = vpack.c.bf16 %v1387, %v1387
    %v1404 = vpack.c.bf16 %v1388, %v1388
    %v1405 = vpack.c.bf16 %v1389, %v1389
    %v1406 = vpack.c.bf16 %v1390, %v1390
    %v1408 = vpack.i.b16 %v1353, %v1353
    %v1410 = vperm.slane %v1408, 0
    %v1411 = vunpack.c.l.bf16 %v1391
    %v1412 = vunpack.c.l.bf16 %v1392
    %v1413 = vunpack.c.l.bf16 %v1393
    %v1414 = vunpack.c.l.bf16 %v1394
    %v1415 = vunpack.c.l.bf16 %v1395
    %v1416 = vunpack.c.l.bf16 %v1396
    %v1417 = vunpack.c.l.bf16 %v1397
    %v1418 = vunpack.c.l.bf16 %v1398
    %v1419 = vunpack.c.l.bf16 %v1399
    %v1420 = vunpack.c.l.bf16 %v1400
    %v1421 = vunpack.c.l.bf16 %v1401
    %v1422 = vunpack.c.l.bf16 %v1402
    %v1423 = vunpack.c.l.bf16 %v1403
    %v1424 = vunpack.c.l.bf16 %v1404
    %v1425 = vunpack.c.l.bf16 %v1405
    %v1426 = vunpack.c.l.bf16 %v1406
    %v1427 = vunpack.c.l.bf16 %v1410
    %v1428 = vadd.f32 %v1411, %v1427
    %v1429 = vadd.f32 %v1412, %v1427
    %v1430 = vadd.f32 %v1413, %v1427
    %v1431 = vadd.f32 %v1414, %v1427
    %v1432 = vadd.f32 %v1415, %v1427
    %v1433 = vadd.f32 %v1416, %v1427
    %v1434 = vadd.f32 %v1417, %v1427
    %v1435 = vadd.f32 %v1418, %v1427
    %v1436 = vadd.f32 %v1419, %v1427
    %v1437 = vadd.f32 %v1420, %v1427
    %v1438 = vadd.f32 %v1421, %v1427
    %v1439 = vadd.f32 %v1422, %v1427
    %v1440 = vadd.f32 %v1423, %v1427
    %v1441 = vadd.f32 %v1424, %v1427
    %v1442 = vadd.f32 %v1425, %v1427
    %v1443 = vadd.f32 %v1426, %v1427
    %v1444 = vpack.c.bf16 %v1428, %v1428
    %v1445 = vpack.c.bf16 %v1429, %v1429
    %v1446 = vpack.c.bf16 %v1430, %v1430
    %v1447 = vpack.c.bf16 %v1431, %v1431
    %v1448 = vpack.c.bf16 %v1432, %v1432
    %v1449 = vpack.c.bf16 %v1433, %v1433
    %v1450 = vpack.c.bf16 %v1434, %v1434
    %v1451 = vpack.c.bf16 %v1435, %v1435
    %v1452 = vpack.c.bf16 %v1436, %v1436
    %v1453 = vpack.c.bf16 %v1437, %v1437
    %v1454 = vpack.c.bf16 %v1438, %v1438
    %v1455 = vpack.c.bf16 %v1439, %v1439
    %v1456 = vpack.c.bf16 %v1440, %v1440
    %v1457 = vpack.c.bf16 %v1441, %v1441
    %v1458 = vpack.c.bf16 %v1442, %v1442
    %v1459 = vpack.c.bf16 %v1443, %v1443
    %v1460 = vunpack.c.l.bf16 %v1444
    %v1461 = vunpack.c.l.bf16 %v1445
    %v1462 = vunpack.c.l.bf16 %v1446
    %v1463 = vunpack.c.l.bf16 %v1447
    %v1464 = vunpack.c.l.bf16 %v1448
    %v1465 = vunpack.c.l.bf16 %v1449
    %v1466 = vunpack.c.l.bf16 %v1450
    %v1467 = vunpack.c.l.bf16 %v1451
    %v1468 = vunpack.c.l.bf16 %v1452
    %v1469 = vunpack.c.l.bf16 %v1453
    %v1470 = vunpack.c.l.bf16 %v1454
    %v1471 = vunpack.c.l.bf16 %v1455
    %v1472 = vunpack.c.l.bf16 %v1456
    %v1473 = vunpack.c.l.bf16 %v1457
    %v1474 = vunpack.c.l.bf16 %v1458
    %v1475 = vunpack.c.l.bf16 %v1459
    %v1476 = vmax.f32 %v1460, 0.0
    %v1477 = vmax.f32 %v1461, 0.0
    %v1478 = vmax.f32 %v1462, 0.0
    %v1479 = vmax.f32 %v1463, 0.0
    %v1480 = vmax.f32 %v1464, 0.0
    %v1481 = vmax.f32 %v1465, 0.0
    %v1482 = vmax.f32 %v1466, 0.0
    %v1483 = vmax.f32 %v1467, 0.0
    %v1484 = vmax.f32 %v1468, 0.0
    %v1485 = vmax.f32 %v1469, 0.0
    %v1486 = vmax.f32 %v1470, 0.0
    %v1487 = vmax.f32 %v1471, 0.0
    %v1488 = vmax.f32 %v1472, 0.0
    %v1489 = vmax.f32 %v1473, 0.0
    %v1490 = vmax.f32 %v1474, 0.0
    %v1491 = vmax.f32 %v1475, 0.0
    %v1492 = vpack.c.bf16 %v1477, %v1476
    %v1493 = vpack.c.bf16 %v1479, %v1478
    %v1494 = vpack.c.bf16 %v1481, %v1480
    %v1495 = vpack.c.bf16 %v1483, %v1482
    %v1496 = vpack.c.bf16 %v1485, %v1484
    %v1497 = vpack.c.bf16 %v1487, %v1486
    %v1498 = vpack.c.bf16 %v1489, %v1488
    %v1499 = vpack.c.bf16 %v1491, %v1490
    %v1500 = vld [vmem:[#allocation8] sm:$0xf]
    %v1501 = vld [vmem:[#allocation8 + $0x4] sm:$0xf]
    %v1502 = vld [vmem:[#allocation8 + $0x8] sm:$0xf]
    %v1503 = vld [vmem:[#allocation8 + $0xc] sm:$0xf]
    %v1504 = vld [vmem:[#allocation8 + $0x10] sm:$0xf]
    %v1505 = vld [vmem:[#allocation8 + $0x14] sm:$0xf]
    %v1506 = vld [vmem:[#allocation8 + $0x18] sm:$0xf]
    %v1507 = vld [vmem:[#allocation8 + $0x1c] sm:$0xf]
    %v1508 = vld [vmem:[#allocation8 + $0x20] sm:$0xf]
    %v1509 = vld [vmem:[#allocation8 + $0x24] sm:$0xf]
    %v1510 = vld [vmem:[#allocation8 + $0x28] sm:$0xf]
    %v1511 = vld [vmem:[#allocation8 + $0x2c] sm:$0xf]
    %v1512 = vld [vmem:[#allocation8 + $0x30] sm:$0xf]
    %v1513 = vld [vmem:[#allocation8 + $0x34] sm:$0xf]
    %v1514 = vld [vmem:[#allocation8 + $0x38] sm:$0xf]
    %v1515 = vld [vmem:[#allocation8 + $0x3c] sm:$0xf]
    %v1516 = vld [vmem:[%s10] sm:$0x1]
    %v1518 = vperm.slane %v1516, 0
    %v1536 = vunpack.c.l.b16 %v1500
    %v1537 = vunpack.c.l.b16 %v1501
    %v1538 = vunpack.c.l.b16 %v1502
    %v1539 = vunpack.c.l.b16 %v1503
    %v1540 = vunpack.c.l.b16 %v1504
    %v1541 = vunpack.c.l.b16 %v1505
    %v1542 = vunpack.c.l.b16 %v1506
    %v1543 = vunpack.c.l.b16 %v1507
    %v1544 = vunpack.c.l.b16 %v1508
    %v1545 = vunpack.c.l.b16 %v1509
    %v1546 = vunpack.c.l.b16 %v1510
    %v1547 = vunpack.c.l.b16 %v1511
    %v1548 = vunpack.c.l.b16 %v1512
    %v1549 = vunpack.c.l.b16 %v1513
    %v1550 = vunpack.c.l.b16 %v1514
    %v1551 = vunpack.c.l.b16 %v1515
    %v1552 = vpack.c.b16 %v1537, %v1536
    %v1553 = vpack.c.b16 %v1539, %v1538
    %v1554 = vpack.c.b16 %v1541, %v1540
    %v1555 = vpack.c.b16 %v1543, %v1542
    %v1556 = vpack.c.b16 %v1545, %v1544
    %v1557 = vpack.c.b16 %v1547, %v1546
    %v1558 = vpack.c.b16 %v1549, %v1548
    %v1559 = vpack.c.b16 %v1551, %v1550
    %1568 = vmatpush.bf16.msra.mxu0 %v1559
    %1569 = vmatpush.bf16.msra.mxu0 %v1558
    %1570 = vmatpush.bf16.msra.mxu0 %v1557
    %1571 = vmatpush.bf16.msra.mxu0 %v1556
    %1572 = vmatpush.bf16.msra.mxu0 %v1555
    %1573 = vmatpush.bf16.msra.mxu0 %v1554
    %1574 = vmatpush.bf16.msra.mxu0 %v1553
    %1575 = vmatpush.bf16.msra.mxu0 %v1552
    %1576 = vmatmul.bf16.gmra.mxu0 %v1492
    %v1577 = vpop.f32.mrf.mxu0
    %v1578 = vadd.f32 %v1518, %v1577
    %v1579 = vpop.f32.mrf.mxu0
    %v1580 = vadd.f32 %v1518, %v1579
    %1581 = vmatmul.bf16.gmra.mxu0 %v1493
    %v1582 = vpop.f32.mrf.mxu0
    %v1583 = vadd.f32 %v1518, %v1582
    %v1584 = vpop.f32.mrf.mxu0
    %v1585 = vadd.f32 %v1518, %v1584
    %1586 = vmatmul.bf16.gmra.mxu0 %v1494
    %v1587 = vpop.f32.mrf.mxu0
    %v1588 = vadd.f32 %v1518, %v1587
    %v1589 = vpop.f32.mrf.mxu0
    %v1590 = vadd.f32 %v1518, %v1589
    %1591 = vmatmul.bf16.gmra.mxu0 %v1495
    %v1592 = vpop.f32.mrf.mxu0
    %v1593 = vadd.f32 %v1518, %v1592
    %v1594 = vpop.f32.mrf.mxu0
    %v1595 = vadd.f32 %v1518, %v1594
    %1596 = vmatmul.bf16.gmra.mxu0 %v1496
    %v1597 = vpop.f32.mrf.mxu0
    %v1598 = vadd.f32 %v1518, %v1597
    %v1599 = vpop.f32.mrf.mxu0
    %v1600 = vadd.f32 %v1518, %v1599
    %1601 = vmatmul.bf16.gmra.mxu0 %v1497
    %v1602 = vpop.f32.mrf.mxu0
    %v1603 = vadd.f32 %v1518, %v1602
    %v1604 = vpop.f32.mrf.mxu0
    %v1605 = vadd.f32 %v1518, %v1604
    %1606 = vmatmul.bf16.gmra.mxu0 %v1498
    %v1607 = vpop.f32.mrf.mxu0
    %v1608 = vadd.f32 %v1518, %v1607
    %v1609 = vpop.f32.mrf.mxu0
    %v1610 = vadd.f32 %v1518, %v1609
    %1611 = vmatmul.bf16.gmra.mxu0 %v1499
    %v1612 = vpop.f32.mrf.mxu0
    %v1613 = vadd.f32 %v1518, %v1612
    %v1614 = vpop.f32.mrf.mxu0
    %v1615 = vadd.f32 %v1518, %v1614
    %1616 = vdwg.mxu0
    %1617 = vst [vmem:[#allocation10] sm:$0xff] %v1578
    %1618 = vst [vmem:[#allocation10 + $0x8] sm:$0xff] %v1580
    %1619 = vst [vmem:[#allocation10 + $0x10] sm:$0xff] %v1583
    %1620 = vst [vmem:[#allocation10 + $0x18] sm:$0xff] %v1585
    %1621 = vst [vmem:[#allocation10 + $0x20] sm:$0xff] %v1588
    %1622 = vst [vmem:[#allocation10 + $0x28] sm:$0xff] %v1590
    %1623 = vst [vmem:[#allocation10 + $0x30] sm:$0xff] %v1593
    %1624 = vst [vmem:[#allocation10 + $0x38] sm:$0xff] %v1595
    %1625 = vst [vmem:[#allocation10 + $0x40] sm:$0xff] %v1598
    %1626 = vst [vmem:[#allocation10 + $0x48] sm:$0xff] %v1600
    %1627 = vst [vmem:[#allocation10 + $0x50] sm:$0xff] %v1603
    %1628 = vst [vmem:[#allocation10 + $0x58] sm:$0xff] %v1605
    %1629 = vst [vmem:[#allocation10 + $0x60] sm:$0xff] %v1608
    %1630 = vst [vmem:[#allocation10 + $0x68] sm:$0xff] %v1610
    %1631 = vst [vmem:[#allocation10 + $0x70] sm:$0xff] %v1613
    %1632 = vst [vmem:[#allocation10 + $0x78] sm:$0xff] %v1615
    // Predicated region
    $region62: #{tpu_custom_call.1} parent=1 // pred_check
      _
    $region63: #{tpu_custom_call.1} parent=1 // pred_check_branch
      %1634 = sbr.rel (0) target = $region65
    $region64: #{tpu_custom_call.1} parent=1 // pred_region
      %1636 = vsyncadd [#allocation4], 0
      %s1637 = sshll.u32 [#allocation10], 4
      %s1638 = int_to_ptr.vmem [resolvable:$true] %s1637
      %s1639 = sshll.u32 %s11, 4
      %s1640 = int_to_ptr.hbm [resolvable:$true] %s1639
      %1645 = dma.vmem_to_hbm [thread:$0]  %s1638, 2048, %s1640, [#allocation4], 128, 128, 8
    $region65: #{tpu_custom_call.1} parent=1 // pred_fallthru
      _
    // Predicated region
    $region66: #{tpu_custom_call.1} parent=1 // pred_check
      _
    $region67: #{tpu_custom_call.1} parent=1 // pred_check_branch
      %1647 = sbr.rel (0) target = $region69
    $region68: #{tpu_custom_call.1} parent=1 // pred_region
      %1649 = dma.done [#allocation4], 2048
    $region69: #{tpu_custom_call.1} parent=1 // pred_fallthru
      _
    %1650 = vsyncpa [#allocation3], 1
    %1651 = vsyncpa [#allocation6], 1
    %1652 = vsyncpa [#allocation9], 1
    %1653 = vsyncpa [#allocation4], 1

// kernel: tpu_custom_call.1
$region0: #{tpu_custom_call.1}
  #allocation0 [shape = 'u32[]', space=smem, size = 0x4, offset = 0x4, fixed_abs, tag = 'smem constant byte address 0x4 - core index']
  #allocation1 [shape = 'u32[72,128]{1,0:T(1,128)}', space=vmem, size = 0x9000, scoped, tag = 'internal scratch']
  %s0 = inlined_call_operand.hbm [shape: bf16[128,128], index: 0, kind: input, shape index: {}]
  %s1 = inlined_call_operand.hbm [shape: bf16[128,128], index: 1, kind: input, shape index: {}]
  %s2 = inlined_call_operand.vmem [shape: f32[1,128], index: 2, kind: input, shape index: {}]
  %s3 = inlined_call_operand.vmem [shape: f32[1,128], index: 3, kind: input, shape index: {}]
  %s4 = inlined_call_operand.vmem [shape: f32[1,128], index: 4, kind: input, shape index: {}]
  %s5 = inlined_call_operand.hbm [shape: bf16[128,128], index: 5, kind: input, shape index: {}]
  %s6 = inlined_call_operand.vmem [shape: f32[1,128], index: 6, kind: input, shape index: {}]
  %s7 = inlined_call_operand.vmem [shape: f32[1,128], index: 7, kind: input, shape index: {}]
  %s8 = inlined_call_operand.vmem [shape: f32[1,128], index: 8, kind: input, shape index: {}]
  %s9 = inlined_call_operand.hbm [shape: bf16[128,128], index: 9, kind: input, shape index: {}]
  %s10 = inlined_call_operand.vmem [shape: f32[1,128], index: 10, kind: input, shape index: {}]
  %s11 = inlined_call_operand.hbm [shape: f32[128,128], index: 11, kind: output, shape index: {}]
  %s12 = sld [smem:[#allocation0]]
  $region70: #{tpu_custom_call.1} parent=0
    _
  %s14 = ssub.s32 1, %s12
  %s15 = scalar_select 0, %s14, %s12
  $region1: #{tpu_custom_call.1} parent=0
    #allocation2 [shape = 'u8[32768]{0}', space=vmem, size = 0x8000, scoped, tag = 'input window, operand 0, single buffered']
    #allocation3 [shape = 's32[1]{0}', space=sflag, size = 0x4, scoped, tag = 'scoped memory for tpu_custom_call.1']
    #allocation4 [shape = 's32[1]{0}', space=sflag, size = 0x4, scoped, tag = 'scoped memory for tpu_custom_call.1']
    #allocation5 [shape = 'u8[32768]{0}', space=vmem, size = 0x8000, scoped, tag = 'input window, operand 1, single buffered']
    #allocation6 [shape = 's32[1]{0}', space=sflag, size = 0x4, scoped, tag = 'scoped memory for tpu_custom_call.1']
    #allocation7 [shape = 'u8[32768]{0}', space=vmem, size = 0x8000, scoped, tag = 'input window, operand 5, single buffered']
    #allocation8 [shape = 'u8[32768]{0}', space=vmem, size = 0x8000, scoped, tag = 'input window, operand 9, single buffered']
    #allocation9 [shape = 's32[1]{0}', space=sflag, size = 0x4, scoped, tag = 'scoped memory for tpu_custom_call.1']
    #allocation10 [shape = 'u8[65536]{0}', space=vmem, size = 0x10000, scoped, tag = 'output window, operand 0, single buffered']
    %16 = vsyncpa [#allocation3], 0
    %17 = vsyncpa [#allocation6], 0
    %18 = vsyncpa [#allocation9], 0
    %19 = vsyncpa [#allocation4], 0
    // Predicated region
    $region2: #{tpu_custom_call.1} parent=1 // pred_check
      _
    $region3: #{tpu_custom_call.1} parent=1 // pred_check_branch
      %21 = sbr.rel (0) target = $region5
    $region4: #{tpu_custom_call.1} parent=1 // pred_region
      %23 = vsyncadd [#allocation3], 0
      %s24 = sshll.u32 %s0, 4
      %s25 = int_to_ptr.hbm [resolvable:$true] %s24
      %s26 = sshll.u32 [#allocation2], 4
      %s27 = int_to_ptr.vmem [resolvable:$true] %s26
      %32 = dma.hbm_to_vmem [thread:$0]  %s25, 1024, %s27, [#allocation3], 64, 64, 4
    $region5: #{tpu_custom_call.1} parent=1 // pred_fallthru
      _
    // Predicated region
    $region6: #{tpu_custom_call.1} parent=1 // pred_check
      _
    $region7: #{tpu_custom_call.1} parent=1 // pred_check_branch
      %34 = sbr.rel (0) target = $region9
    $region8: #{tpu_custom_call.1} parent=1 // pred_region
      %36 = vsyncadd [#allocation6], 0
      %s37 = sshll.u32 %s1, 4
      %s38 = int_to_ptr.hbm [resolvable:$true] %s37
      %s39 = sshll.u32 [#allocation5], 4
      %s40 = int_to_ptr.vmem [resolvable:$true] %s39
      %45 = dma.hbm_to_vmem [thread:$0]  %s38, 1024, %s40, [#allocation6], 64, 64, 4
    $region9: #{tpu_custom_call.1} parent=1 // pred_fallthru
      _
    // Predicated region
    $region10: #{tpu_custom_call.1} parent=1 // pred_check
      _
    $region11: #{tpu_custom_call.1} parent=1 // pred_check_branch
      %47 = sbr.rel (0) target = $region13
    $region12: #{tpu_custom_call.1} parent=1 // pred_region
      _
    $region13: #{tpu_custom_call.1} parent=1 // pred_fallthru
      _
    // Predicated region
    $region14: #{tpu_custom_call.1} parent=1 // pred_check
      _
    $region15: #{tpu_custom_call.1} parent=1 // pred_check_branch
      %49 = sbr.rel (0) target = $region17
    $region16: #{tpu_custom_call.1} parent=1 // pred_region
      _
    $region17: #{tpu_custom_call.1} parent=1 // pred_fallthru
      _
    // Predicated region
    $region18: #{tpu_custom_call.1} parent=1 // pred_check
      _
    $region19: #{tpu_custom_call.1} parent=1 // pred_check_branch
      %51 = sbr.rel (0) target = $region21
    $region20: #{tpu_custom_call.1} parent=1 // pred_region
      _
    $region21: #{tpu_custom_call.1} parent=1 // pred_fallthru
      _
    // Predicated region
    $region22: #{tpu_custom_call.1} parent=1 // pred_check
      _
    $region23: #{tpu_custom_call.1} parent=1 // pred_check_branch
      %53 = sbr.rel (0) target = $region25
    $region24: #{tpu_custom_call.1} parent=1 // pred_region
      %55 = vsyncadd [#allocation6], 0
      %s56 = sshll.u32 %s5, 4
      %s57 = int_to_ptr.hbm [resolvable:$true] %s56
      %s58 = sshll.u32 [#allocation7], 4
      %s59 = int_to_ptr.vmem [resolvable:$true] %s58
      %64 = dma.hbm_to_vmem [thread:$0]  %s57, 1024, %s59, [#allocation6], 64, 64, 4
    $region25: #{tpu_custom_call.1} parent=1 // pred_fallthru
      _
    // Predicated region
    $region26: #{tpu_custom_call.1} parent=1 // pred_check
      _
    $region27: #{tpu_custom_call.1} parent=1 // pred_check_branch
      %66 = sbr.rel (0) target = $region29
    $region28: #{tpu_custom_call.1} parent=1 // pred_region
      _
    $region29: #{tpu_custom_call.1} parent=1 // pred_fallthru
      _
    // Predicated region
    $region30: #{tpu_custom_call.1} parent=1 // pred_check
      _
    $region31: #{tpu_custom_call.1} parent=1 // pred_check_branch
      %68 = sbr.rel (0) target = $region33
    $region32: #{tpu_custom_call.1} parent=1 // pred_region
      _
    $region33: #{tpu_custom_call.1} parent=1 // pred_fallthru
      _
    // Predicated region
    $region34: #{tpu_custom_call.1} parent=1 // pred_check
      _
    $region35: #{tpu_custom_call.1} parent=1 // pred_check_branch
      %70 = sbr.rel (0) target = $region37
    $region36: #{tpu_custom_call.1} parent=1 // pred_region
      _
    $region37: #{tpu_custom_call.1} parent=1 // pred_fallthru
      _
    // Predicated region
    $region38: #{tpu_custom_call.1} parent=1 // pred_check
      _
    $region39: #{tpu_custom_call.1} parent=1 // pred_check_branch
      %72 = sbr.rel (0) target = $region41
    $region40: #{tpu_custom_call.1} parent=1 // pred_region
      %74 = vsyncadd [#allocation9], 0
      %s75 = sshll.u32 %s9, 4
      %s76 = int_to_ptr.hbm [resolvable:$true] %s75
      %s77 = sshll.u32 [#allocation8], 4
      %s78 = int_to_ptr.vmem [resolvable:$true] %s77
      %83 = dma.hbm_to_vmem [thread:$0]  %s76, 1024, %s78, [#allocation9], 64, 64, 4
    $region41: #{tpu_custom_call.1} parent=1 // pred_fallthru
      _
    // Predicated region
    $region42: #{tpu_custom_call.1} parent=1 // pred_check
      _
    $region43: #{tpu_custom_call.1} parent=1 // pred_check_branch
      %85 = sbr.rel (0) target = $region45
    $region44: #{tpu_custom_call.1} parent=1 // pred_region
      _
    $region45: #{tpu_custom_call.1} parent=1 // pred_fallthru
      _
    // Predicated region
    $region46: #{tpu_custom_call.1} parent=1 // pred_check
      _
    $region47: #{tpu_custom_call.1} parent=1 // pred_check_branch
      %87 = sbr.rel (0) target = $region49
    $region48: #{tpu_custom_call.1} parent=1 // pred_region
      %89 = dma.done [#allocation3], 1024
    $region49: #{tpu_custom_call.1} parent=1 // pred_fallthru
      _
    // Predicated region
    $region50: #{tpu_custom_call.1} parent=1 // pred_check
      _
    $region51: #{tpu_custom_call.1} parent=1 // pred_check_branch
      %91 = sbr.rel (0) target = $region53
    $region52: #{tpu_custom_call.1} parent=1 // pred_region
      %93 = dma.done [#allocation6], 1024
    $region53: #{tpu_custom_call.1} parent=1 // pred_fallthru
      _
    // Predicated region
    $region54: #{tpu_custom_call.1} parent=1 // pred_check
      _
    $region55: #{tpu_custom_call.1} parent=1 // pred_check_branch
      %95 = sbr.rel (0) target = $region57
    $region56: #{tpu_custom_call.1} parent=1 // pred_region
      %97 = dma.done [#allocation6], 1024
    $region57: #{tpu_custom_call.1} parent=1 // pred_fallthru
      _
    // Predicated region
    $region58: #{tpu_custom_call.1} parent=1 // pred_check
      _
    $region59: #{tpu_custom_call.1} parent=1 // pred_check_branch
      %99 = sbr.rel (0) target = $region61
    $region60: #{tpu_custom_call.1} parent=1 // pred_region
      %101 = dma.done [#allocation9], 1024
    $region61: #{tpu_custom_call.1} parent=1 // pred_fallthru
      _
    %v102 = vld [vmem:[#allocation2] sm:$0xf]
    %v103 = vld [vmem:[#allocation2 + $0x4] sm:$0xf]
    %v104 = vld [vmem:[#allocation2 + $0x8] sm:$0xf]
    %v105 = vld [vmem:[#allocation2 + $0xc] sm:$0xf]
    %v106 = vld [vmem:[#allocation2 + $0x10] sm:$0xf]
    %v107 = vld [vmem:[#allocation2 + $0x14] sm:$0xf]
    %v108 = vld [vmem:[#allocation2 + $0x18] sm:$0xf]
    %v109 = vld [vmem:[#allocation2 + $0x1c] sm:$0xf]
    %v110 = vld [vmem:[#allocation2 + $0x20] sm:$0xf]
    %v111 = vld [vmem:[#allocation2 + $0x24] sm:$0xf]
    %v112 = vld [vmem:[#allocation2 + $0x28] sm:$0xf]
    %v113 = vld [vmem:[#allocation2 + $0x2c] sm:$0xf]
    %v114 = vld [vmem:[#allocation2 + $0x30] sm:$0xf]
    %v115 = vld [vmem:[#allocation2 + $0x34] sm:$0xf]
    %v116 = vld [vmem:[#allocation2 + $0x38] sm:$0xf]
    %v117 = vld [vmem:[#allocation2 + $0x3c] sm:$0xf]
    %v118 = vld [vmem:[#allocation5] sm:$0xf]
    %v119 = vld [vmem:[#allocation5 + $0x4] sm:$0xf]
    %v120 = vld [vmem:[#allocation5 + $0x8] sm:$0xf]
    %v121 = vld [vmem:[#allocation5 + $0xc] sm:$0xf]
    %v122 = vld [vmem:[#allocation5 + $0x10] sm:$0xf]
    %v123 = vld [vmem:[#allocation5 + $0x14] sm:$0xf]
    %v124 = vld [vmem:[#allocation5 + $0x18] sm:$0xf]
    %v125 = vld [vmem:[#allocation5 + $0x1c] sm:$0xf]
    %v126 = vld [vmem:[#allocation5 + $0x20] sm:$0xf]
    %v127 = vld [vmem:[#allocation5 + $0x24] sm:$0xf]
    %v128 = vld [vmem:[#allocation5 + $0x28] sm:$0xf]
    %v129 = vld [vmem:[#allocation5 + $0x2c] sm:$0xf]
    %v130 = vld [vmem:[#allocation5 + $0x30] sm:$0xf]
    %v131 = vld [vmem:[#allocation5 + $0x34] sm:$0xf]
    %v132 = vld [vmem:[#allocation5 + $0x38] sm:$0xf]
    %v133 = vld [vmem:[#allocation5 + $0x3c] sm:$0xf]
    %v134 = vld [vmem:[%s2] sm:$0x1]
    %v136 = vperm.slane %v134, 0
    %v154 = vunpack.c.l.b16 %v102
    %v155 = vunpack.c.l.b16 %v103
    %v156 = vunpack.c.l.b16 %v104
    %v157 = vunpack.c.l.b16 %v105
    %v158 = vunpack.c.l.b16 %v106
    %v159 = vunpack.c.l.b16 %v107
    %v160 = vunpack.c.l.b16 %v108
    %v161 = vunpack.c.l.b16 %v109
    %v162 = vunpack.c.l.b16 %v110
    %v163 = vunpack.c.l.b16 %v111
    %v164 = vunpack.c.l.b16 %v112
    %v165 = vunpack.c.l.b16 %v113
    %v166 = vunpack.c.l.b16 %v114
    %v167 = vunpack.c.l.b16 %v115
    %v168 = vunpack.c.l.b16 %v116
    %v169 = vunpack.c.l.b16 %v117
    %v170 = vpack.c.b16 %v155, %v154
    %v171 = vpack.c.b16 %v157, %v156
    %v172 = vpack.c.b16 %v159, %v158
    %v173 = vpack.c.b16 %v161, %v160
    %v174 = vpack.c.b16 %v163, %v162
    %v175 = vpack.c.b16 %v165, %v164
    %v176 = vpack.c.b16 %v167, %v166
    %v177 = vpack.c.b16 %v169, %v168
    %v202 = vunpack.c.l.b16 %v118
    %v203 = vunpack.c.l.b16 %v119
    %v204 = vunpack.c.l.b16 %v120
    %v205 = vunpack.c.l.b16 %v121
    %v206 = vunpack.c.l.b16 %v122
    %v207 = vunpack.c.l.b16 %v123
    %v208 = vunpack.c.l.b16 %v124
    %v209 = vunpack.c.l.b16 %v125
    %v210 = vunpack.c.l.b16 %v126
    %v211 = vunpack.c.l.b16 %v127
    %v212 = vunpack.c.l.b16 %v128
    %v213 = vunpack.c.l.b16 %v129
    %v214 = vunpack.c.l.b16 %v130
    %v215 = vunpack.c.l.b16 %v131
    %v216 = vunpack.c.l.b16 %v132
    %v217 = vunpack.c.l.b16 %v133
    %v218 = vpack.c.b16 %v203, %v202
    %v219 = vpack.c.b16 %v205, %v204
    %v220 = vpack.c.b16 %v207, %v206
    %v221 = vpack.c.b16 %v209, %v208
    %v222 = vpack.c.b16 %v211, %v210
    %v223 = vpack.c.b16 %v213, %v212
    %v224 = vpack.c.b16 %v215, %v214
    %v225 = vpack.c.b16 %v217, %v216
    %234 = vmatpush.bf16.msra.mxu0 %v225
    %235 = vmatpush.bf16.msra.mxu0 %v224
    %236 = vmatpush.bf16.msra.mxu0 %v223
    %237 = vmatpush.bf16.msra.mxu0 %v222
    %238 = vmatpush.bf16.msra.mxu0 %v221
    %239 = vmatpush.bf16.msra.mxu0 %v220
    %240 = vmatpush.bf16.msra.mxu0 %v219
    %241 = vmatpush.bf16.msra.mxu0 %v218
    %242 = vmatmul.bf16.gmra.mxu0 %v170
    %v243 = vpop.f32.mrf.mxu0
    %v244 = vadd.f32 %v136, %v243
    %v245 = vpop.f32.mrf.mxu0
    %v246 = vadd.f32 %v136, %v245
    %247 = vmatmul.bf16.gmra.mxu0 %v171
    %v248 = vpop.f32.mrf.mxu0
    %v249 = vadd.f32 %v136, %v248
    %v250 = vpop.f32.mrf.mxu0
    %v251 = vadd.f32 %v136, %v250
    %252 = vmatmul.bf16.gmra.mxu0 %v172
    %v253 = vpop.f32.mrf.mxu0
    %v254 = vadd.f32 %v136, %v253
    %v255 = vpop.f32.mrf.mxu0
    %v256 = vadd.f32 %v136, %v255
    %257 = vmatmul.bf16.gmra.mxu0 %v173
    %v258 = vpop.f32.mrf.mxu0
    %v259 = vadd.f32 %v136, %v258
    %v260 = vpop.f32.mrf.mxu0
    %v261 = vadd.f32 %v136, %v260
    %262 = vmatmul.bf16.gmra.mxu0 %v174
    %v263 = vpop.f32.mrf.mxu0
    %v264 = vadd.f32 %v136, %v263
    %v265 = vpop.f32.mrf.mxu0
    %v266 = vadd.f32 %v136, %v265
    %267 = vmatmul.bf16.gmra.mxu0 %v175
    %v268 = vpop.f32.mrf.mxu0
    %v269 = vadd.f32 %v136, %v268
    %v270 = vpop.f32.mrf.mxu0
    %v271 = vadd.f32 %v136, %v270
    %272 = vmatmul.bf16.gmra.mxu0 %v176
    %v273 = vpop.f32.mrf.mxu0
    %v274 = vadd.f32 %v136, %v273
    %v275 = vpop.f32.mrf.mxu0
    %v276 = vadd.f32 %v136, %v275
    %277 = vmatmul.bf16.gmra.mxu0 %v177
    %v278 = vpop.f32.mrf.mxu0
    %v279 = vadd.f32 %v136, %v278
    %v280 = vpop.f32.mrf.mxu0
    %v281 = vadd.f32 %v136, %v280
    %282 = vdwg.mxu0
    %283 = vadd.xlane.f32.xlu0 %v244
    %v284 = vpop.xlane.xlu0 %283
    %285 = vadd.xlane.f32.xlu0 %v246
    %v286 = vpop.xlane.xlu0 %285
    %287 = vadd.xlane.f32.xlu0 %v249
    %v288 = vpop.xlane.xlu0 %287
    %289 = vadd.xlane.f32.xlu0 %v251
    %v290 = vpop.xlane.xlu0 %289
    %291 = vadd.xlane.f32.xlu0 %v254
    %v292 = vpop.xlane.xlu0 %291
    %293 = vadd.xlane.f32.xlu0 %v256
    %v294 = vpop.xlane.xlu0 %293
    %295 = vadd.xlane.f32.xlu0 %v259
    %v296 = vpop.xlane.xlu0 %295
    %297 = vadd.xlane.f32.xlu0 %v261
    %v298 = vpop.xlane.xlu0 %297
    %299 = vadd.xlane.f32.xlu0 %v264
    %v300 = vpop.xlane.xlu0 %299
    %301 = vadd.xlane.f32.xlu0 %v266
    %v302 = vpop.xlane.xlu0 %301
    %303 = vadd.xlane.f32.xlu0 %v269
    %v304 = vpop.xlane.xlu0 %303
    %305 = vadd.xlane.f32.xlu0 %v271
    %v306 = vpop.xlane.xlu0 %305
    %307 = vadd.xlane.f32.xlu0 %v274
    %v308 = vpop.xlane.xlu0 %307
    %309 = vadd.xlane.f32.xlu0 %v276
    %v310 = vpop.xlane.xlu0 %309
    %311 = vadd.xlane.f32.xlu0 %v279
    %v312 = vpop.xlane.xlu0 %311
    %313 = vadd.xlane.f32.xlu0 %v281
    %v314 = vpop.xlane.xlu0 %313
    %v315 = vmul.f32 %v284, 0.03125
    %v316 = vmul.f32 %v286, 0.03125
    %v317 = vmul.f32 %v288, 0.03125
    %v318 = vmul.f32 %v290, 0.03125
    %v319 = vmul.f32 %v292, 0.03125
    %v320 = vmul.f32 %v294, 0.03125
    %v321 = vmul.f32 %v296, 0.03125
    %v322 = vmul.f32 %v298, 0.03125
    %v323 = vmul.f32 %v300, 0.03125
    %v324 = vmul.f32 %v302, 0.03125
    %v325 = vmul.f32 %v304, 0.03125
    %v326 = vmul.f32 %v306, 0.03125
    %v327 = vmul.f32 %v308, 0.03125
    %v328 = vmul.f32 %v310, 0.03125
    %v329 = vmul.f32 %v312, 0.03125
    %v330 = vmul.f32 %v314, 0.03125
    %v331 = vsub.f32 %v244, %v315
    %v332 = vsub.f32 %v246, %v316
    %v333 = vsub.f32 %v249, %v317
    %v334 = vsub.f32 %v251, %v318
    %v335 = vsub.f32 %v254, %v319
    %v336 = vsub.f32 %v256, %v320
    %v337 = vsub.f32 %v259, %v321
    %v338 = vsub.f32 %v261, %v322
    %v339 = vsub.f32 %v264, %v323
    %v340 = vsub.f32 %v266, %v324
    %v341 = vsub.f32 %v269, %v325
    %v342 = vsub.f32 %v271, %v326
    %v343 = vsub.f32 %v274, %v327
    %v344 = vsub.f32 %v276, %v328
    %v345 = vsub.f32 %v279, %v329
    %v346 = vsub.f32 %v281, %v330
    %v347 = vmul.f32 %v331, %v331
    %v348 = vmul.f32 %v332, %v332
    %v349 = vmul.f32 %v333, %v333
    %v350 = vmul.f32 %v334, %v334
    %v351 = vmul.f32 %v335, %v335
    %v352 = vmul.f32 %v336, %v336
    %v353 = vmul.f32 %v337, %v337
    %v354 = vmul.f32 %v338, %v338
    %v355 = vmul.f32 %v339, %v339
    %v356 = vmul.f32 %v340, %v340
    %v357 = vmul.f32 %v341, %v341
    %v358 = vmul.f32 %v342, %v342
    %v359 = vmul.f32 %v343, %v343
    %v360 = vmul.f32 %v344, %v344
    %v361 = vmul.f32 %v345, %v345
    %v362 = vmul.f32 %v346, %v346
    %363 = vadd.xlane.f32.xlu0 %v347
    %v364 = vpop.xlane.xlu0 %363
    %365 = vadd.xlane.f32.xlu0 %v348
    %v366 = vpop.xlane.xlu0 %365
    %367 = vadd.xlane.f32.xlu0 %v349
    %v368 = vpop.xlane.xlu0 %367
    %369 = vadd.xlane.f32.xlu0 %v350
    %v370 = vpop.xlane.xlu0 %369
    %371 = vadd.xlane.f32.xlu0 %v351
    %v372 = vpop.xlane.xlu0 %371
    %373 = vadd.xlane.f32.xlu0 %v352
    %v374 = vpop.xlane.xlu0 %373
    %375 = vadd.xlane.f32.xlu0 %v353
    %v376 = vpop.xlane.xlu0 %375
    %377 = vadd.xlane.f32.xlu0 %v354
    %v378 = vpop.xlane.xlu0 %377
    %379 = vadd.xlane.f32.xlu0 %v355
    %v380 = vpop.xlane.xlu0 %379
    %381 = vadd.xlane.f32.xlu0 %v356
    %v382 = vpop.xlane.xlu0 %381
    %383 = vadd.xlane.f32.xlu0 %v357
    %v384 = vpop.xlane.xlu0 %383
    %385 = vadd.xlane.f32.xlu0 %v358
    %v386 = vpop.xlane.xlu0 %385
    %387 = vadd.xlane.f32.xlu0 %v359
    %v388 = vpop.xlane.xlu0 %387
    %389 = vadd.xlane.f32.xlu0 %v360
    %v390 = vpop.xlane.xlu0 %389
    %391 = vadd.xlane.f32.xlu0 %v361
    %v392 = vpop.xlane.xlu0 %391
    %393 = vadd.xlane.f32.xlu0 %v362
    %v394 = vpop.xlane.xlu0 %393
    %v395 = vmul.f32 %v315, %v315
    %v396 = vmul.f32 %v316, %v316
    %v397 = vmul.f32 %v317, %v317
    %v398 = vmul.f32 %v318, %v318
    %v399 = vmul.f32 %v319, %v319
    %v400 = vmul.f32 %v320, %v320
    %v401 = vmul.f32 %v321, %v321
    %v402 = vmul.f32 %v322, %v322
    %v403 = vmul.f32 %v323, %v323
    %v404 = vmul.f32 %v324, %v324
    %v405 = vmul.f32 %v325, %v325
    %v406 = vmul.f32 %v326, %v326
    %v407 = vmul.f32 %v327, %v327
    %v408 = vmul.f32 %v328, %v328
    %v409 = vmul.f32 %v329, %v329
    %v410 = vmul.f32 %v330, %v330
    %v411 = vmul.f32 %v395, 96.0
    %v412 = vmul.f32 %v396, 96.0
    %v413 = vmul.f32 %v397, 96.0
    %v414 = vmul.f32 %v398, 96.0
    %v415 = vmul.f32 %v399, 96.0
    %v416 = vmul.f32 %v400, 96.0
    %v417 = vmul.f32 %v401, 96.0
    %v418 = vmul.f32 %v402, 96.0
    %v419 = vmul.f32 %v403, 96.0
    %v420 = vmul.f32 %v404, 96.0
    %v421 = vmul.f32 %v405, 96.0
    %v422 = vmul.f32 %v406, 96.0
    %v423 = vmul.f32 %v407, 96.0
    %v424 = vmul.f32 %v408, 96.0
    %v425 = vmul.f32 %v409, 96.0
    %v426 = vmul.f32 %v410, 96.0
    %v427 = vsub.f32 %v364, %v411
    %v428 = vsub.f32 %v366, %v412
    %v429 = vsub.f32 %v368, %v413
    %v430 = vsub.f32 %v370, %v414
    %v431 = vsub.f32 %v372, %v415
    %v432 = vsub.f32 %v374, %v416
    %v433 = vsub.f32 %v376, %v417
    %v434 = vsub.f32 %v378, %v418
    %v435 = vsub.f32 %v380, %v419
    %v436 = vsub.f32 %v382, %v420
    %v437 = vsub.f32 %v384, %v421
    %v438 = vsub.f32 %v386, %v422
    %v439 = vsub.f32 %v388, %v423
    %v440 = vsub.f32 %v390, %v424
    %v441 = vsub.f32 %v392, %v425
    %v442 = vsub.f32 %v394, %v426
    %v443 = vmul.f32 %v427, 0.03125
    %v444 = vmul.f32 %v428, 0.03125
    %v445 = vmul.f32 %v429, 0.03125
    %v446 = vmul.f32 %v430, 0.03125
    %v447 = vmul.f32 %v431, 0.03125
    %v448 = vmul.f32 %v432, 0.03125
    %v449 = vmul.f32 %v433, 0.03125
    %v450 = vmul.f32 %v434, 0.03125
    %v451 = vmul.f32 %v435, 0.03125
    %v452 = vmul.f32 %v436, 0.03125
    %v453 = vmul.f32 %v437, 0.03125
    %v454 = vmul.f32 %v438, 0.03125
    %v455 = vmul.f32 %v439, 0.03125
    %v456 = vmul.f32 %v440, 0.03125
    %v457 = vmul.f32 %v441, 0.03125
    %v458 = vmul.f32 %v442, 0.03125
    %v459 = vmax.f32 %v443, 0.0
    %v460 = vmax.f32 %v444, 0.0
    %v461 = vmax.f32 %v445, 0.0
    %v462 = vmax.f32 %v446, 0.0
    %v463 = vmax.f32 %v447, 0.0
    %v464 = vmax.f32 %v448, 0.0
    %v465 = vmax.f32 %v449, 0.0
    %v466 = vmax.f32 %v450, 0.0
    %v467 = vmax.f32 %v451, 0.0
    %v468 = vmax.f32 %v452, 0.0
    %v469 = vmax.f32 %v453, 0.0
    %v470 = vmax.f32 %v454, 0.0
    %v471 = vmax.f32 %v455, 0.0
    %v472 = vmax.f32 %v456, 0.0
    %v473 = vmax.f32 %v457, 0.0
    %v474 = vmax.f32 %v458, 0.0
    %v475 = vadd.f32 %v459, 1e-05
    %v476 = vadd.f32 %v460, 1e-05
    %v477 = vadd.f32 %v461, 1e-05
    %v478 = vadd.f32 %v462, 1e-05
    %v479 = vadd.f32 %v463, 1e-05
    %v480 = vadd.f32 %v464, 1e-05
    %v481 = vadd.f32 %v465, 1e-05
    %v482 = vadd.f32 %v466, 1e-05
    %v483 = vadd.f32 %v467, 1e-05
    %v484 = vadd.f32 %v468, 1e-05
    %v485 = vadd.f32 %v469, 1e-05
    %v486 = vadd.f32 %v470, 1e-05
    %v487 = vadd.f32 %v471, 1e-05
    %v488 = vadd.f32 %v472, 1e-05
    %v489 = vadd.f32 %v473, 1e-05
    %v490 = vadd.f32 %v474, 1e-05
    %v491 = vrsqrt.pop %v475
    %v492 = vmul.f32 %v491, %v475
    %v493 = vmul.f32 %v492, %v491
    %v494 = vmul.f32 0.5, %v493
    %v495 = vsub.f32 1.5, %v494
    %v496 = vmul.f32 %v491, %v495
    %vm497 = vweird.f32 %v475
    %vm498 = vweird.f32 %v491
    %vm499 = vmor %vm497, %vm498
    %v500 = vsel %vm499, %v491, %v496
    %v501 = vrsqrt.pop %v476
    %v502 = vmul.f32 %v501, %v476
    %v503 = vmul.f32 %v502, %v501
    %v504 = vmul.f32 0.5, %v503
    %v505 = vsub.f32 1.5, %v504
    %v506 = vmul.f32 %v501, %v505
    %vm507 = vweird.f32 %v476
    %vm508 = vweird.f32 %v501
    %vm509 = vmor %vm507, %vm508
    %v510 = vsel %vm509, %v501, %v506
    %v511 = vrsqrt.pop %v477
    %v512 = vmul.f32 %v511, %v477
    %v513 = vmul.f32 %v512, %v511
    %v514 = vmul.f32 0.5, %v513
    %v515 = vsub.f32 1.5, %v514
    %v516 = vmul.f32 %v511, %v515
    %vm517 = vweird.f32 %v477
    %vm518 = vweird.f32 %v511
    %vm519 = vmor %vm517, %vm518
    %v520 = vsel %vm519, %v511, %v516
    %v521 = vrsqrt.pop %v478
    %v522 = vmul.f32 %v521, %v478
    %v523 = vmul.f32 %v522, %v521
    %v524 = vmul.f32 0.5, %v523
    %v525 = vsub.f32 1.5, %v524
    %v526 = vmul.f32 %v521, %v525
    %vm527 = vweird.f32 %v478
    %vm528 = vweird.f32 %v521
    %vm529 = vmor %vm527, %vm528
    %v530 = vsel %vm529, %v521, %v526
    %v531 = vrsqrt.pop %v479
    %v532 = vmul.f32 %v531, %v479
    %v533 = vmul.f32 %v532, %v531
    %v534 = vmul.f32 0.5, %v533
    %v535 = vsub.f32 1.5, %v534
    %v536 = vmul.f32 %v531, %v535
    %vm537 = vweird.f32 %v479
    %vm538 = vweird.f32 %v531
    %vm539 = vmor %vm537, %vm538
    %v540 = vsel %vm539, %v531, %v536
    %v541 = vrsqrt.pop %v480
    %v542 = vmul.f32 %v541, %v480
    %v543 = vmul.f32 %v542, %v541
    %v544 = vmul.f32 0.5, %v543
    %v545 = vsub.f32 1.5, %v544
    %v546 = vmul.f32 %v541, %v545
    %vm547 = vweird.f32 %v480
    %vm548 = vweird.f32 %v541
    %vm549 = vmor %vm547, %vm548
    %v550 = vsel %vm549, %v541, %v546
    %v551 = vrsqrt.pop %v481
    %v552 = vmul.f32 %v551, %v481
    %v553 = vmul.f32 %v552, %v551
    %v554 = vmul.f32 0.5, %v553
    %v555 = vsub.f32 1.5, %v554
    %v556 = vmul.f32 %v551, %v555
    %vm557 = vweird.f32 %v481
    %vm558 = vweird.f32 %v551
    %vm559 = vmor %vm557, %vm558
    %v560 = vsel %vm559, %v551, %v556
    %v561 = vrsqrt.pop %v482
    %v562 = vmul.f32 %v561, %v482
    %v563 = vmul.f32 %v562, %v561
    %v564 = vmul.f32 0.5, %v563
    %v565 = vsub.f32 1.5, %v564
    %v566 = vmul.f32 %v561, %v565
    %vm567 = vweird.f32 %v482
    %vm568 = vweird.f32 %v561
    %vm569 = vmor %vm567, %vm568
    %v570 = vsel %vm569, %v561, %v566
    %v571 = vrsqrt.pop %v483
    %v572 = vmul.f32 %v571, %v483
    %v573 = vmul.f32 %v572, %v571
    %v574 = vmul.f32 0.5, %v573
    %v575 = vsub.f32 1.5, %v574
    %v576 = vmul.f32 %v571, %v575
    %vm577 = vweird.f32 %v483
    %vm578 = vweird.f32 %v571
    %vm579 = vmor %vm577, %vm578
    %v580 = vsel %vm579, %v571, %v576
    %v581 = vrsqrt.pop %v484
    %v582 = vmul.f32 %v581, %v484
    %v583 = vmul.f32 %v582, %v581
    %v584 = vmul.f32 0.5, %v583
    %v585 = vsub.f32 1.5, %v584
    %v586 = vmul.f32 %v581, %v585
    %vm587 = vweird.f32 %v484
    %vm588 = vweird.f32 %v581
    %vm589 = vmor %vm587, %vm588
    %v590 = vsel %vm589, %v581, %v586
    %v591 = vrsqrt.pop %v485
    %v592 = vmul.f32 %v591, %v485
    %v593 = vmul.f32 %v592, %v591
    %v594 = vmul.f32 0.5, %v593
    %v595 = vsub.f32 1.5, %v594
    %v596 = vmul.f32 %v591, %v595
    %vm597 = vweird.f32 %v485
    %vm598 = vweird.f32 %v591
    %vm599 = vmor %vm597, %vm598
    %v600 = vsel %vm599, %v591, %v596
    %v601 = vrsqrt.pop %v486
    %v602 = vmul.f32 %v601, %v486
    %v603 = vmul.f32 %v602, %v601
    %v604 = vmul.f32 0.5, %v603
    %v605 = vsub.f32 1.5, %v604
    %v606 = vmul.f32 %v601, %v605
    %vm607 = vweird.f32 %v486
    %vm608 = vweird.f32 %v601
    %vm609 = vmor %vm607, %vm608
    %v610 = vsel %vm609, %v601, %v606
    %v611 = vrsqrt.pop %v487
    %v612 = vmul.f32 %v611, %v487
    %v613 = vmul.f32 %v612, %v611
    %v614 = vmul.f32 0.5, %v613
    %v615 = vsub.f32 1.5, %v614
    %v616 = vmul.f32 %v611, %v615
    %vm617 = vweird.f32 %v487
    %vm618 = vweird.f32 %v611
    %vm619 = vmor %vm617, %vm618
    %v620 = vsel %vm619, %v611, %v616
    %v621 = vrsqrt.pop %v488
    %v622 = vmul.f32 %v621, %v488
    %v623 = vmul.f32 %v622, %v621
    %v624 = vmul.f32 0.5, %v623
    %v625 = vsub.f32 1.5, %v624
    %v626 = vmul.f32 %v621, %v625
    %vm627 = vweird.f32 %v488
    %vm628 = vweird.f32 %v621
    %vm629 = vmor %vm627, %vm628
    %v630 = vsel %vm629, %v621, %v626
    %v631 = vrsqrt.pop %v489
    %v632 = vmul.f32 %v631, %v489
    %v633 = vmul.f32 %v632, %v631
    %v634 = vmul.f32 0.5, %v633
    %v635 = vsub.f32 1.5, %v634
    %v636 = vmul.f32 %v631, %v635
    %vm637 = vweird.f32 %v489
    %vm638 = vweird.f32 %v631
    %vm639 = vmor %vm637, %vm638
    %v640 = vsel %vm639, %v631, %v636
    %v641 = vrsqrt.pop %v490
    %v642 = vmul.f32 %v641, %v490
    %v643 = vmul.f32 %v642, %v641
    %v644 = vmul.f32 0.5, %v643
    %v645 = vsub.f32 1.5, %v644
    %v646 = vmul.f32 %v641, %v645
    %vm647 = vweird.f32 %v490
    %vm648 = vweird.f32 %v641
    %vm649 = vmor %vm647, %vm648
    %v650 = vsel %vm649, %v641, %v646
    %v651 = vmul.f32 %v331, %v500
    %v652 = vmul.f32 %v332, %v510
    %v653 = vmul.f32 %v333, %v520
    %v654 = vmul.f32 %v334, %v530
    %v655 = vmul.f32 %v335, %v540
    %v656 = vmul.f32 %v336, %v550
    %v657 = vmul.f32 %v337, %v560
    %v658 = vmul.f32 %v338, %v570
    %v659 = vmul.f32 %v339, %v580
    %v660 = vmul.f32 %v340, %v590
    %v661 = vmul.f32 %v341, %v600
    %v662 = vmul.f32 %v342, %v610
    %v663 = vmul.f32 %v343, %v620
    %v664 = vmul.f32 %v344, %v630
    %v665 = vmul.f32 %v345, %v640
    %v666 = vmul.f32 %v346, %v650
    %v667 = vld [vmem:[%s3] sm:$0x1]
    %v668 = vld [vmem:[%s4] sm:$0x1]
    %v669 = vpack.c.bf16 %v651, %v651
    %v670 = vpack.c.bf16 %v652, %v652
    %v671 = vpack.c.bf16 %v653, %v653
    %v672 = vpack.c.bf16 %v654, %v654
    %v673 = vpack.c.bf16 %v655, %v655
    %v674 = vpack.c.bf16 %v656, %v656
    %v675 = vpack.c.bf16 %v657, %v657
    %v676 = vpack.c.bf16 %v658, %v658
    %v677 = vpack.c.bf16 %v659, %v659
    %v678 = vpack.c.bf16 %v660, %v660
    %v679 = vpack.c.bf16 %v661, %v661
    %v680 = vpack.c.bf16 %v662, %v662
    %v681 = vpack.c.bf16 %v663, %v663
    %v682 = vpack.c.bf16 %v664, %v664
    %v683 = vpack.c.bf16 %v665, %v665
    %v684 = vpack.c.bf16 %v666, %v666
    %v685 = vpack.c.bf16 %v667, %v667
    %v686 = vpack.c.bf16 %v668, %v668
    %v688 = vpack.i.b16 %v685, %v685
    %v690 = vperm.slane %v688, 0
    %v691 = vunpack.c.l.bf16 %v669
    %v692 = vunpack.c.l.bf16 %v670
    %v693 = vunpack.c.l.bf16 %v671
    %v694 = vunpack.c.l.bf16 %v672
    %v695 = vunpack.c.l.bf16 %v673
    %v696 = vunpack.c.l.bf16 %v674
    %v697 = vunpack.c.l.bf16 %v675
    %v698 = vunpack.c.l.bf16 %v676
    %v699 = vunpack.c.l.bf16 %v677
    %v700 = vunpack.c.l.bf16 %v678
    %v701 = vunpack.c.l.bf16 %v679
    %v702 = vunpack.c.l.bf16 %v680
    %v703 = vunpack.c.l.bf16 %v681
    %v704 = vunpack.c.l.bf16 %v682
    %v705 = vunpack.c.l.bf16 %v683
    %v706 = vunpack.c.l.bf16 %v684
    %v707 = vunpack.c.l.bf16 %v690
    %v708 = vmul.f32 %v691, %v707
    %v709 = vmul.f32 %v692, %v707
    %v710 = vmul.f32 %v693, %v707
    %v711 = vmul.f32 %v694, %v707
    %v712 = vmul.f32 %v695, %v707
    %v713 = vmul.f32 %v696, %v707
    %v714 = vmul.f32 %v697, %v707
    %v715 = vmul.f32 %v698, %v707
    %v716 = vmul.f32 %v699, %v707
    %v717 = vmul.f32 %v700, %v707
    %v718 = vmul.f32 %v701, %v707
    %v719 = vmul.f32 %v702, %v707
    %v720 = vmul.f32 %v703, %v707
    %v721 = vmul.f32 %v704, %v707
    %v722 = vmul.f32 %v705, %v707
    %v723 = vmul.f32 %v706, %v707
    %v724 = vpack.c.bf16 %v708, %v708
    %v725 = vpack.c.bf16 %v709, %v709
    %v726 = vpack.c.bf16 %v710, %v710
    %v727 = vpack.c.bf16 %v711, %v711
    %v728 = vpack.c.bf16 %v712, %v712
    %v729 = vpack.c.bf16 %v713, %v713
    %v730 = vpack.c.bf16 %v714, %v714
    %v731 = vpack.c.bf16 %v715, %v715
    %v732 = vpack.c.bf16 %v716, %v716
    %v733 = vpack.c.bf16 %v717, %v717
    %v734 = vpack.c.bf16 %v718, %v718
    %v735 = vpack.c.bf16 %v719, %v719
    %v736 = vpack.c.bf16 %v720, %v720
    %v737 = vpack.c.bf16 %v721, %v721
    %v738 = vpack.c.bf16 %v722, %v722
    %v739 = vpack.c.bf16 %v723, %v723
    %v741 = vpack.i.b16 %v686, %v686
    %v743 = vperm.slane %v741, 0
    %v744 = vunpack.c.l.bf16 %v724
    %v745 = vunpack.c.l.bf16 %v725
    %v746 = vunpack.c.l.bf16 %v726
    %v747 = vunpack.c.l.bf16 %v727
    %v748 = vunpack.c.l.bf16 %v728
    %v749 = vunpack.c.l.bf16 %v729
    %v750 = vunpack.c.l.bf16 %v730
    %v751 = vunpack.c.l.bf16 %v731
    %v752 = vunpack.c.l.bf16 %v732
    %v753 = vunpack.c.l.bf16 %v733
    %v754 = vunpack.c.l.bf16 %v734
    %v755 = vunpack.c.l.bf16 %v735
    %v756 = vunpack.c.l.bf16 %v736
    %v757 = vunpack.c.l.bf16 %v737
    %v758 = vunpack.c.l.bf16 %v738
    %v759 = vunpack.c.l.bf16 %v739
    %v760 = vunpack.c.l.bf16 %v743
    %v761 = vadd.f32 %v744, %v760
    %v762 = vadd.f32 %v745, %v760
    %v763 = vadd.f32 %v746, %v760
    %v764 = vadd.f32 %v747, %v760
    %v765 = vadd.f32 %v748, %v760
    %v766 = vadd.f32 %v749, %v760
    %v767 = vadd.f32 %v750, %v760
    %v768 = vadd.f32 %v751, %v760
    %v769 = vadd.f32 %v752, %v760
    %v770 = vadd.f32 %v753, %v760
    %v771 = vadd.f32 %v754, %v760
    %v772 = vadd.f32 %v755, %v760
    %v773 = vadd.f32 %v756, %v760
    %v774 = vadd.f32 %v757, %v760
    %v775 = vadd.f32 %v758, %v760
    %v776 = vadd.f32 %v759, %v760
    %v777 = vpack.c.bf16 %v761, %v761
    %v778 = vpack.c.bf16 %v762, %v762
    %v779 = vpack.c.bf16 %v763, %v763
    %v780 = vpack.c.bf16 %v764, %v764
    %v781 = vpack.c.bf16 %v765, %v765
    %v782 = vpack.c.bf16 %v766, %v766
    %v783 = vpack.c.bf16 %v767, %v767
    %v784 = vpack.c.bf16 %v768, %v768
    %v785 = vpack.c.bf16 %v769, %v769
    %v786 = vpack.c.bf16 %v770, %v770
    %v787 = vpack.c.bf16 %v771, %v771
    %v788 = vpack.c.bf16 %v772, %v772
    %v789 = vpack.c.bf16 %v773, %v773
    %v790 = vpack.c.bf16 %v774, %v774
    %v791 = vpack.c.bf16 %v775, %v775
    %v792 = vpack.c.bf16 %v776, %v776
    %v793 = vunpack.c.l.bf16 %v777
    %v794 = vunpack.c.l.bf16 %v778
    %v795 = vunpack.c.l.bf16 %v779
    %v796 = vunpack.c.l.bf16 %v780
    %v797 = vunpack.c.l.bf16 %v781
    %v798 = vunpack.c.l.bf16 %v782
    %v799 = vunpack.c.l.bf16 %v783
    %v800 = vunpack.c.l.bf16 %v784
    %v801 = vunpack.c.l.bf16 %v785
    %v802 = vunpack.c.l.bf16 %v786
    %v803 = vunpack.c.l.bf16 %v787
    %v804 = vunpack.c.l.bf16 %v788
    %v805 = vunpack.c.l.bf16 %v789
    %v806 = vunpack.c.l.bf16 %v790
    %v807 = vunpack.c.l.bf16 %v791
    %v808 = vunpack.c.l.bf16 %v792
    %v809 = vmax.f32 %v793, 0.0
    %v810 = vmax.f32 %v794, 0.0
    %v811 = vmax.f32 %v795, 0.0
    %v812 = vmax.f32 %v796, 0.0
    %v813 = vmax.f32 %v797, 0.0
    %v814 = vmax.f32 %v798, 0.0
    %v815 = vmax.f32 %v799, 0.0
    %v816 = vmax.f32 %v800, 0.0
    %v817 = vmax.f32 %v801, 0.0
    %v818 = vmax.f32 %v802, 0.0
    %v819 = vmax.f32 %v803, 0.0
    %v820 = vmax.f32 %v804, 0.0
    %v821 = vmax.f32 %v805, 0.0
    %v822 = vmax.f32 %v806, 0.0
    %v823 = vmax.f32 %v807, 0.0
    %v824 = vmax.f32 %v808, 0.0
    %v825 = vpack.c.bf16 %v810, %v809
    %v826 = vpack.c.bf16 %v812, %v811
    %v827 = vpack.c.bf16 %v814, %v813
    %v828 = vpack.c.bf16 %v816, %v815
    %v829 = vpack.c.bf16 %v818, %v817
    %v830 = vpack.c.bf16 %v820, %v819
    %v831 = vpack.c.bf16 %v822, %v821
    %v832 = vpack.c.bf16 %v824, %v823
    %v833 = vld [vmem:[#allocation7] sm:$0xf]
    %v834 = vld [vmem:[#allocation7 + $0x4] sm:$0xf]
    %v835 = vld [vmem:[#allocation7 + $0x8] sm:$0xf]
    %v836 = vld [vmem:[#allocation7 + $0xc] sm:$0xf]
    %v837 = vld [vmem:[#allocation7 + $0x10] sm:$0xf]
    %v838 = vld [vmem:[#allocation7 + $0x14] sm:$0xf]
    %v839 = vld [vmem:[#allocation7 + $0x18] sm:$0xf]
    %v840 = vld [vmem:[#allocation7 + $0x1c] sm:$0xf]
    %v841 = vld [vmem:[#allocation7 + $0x20] sm:$0xf]
    %v842 = vld [vmem:[#allocation7 + $0x24] sm:$0xf]
    %v843 = vld [vmem:[#allocation7 + $0x28] sm:$0xf]
    %v844 = vld [vmem:[#allocation7 + $0x2c] sm:$0xf]
    %v845 = vld [vmem:[#allocation7 + $0x30] sm:$0xf]
    %v846 = vld [vmem:[#allocation7 + $0x34] sm:$0xf]
    %v847 = vld [vmem:[#allocation7 + $0x38] sm:$0xf]
    %v848 = vld [vmem:[#allocation7 + $0x3c] sm:$0xf]
    %v849 = vld [vmem:[%s6] sm:$0x1]
    %v851 = vperm.slane %v849, 0
    %v869 = vunpack.c.l.b16 %v833
    %v870 = vunpack.c.l.b16 %v834
    %v871 = vunpack.c.l.b16 %v835
    %v872 = vunpack.c.l.b16 %v836
    %v873 = vunpack.c.l.b16 %v837
    %v874 = vunpack.c.l.b16 %v838
    %v875 = vunpack.c.l.b16 %v839
    %v876 = vunpack.c.l.b16 %v840
    %v877 = vunpack.c.l.b16 %v841
    %v878 = vunpack.c.l.b16 %v842
    %v879 = vunpack.c.l.b16 %v843
    %v880 = vunpack.c.l.b16 %v844
    %v881 = vunpack.c.l.b16 %v845
    %v882 = vunpack.c.l.b16 %v846
    %v883 = vunpack.c.l.b16 %v847
    %v884 = vunpack.c.l.b16 %v848
    %v885 = vpack.c.b16 %v870, %v869
    %v886 = vpack.c.b16 %v872, %v871
    %v887 = vpack.c.b16 %v874, %v873
    %v888 = vpack.c.b16 %v876, %v875
    %v889 = vpack.c.b16 %v878, %v877
    %v890 = vpack.c.b16 %v880, %v879
    %v891 = vpack.c.b16 %v882, %v881
    %v892 = vpack.c.b16 %v884, %v883
    %901 = vmatpush.bf16.msra.mxu0 %v892
    %902 = vmatpush.bf16.msra.mxu0 %v891
    %903 = vmatpush.bf16.msra.mxu0 %v890
    %904 = vmatpush.bf16.msra.mxu0 %v889
    %905 = vmatpush.bf16.msra.mxu0 %v888
    %906 = vmatpush.bf16.msra.mxu0 %v887
    %907 = vmatpush.bf16.msra.mxu0 %v886
    %908 = vmatpush.bf16.msra.mxu0 %v885
    %909 = vmatmul.bf16.gmra.mxu0 %v825
    %v910 = vpop.f32.mrf.mxu0
    %v911 = vadd.f32 %v851, %v910
    %v912 = vpop.f32.mrf.mxu0
    %v913 = vadd.f32 %v851, %v912
    %914 = vmatmul.bf16.gmra.mxu0 %v826
    %v915 = vpop.f32.mrf.mxu0
    %v916 = vadd.f32 %v851, %v915
    %v917 = vpop.f32.mrf.mxu0
    %v918 = vadd.f32 %v851, %v917
    %919 = vmatmul.bf16.gmra.mxu0 %v827
    %v920 = vpop.f32.mrf.mxu0
    %v921 = vadd.f32 %v851, %v920
    %v922 = vpop.f32.mrf.mxu0
    %v923 = vadd.f32 %v851, %v922
    %924 = vmatmul.bf16.gmra.mxu0 %v828
    %v925 = vpop.f32.mrf.mxu0
    %v926 = vadd.f32 %v851, %v925
    %v927 = vpop.f32.mrf.mxu0
    %v928 = vadd.f32 %v851, %v927
    %929 = vmatmul.bf16.gmra.mxu0 %v829
    %v930 = vpop.f32.mrf.mxu0
    %v931 = vadd.f32 %v851, %v930
    %v932 = vpop.f32.mrf.mxu0
    %v933 = vadd.f32 %v851, %v932
    %934 = vmatmul.bf16.gmra.mxu0 %v830
    %v935 = vpop.f32.mrf.mxu0
    %v936 = vadd.f32 %v851, %v935
    %v937 = vpop.f32.mrf.mxu0
    %v938 = vadd.f32 %v851, %v937
    %939 = vmatmul.bf16.gmra.mxu0 %v831
    %v940 = vpop.f32.mrf.mxu0
    %v941 = vadd.f32 %v851, %v940
    %v942 = vpop.f32.mrf.mxu0
    %v943 = vadd.f32 %v851, %v942
    %944 = vmatmul.bf16.gmra.mxu0 %v832
    %v945 = vpop.f32.mrf.mxu0
    %v946 = vadd.f32 %v851, %v945
    %v947 = vpop.f32.mrf.mxu0
    %v948 = vadd.f32 %v851, %v947
    %949 = vdwg.mxu0
    %950 = vadd.xlane.f32.xlu0 %v911
    %v951 = vpop.xlane.xlu0 %950
    %952 = vadd.xlane.f32.xlu0 %v913
    %v953 = vpop.xlane.xlu0 %952
    %954 = vadd.xlane.f32.xlu0 %v916
    %v955 = vpop.xlane.xlu0 %954
    %956 = vadd.xlane.f32.xlu0 %v918
    %v957 = vpop.xlane.xlu0 %956
    %958 = vadd.xlane.f32.xlu0 %v921
    %v959 = vpop.xlane.xlu0 %958
    %960 = vadd.xlane.f32.xlu0 %v923
    %v961 = vpop.xlane.xlu0 %960
    %962 = vadd.xlane.f32.xlu0 %v926
    %v963 = vpop.xlane.xlu0 %962
    %964 = vadd.xlane.f32.xlu0 %v928
    %v965 = vpop.xlane.xlu0 %964
    %966 = vadd.xlane.f32.xlu0 %v931
    %v967 = vpop.xlane.xlu0 %966
    %968 = vadd.xlane.f32.xlu0 %v933
    %v969 = vpop.xlane.xlu0 %968
    %970 = vadd.xlane.f32.xlu0 %v936
    %v971 = vpop.xlane.xlu0 %970
    %972 = vadd.xlane.f32.xlu0 %v938
    %v973 = vpop.xlane.xlu0 %972
    %974 = vadd.xlane.f32.xlu0 %v941
    %v975 = vpop.xlane.xlu0 %974
    %976 = vadd.xlane.f32.xlu0 %v943
    %v977 = vpop.xlane.xlu0 %976
    %978 = vadd.xlane.f32.xlu0 %v946
    %v979 = vpop.xlane.xlu0 %978
    %980 = vadd.xlane.f32.xlu0 %v948
    %v981 = vpop.xlane.xlu0 %980
    %v982 = vmul.f32 %v951, 0.03125
    %v983 = vmul.f32 %v953, 0.03125
    %v984 = vmul.f32 %v955, 0.03125
    %v985 = vmul.f32 %v957, 0.03125
    %v986 = vmul.f32 %v959, 0.03125
    %v987 = vmul.f32 %v961, 0.03125
    %v988 = vmul.f32 %v963, 0.03125
    %v989 = vmul.f32 %v965, 0.03125
    %v990 = vmul.f32 %v967, 0.03125
    %v991 = vmul.f32 %v969, 0.03125
    %v992 = vmul.f32 %v971, 0.03125
    %v993 = vmul.f32 %v973, 0.03125
    %v994 = vmul.f32 %v975, 0.03125
    %v995 = vmul.f32 %v977, 0.03125
    %v996 = vmul.f32 %v979, 0.03125
    %v997 = vmul.f32 %v981, 0.03125
    %v998 = vsub.f32 %v911, %v982
    %v999 = vsub.f32 %v913, %v983
    %v1000 = vsub.f32 %v916, %v984
    %v1001 = vsub.f32 %v918, %v985
    %v1002 = vsub.f32 %v921, %v986
    %v1003 = vsub.f32 %v923, %v987
    %v1004 = vsub.f32 %v926, %v988
    %v1005 = vsub.f32 %v928, %v989
    %v1006 = vsub.f32 %v931, %v990
    %v1007 = vsub.f32 %v933, %v991
    %v1008 = vsub.f32 %v936, %v992
    %v1009 = vsub.f32 %v938, %v993
    %v1010 = vsub.f32 %v941, %v994
    %v1011 = vsub.f32 %v943, %v995
    %v1012 = vsub.f32 %v946, %v996
    %v1013 = vsub.f32 %v948, %v997
    %v1014 = vmul.f32 %v998, %v998
    %v1015 = vmul.f32 %v999, %v999
    %v1016 = vmul.f32 %v1000, %v1000
    %v1017 = vmul.f32 %v1001, %v1001
    %v1018 = vmul.f32 %v1002, %v1002
    %v1019 = vmul.f32 %v1003, %v1003
    %v1020 = vmul.f32 %v1004, %v1004
    %v1021 = vmul.f32 %v1005, %v1005
    %v1022 = vmul.f32 %v1006, %v1006
    %v1023 = vmul.f32 %v1007, %v1007
    %v1024 = vmul.f32 %v1008, %v1008
    %v1025 = vmul.f32 %v1009, %v1009
    %v1026 = vmul.f32 %v1010, %v1010
    %v1027 = vmul.f32 %v1011, %v1011
    %v1028 = vmul.f32 %v1012, %v1012
    %v1029 = vmul.f32 %v1013, %v1013
    %1030 = vadd.xlane.f32.xlu0 %v1014
    %v1031 = vpop.xlane.xlu0 %1030
    %1032 = vadd.xlane.f32.xlu0 %v1015
    %v1033 = vpop.xlane.xlu0 %1032
    %1034 = vadd.xlane.f32.xlu0 %v1016
    %v1035 = vpop.xlane.xlu0 %1034
    %1036 = vadd.xlane.f32.xlu0 %v1017
    %v1037 = vpop.xlane.xlu0 %1036
    %1038 = vadd.xlane.f32.xlu0 %v1018
    %v1039 = vpop.xlane.xlu0 %1038
    %1040 = vadd.xlane.f32.xlu0 %v1019
    %v1041 = vpop.xlane.xlu0 %1040
    %1042 = vadd.xlane.f32.xlu0 %v1020
    %v1043 = vpop.xlane.xlu0 %1042
    %1044 = vadd.xlane.f32.xlu0 %v1021
    %v1045 = vpop.xlane.xlu0 %1044
    %1046 = vadd.xlane.f32.xlu0 %v1022
    %v1047 = vpop.xlane.xlu0 %1046
    %1048 = vadd.xlane.f32.xlu0 %v1023
    %v1049 = vpop.xlane.xlu0 %1048
    %1050 = vadd.xlane.f32.xlu0 %v1024
    %v1051 = vpop.xlane.xlu0 %1050
    %1052 = vadd.xlane.f32.xlu0 %v1025
    %v1053 = vpop.xlane.xlu0 %1052
    %1054 = vadd.xlane.f32.xlu0 %v1026
    %v1055 = vpop.xlane.xlu0 %1054
    %1056 = vadd.xlane.f32.xlu0 %v1027
    %v1057 = vpop.xlane.xlu0 %1056
    %1058 = vadd.xlane.f32.xlu0 %v1028
    %v1059 = vpop.xlane.xlu0 %1058
    %1060 = vadd.xlane.f32.xlu0 %v1029
    %v1061 = vpop.xlane.xlu0 %1060
    %v1062 = vmul.f32 %v982, %v982
    %v1063 = vmul.f32 %v983, %v983
    %v1064 = vmul.f32 %v984, %v984
    %v1065 = vmul.f32 %v985, %v985
    %v1066 = vmul.f32 %v986, %v986
    %v1067 = vmul.f32 %v987, %v987
    %v1068 = vmul.f32 %v988, %v988
    %v1069 = vmul.f32 %v989, %v989
    %v1070 = vmul.f32 %v990, %v990
    %v1071 = vmul.f32 %v991, %v991
    %v1072 = vmul.f32 %v992, %v992
    %v1073 = vmul.f32 %v993, %v993
    %v1074 = vmul.f32 %v994, %v994
    %v1075 = vmul.f32 %v995, %v995
    %v1076 = vmul.f32 %v996, %v996
    %v1077 = vmul.f32 %v997, %v997
    %v1078 = vmul.f32 %v1062, 96.0
    %v1079 = vmul.f32 %v1063, 96.0
    %v1080 = vmul.f32 %v1064, 96.0
    %v1081 = vmul.f32 %v1065, 96.0
    %v1082 = vmul.f32 %v1066, 96.0
    %v1083 = vmul.f32 %v1067, 96.0
    %v1084 = vmul.f32 %v1068, 96.0
    %v1085 = vmul.f32 %v1069, 96.0
    %v1086 = vmul.f32 %v1070, 96.0
    %v1087 = vmul.f32 %v1071, 96.0
    %v1088 = vmul.f32 %v1072, 96.0
    %v1089 = vmul.f32 %v1073, 96.0
    %v1090 = vmul.f32 %v1074, 96.0
    %v1091 = vmul.f32 %v1075, 96.0
    %v1092 = vmul.f32 %v1076, 96.0
    %v1093 = vmul.f32 %v1077, 96.0
    %v1094 = vsub.f32 %v1031, %v1078
    %v1095 = vsub.f32 %v1033, %v1079
    %v1096 = vsub.f32 %v1035, %v1080
    %v1097 = vsub.f32 %v1037, %v1081
    %v1098 = vsub.f32 %v1039, %v1082
    %v1099 = vsub.f32 %v1041, %v1083
    %v1100 = vsub.f32 %v1043, %v1084
    %v1101 = vsub.f32 %v1045, %v1085
    %v1102 = vsub.f32 %v1047, %v1086
    %v1103 = vsub.f32 %v1049, %v1087
    %v1104 = vsub.f32 %v1051, %v1088
    %v1105 = vsub.f32 %v1053, %v1089
    %v1106 = vsub.f32 %v1055, %v1090
    %v1107 = vsub.f32 %v1057, %v1091
    %v1108 = vsub.f32 %v1059, %v1092
    %v1109 = vsub.f32 %v1061, %v1093
    %v1110 = vmul.f32 %v1094, 0.03125
    %v1111 = vmul.f32 %v1095, 0.03125
    %v1112 = vmul.f32 %v1096, 0.03125
    %v1113 = vmul.f32 %v1097, 0.03125
    %v1114 = vmul.f32 %v1098, 0.03125
    %v1115 = vmul.f32 %v1099, 0.03125
    %v1116 = vmul.f32 %v1100, 0.03125
    %v1117 = vmul.f32 %v1101, 0.03125
    %v1118 = vmul.f32 %v1102, 0.03125
    %v1119 = vmul.f32 %v1103, 0.03125
    %v1120 = vmul.f32 %v1104, 0.03125
    %v1121 = vmul.f32 %v1105, 0.03125
    %v1122 = vmul.f32 %v1106, 0.03125
    %v1123 = vmul.f32 %v1107, 0.03125
    %v1124 = vmul.f32 %v1108, 0.03125
    %v1125 = vmul.f32 %v1109, 0.03125
    %v1126 = vmax.f32 %v1110, 0.0
    %v1127 = vmax.f32 %v1111, 0.0
    %v1128 = vmax.f32 %v1112, 0.0
    %v1129 = vmax.f32 %v1113, 0.0
    %v1130 = vmax.f32 %v1114, 0.0
    %v1131 = vmax.f32 %v1115, 0.0
    %v1132 = vmax.f32 %v1116, 0.0
    %v1133 = vmax.f32 %v1117, 0.0
    %v1134 = vmax.f32 %v1118, 0.0
    %v1135 = vmax.f32 %v1119, 0.0
    %v1136 = vmax.f32 %v1120, 0.0
    %v1137 = vmax.f32 %v1121, 0.0
    %v1138 = vmax.f32 %v1122, 0.0
    %v1139 = vmax.f32 %v1123, 0.0
    %v1140 = vmax.f32 %v1124, 0.0
    %v1141 = vmax.f32 %v1125, 0.0
    %v1142 = vadd.f32 %v1126, 1e-05
    %v1143 = vadd.f32 %v1127, 1e-05
    %v1144 = vadd.f32 %v1128, 1e-05
    %v1145 = vadd.f32 %v1129, 1e-05
    %v1146 = vadd.f32 %v1130, 1e-05
    %v1147 = vadd.f32 %v1131, 1e-05
    %v1148 = vadd.f32 %v1132, 1e-05
    %v1149 = vadd.f32 %v1133, 1e-05
    %v1150 = vadd.f32 %v1134, 1e-05
    %v1151 = vadd.f32 %v1135, 1e-05
    %v1152 = vadd.f32 %v1136, 1e-05
    %v1153 = vadd.f32 %v1137, 1e-05
    %v1154 = vadd.f32 %v1138, 1e-05
    %v1155 = vadd.f32 %v1139, 1e-05
    %v1156 = vadd.f32 %v1140, 1e-05
    %v1157 = vadd.f32 %v1141, 1e-05
    %v1158 = vrsqrt.pop %v1142
    %v1159 = vmul.f32 %v1158, %v1142
    %v1160 = vmul.f32 %v1159, %v1158
    %v1161 = vmul.f32 0.5, %v1160
    %v1162 = vsub.f32 1.5, %v1161
    %v1163 = vmul.f32 %v1158, %v1162
    %vm1164 = vweird.f32 %v1142
    %vm1165 = vweird.f32 %v1158
    %vm1166 = vmor %vm1164, %vm1165
    %v1167 = vsel %vm1166, %v1158, %v1163
    %v1168 = vrsqrt.pop %v1143
    %v1169 = vmul.f32 %v1168, %v1143
    %v1170 = vmul.f32 %v1169, %v1168
    %v1171 = vmul.f32 0.5, %v1170
    %v1172 = vsub.f32 1.5, %v1171
    %v1173 = vmul.f32 %v1168, %v1172
    %vm1174 = vweird.f32 %v1143
    %vm1175 = vweird.f32 %v1168
    %vm1176 = vmor %vm1174, %vm1175
    %v1177 = vsel %vm1176, %v1168, %v1173
    %v1178 = vrsqrt.pop %v1144
    %v1179 = vmul.f32 %v1178, %v1144
    %v1180 = vmul.f32 %v1179, %v1178
    %v1181 = vmul.f32 0.5, %v1180
    %v1182 = vsub.f32 1.5, %v1181
    %v1183 = vmul.f32 %v1178, %v1182
    %vm1184 = vweird.f32 %v1144
    %vm1185 = vweird.f32 %v1178
    %vm1186 = vmor %vm1184, %vm1185
    %v1187 = vsel %vm1186, %v1178, %v1183
    %v1188 = vrsqrt.pop %v1145
    %v1189 = vmul.f32 %v1188, %v1145
    %v1190 = vmul.f32 %v1189, %v1188
    %v1191 = vmul.f32 0.5, %v1190
    %v1192 = vsub.f32 1.5, %v1191
    %v1193 = vmul.f32 %v1188, %v1192
    %vm1194 = vweird.f32 %v1145
    %vm1195 = vweird.f32 %v1188
    %vm1196 = vmor %vm1194, %vm1195
    %v1197 = vsel %vm1196, %v1188, %v1193
    %v1198 = vrsqrt.pop %v1146
    %v1199 = vmul.f32 %v1198, %v1146
    %v1200 = vmul.f32 %v1199, %v1198
    %v1201 = vmul.f32 0.5, %v1200
    %v1202 = vsub.f32 1.5, %v1201
    %v1203 = vmul.f32 %v1198, %v1202
    %vm1204 = vweird.f32 %v1146
    %vm1205 = vweird.f32 %v1198
    %vm1206 = vmor %vm1204, %vm1205
    %v1207 = vsel %vm1206, %v1198, %v1203
    %v1208 = vrsqrt.pop %v1147
    %v1209 = vmul.f32 %v1208, %v1147
    %v1210 = vmul.f32 %v1209, %v1208
    %v1211 = vmul.f32 0.5, %v1210
    %v1212 = vsub.f32 1.5, %v1211
    %v1213 = vmul.f32 %v1208, %v1212
    %vm1214 = vweird.f32 %v1147
    %vm1215 = vweird.f32 %v1208
    %vm1216 = vmor %vm1214, %vm1215
    %v1217 = vsel %vm1216, %v1208, %v1213
    %v1218 = vrsqrt.pop %v1148
    %v1219 = vmul.f32 %v1218, %v1148
    %v1220 = vmul.f32 %v1219, %v1218
    %v1221 = vmul.f32 0.5, %v1220
    %v1222 = vsub.f32 1.5, %v1221
    %v1223 = vmul.f32 %v1218, %v1222
    %vm1224 = vweird.f32 %v1148
    %vm1225 = vweird.f32 %v1218
    %vm1226 = vmor %vm1224, %vm1225
    %v1227 = vsel %vm1226, %v1218, %v1223
    %v1228 = vrsqrt.pop %v1149
    %v1229 = vmul.f32 %v1228, %v1149
    %v1230 = vmul.f32 %v1229, %v1228
    %v1231 = vmul.f32 0.5, %v1230
    %v1232 = vsub.f32 1.5, %v1231
    %v1233 = vmul.f32 %v1228, %v1232
    %vm1234 = vweird.f32 %v1149
    %vm1235 = vweird.f32 %v1228
    %vm1236 = vmor %vm1234, %vm1235
    %v1237 = vsel %vm1236, %v1228, %v1233
    %v1238 = vrsqrt.pop %v1150
    %v1239 = vmul.f32 %v1238, %v1150
    %v1240 = vmul.f32 %v1239, %v1238
    %v1241 = vmul.f32 0.5, %v1240
    %v1242 = vsub.f32 1.5, %v1241
    %v1243 = vmul.f32 %v1238, %v1242
    %vm1244 = vweird.f32 %v1150
    %vm1245 = vweird.f32 %v1238
    %vm1246 = vmor %vm1244, %vm1245
    %v1247 = vsel %vm1246, %v1238, %v1243
    %v1248 = vrsqrt.pop %v1151
    %v1249 = vmul.f32 %v1248, %v1151
    %v1250 = vmul.f32 %v1249, %v1248
    %v1251 = vmul.f32 0.5, %v1250
    %v1252 = vsub.f32 1.5, %v1251
    %v1253 = vmul.f32 %v1248, %v1252
    %vm1254 = vweird.f32 %v1151
    %vm1255 = vweird.f32 %v1248
    %vm1256 = vmor %vm1254, %vm1255
    %v1257 = vsel %vm1256, %v1248, %v1253
    %v1258 = vrsqrt.pop %v1152
    %v1259 = vmul.f32 %v1258, %v1152
    %v1260 = vmul.f32 %v1259, %v1258
    %v1261 = vmul.f32 0.5, %v1260
    %v1262 = vsub.f32 1.5, %v1261
    %v1263 = vmul.f32 %v1258, %v1262
    %vm1264 = vweird.f32 %v1152
    %vm1265 = vweird.f32 %v1258
    %vm1266 = vmor %vm1264, %vm1265
    %v1267 = vsel %vm1266, %v1258, %v1263
    %v1268 = vrsqrt.pop %v1153
    %v1269 = vmul.f32 %v1268, %v1153
    %v1270 = vmul.f32 %v1269, %v1268
    %v1271 = vmul.f32 0.5, %v1270
    %v1272 = vsub.f32 1.5, %v1271
    %v1273 = vmul.f32 %v1268, %v1272
    %vm1274 = vweird.f32 %v1153
    %vm1275 = vweird.f32 %v1268
    %vm1276 = vmor %vm1274, %vm1275
    %v1277 = vsel %vm1276, %v1268, %v1273
    %v1278 = vrsqrt.pop %v1154
    %v1279 = vmul.f32 %v1278, %v1154
    %v1280 = vmul.f32 %v1279, %v1278
    %v1281 = vmul.f32 0.5, %v1280
    %v1282 = vsub.f32 1.5, %v1281
    %v1283 = vmul.f32 %v1278, %v1282
    %vm1284 = vweird.f32 %v1154
    %vm1285 = vweird.f32 %v1278
    %vm1286 = vmor %vm1284, %vm1285
    %v1287 = vsel %vm1286, %v1278, %v1283
    %v1288 = vrsqrt.pop %v1155
    %v1289 = vmul.f32 %v1288, %v1155
    %v1290 = vmul.f32 %v1289, %v1288
    %v1291 = vmul.f32 0.5, %v1290
    %v1292 = vsub.f32 1.5, %v1291
    %v1293 = vmul.f32 %v1288, %v1292
    %vm1294 = vweird.f32 %v1155
    %vm1295 = vweird.f32 %v1288
    %vm1296 = vmor %vm1294, %vm1295
    %v1297 = vsel %vm1296, %v1288, %v1293
    %v1298 = vrsqrt.pop %v1156
    %v1299 = vmul.f32 %v1298, %v1156
    %v1300 = vmul.f32 %v1299, %v1298
    %v1301 = vmul.f32 0.5, %v1300
    %v1302 = vsub.f32 1.5, %v1301
    %v1303 = vmul.f32 %v1298, %v1302
    %vm1304 = vweird.f32 %v1156
    %vm1305 = vweird.f32 %v1298
    %vm1306 = vmor %vm1304, %vm1305
    %v1307 = vsel %vm1306, %v1298, %v1303
    %v1308 = vrsqrt.pop %v1157
    %v1309 = vmul.f32 %v1308, %v1157
    %v1310 = vmul.f32 %v1309, %v1308
    %v1311 = vmul.f32 0.5, %v1310
    %v1312 = vsub.f32 1.5, %v1311
    %v1313 = vmul.f32 %v1308, %v1312
    %vm1314 = vweird.f32 %v1157
    %vm1315 = vweird.f32 %v1308
    %vm1316 = vmor %vm1314, %vm1315
    %v1317 = vsel %vm1316, %v1308, %v1313
    %v1318 = vmul.f32 %v998, %v1167
    %v1319 = vmul.f32 %v999, %v1177
    %v1320 = vmul.f32 %v1000, %v1187
    %v1321 = vmul.f32 %v1001, %v1197
    %v1322 = vmul.f32 %v1002, %v1207
    %v1323 = vmul.f32 %v1003, %v1217
    %v1324 = vmul.f32 %v1004, %v1227
    %v1325 = vmul.f32 %v1005, %v1237
    %v1326 = vmul.f32 %v1006, %v1247
    %v1327 = vmul.f32 %v1007, %v1257
    %v1328 = vmul.f32 %v1008, %v1267
    %v1329 = vmul.f32 %v1009, %v1277
    %v1330 = vmul.f32 %v1010, %v1287
    %v1331 = vmul.f32 %v1011, %v1297
    %v1332 = vmul.f32 %v1012, %v1307
    %v1333 = vmul.f32 %v1013, %v1317
    %v1334 = vld [vmem:[%s7] sm:$0x1]
    %v1335 = vld [vmem:[%s8] sm:$0x1]
    %v1336 = vpack.c.bf16 %v1318, %v1318
    %v1337 = vpack.c.bf16 %v1319, %v1319
    %v1338 = vpack.c.bf16 %v1320, %v1320
    %v1339 = vpack.c.bf16 %v1321, %v1321
    %v1340 = vpack.c.bf16 %v1322, %v1322
    %v1341 = vpack.c.bf16 %v1323, %v1323
    %v1342 = vpack.c.bf16 %v1324, %v1324
    %v1343 = vpack.c.bf16 %v1325, %v1325
    %v1344 = vpack.c.bf16 %v1326, %v1326
    %v1345 = vpack.c.bf16 %v1327, %v1327
    %v1346 = vpack.c.bf16 %v1328, %v1328
    %v1347 = vpack.c.bf16 %v1329, %v1329
    %v1348 = vpack.c.bf16 %v1330, %v1330
    %v1349 = vpack.c.bf16 %v1331, %v1331
    %v1350 = vpack.c.bf16 %v1332, %v1332
    %v1351 = vpack.c.bf16 %v1333, %v1333
    %v1352 = vpack.c.bf16 %v1334, %v1334
    %v1353 = vpack.c.bf16 %v1335, %v1335
    %v1355 = vpack.i.b16 %v1352, %v1352
    %v1357 = vperm.slane %v1355, 0
    %v1358 = vunpack.c.l.bf16 %v1336
    %v1359 = vunpack.c.l.bf16 %v1337
    %v1360 = vunpack.c.l.bf16 %v1338
    %v1361 = vunpack.c.l.bf16 %v1339
    %v1362 = vunpack.c.l.bf16 %v1340
    %v1363 = vunpack.c.l.bf16 %v1341
    %v1364 = vunpack.c.l.bf16 %v1342
    %v1365 = vunpack.c.l.bf16 %v1343
    %v1366 = vunpack.c.l.bf16 %v1344
    %v1367 = vunpack.c.l.bf16 %v1345
    %v1368 = vunpack.c.l.bf16 %v1346
    %v1369 = vunpack.c.l.bf16 %v1347
    %v1370 = vunpack.c.l.bf16 %v1348
    %v1371 = vunpack.c.l.bf16 %v1349
    %v1372 = vunpack.c.l.bf16 %v1350
    %v1373 = vunpack.c.l.bf16 %v1351
    %v1374 = vunpack.c.l.bf16 %v1357
    %v1375 = vmul.f32 %v1358, %v1374
    %v1376 = vmul.f32 %v1359, %v1374
    %v1377 = vmul.f32 %v1360, %v1374
    %v1378 = vmul.f32 %v1361, %v1374
    %v1379 = vmul.f32 %v1362, %v1374
    %v1380 = vmul.f32 %v1363, %v1374
    %v1381 = vmul.f32 %v1364, %v1374
    %v1382 = vmul.f32 %v1365, %v1374
    %v1383 = vmul.f32 %v1366, %v1374
    %v1384 = vmul.f32 %v1367, %v1374
    %v1385 = vmul.f32 %v1368, %v1374
    %v1386 = vmul.f32 %v1369, %v1374
    %v1387 = vmul.f32 %v1370, %v1374
    %v1388 = vmul.f32 %v1371, %v1374
    %v1389 = vmul.f32 %v1372, %v1374
    %v1390 = vmul.f32 %v1373, %v1374
    %v1391 = vpack.c.bf16 %v1375, %v1375
    %v1392 = vpack.c.bf16 %v1376, %v1376
    %v1393 = vpack.c.bf16 %v1377, %v1377
    %v1394 = vpack.c.bf16 %v1378, %v1378
    %v1395 = vpack.c.bf16 %v1379, %v1379
    %v1396 = vpack.c.bf16 %v1380, %v1380
    %v1397 = vpack.c.bf16 %v1381, %v1381
    %v1398 = vpack.c.bf16 %v1382, %v1382
    %v1399 = vpack.c.bf16 %v1383, %v1383
    %v1400 = vpack.c.bf16 %v1384, %v1384
    %v1401 = vpack.c.bf16 %v1385, %v1385
    %v1402 = vpack.c.bf16 %v1386, %v1386
    %v1403 = vpack.c.bf16 %v1387, %v1387
    %v1404 = vpack.c.bf16 %v1388, %v1388
    %v1405 = vpack.c.bf16 %v1389, %v1389
    %v1406 = vpack.c.bf16 %v1390, %v1390
    %v1408 = vpack.i.b16 %v1353, %v1353
    %v1410 = vperm.slane %v1408, 0
    %v1411 = vunpack.c.l.bf16 %v1391
    %v1412 = vunpack.c.l.bf16 %v1392
    %v1413 = vunpack.c.l.bf16 %v1393
    %v1414 = vunpack.c.l.bf16 %v1394
    %v1415 = vunpack.c.l.bf16 %v1395
    %v1416 = vunpack.c.l.bf16 %v1396
    %v1417 = vunpack.c.l.bf16 %v1397
    %v1418 = vunpack.c.l.bf16 %v1398
    %v1419 = vunpack.c.l.bf16 %v1399
    %v1420 = vunpack.c.l.bf16 %v1400
    %v1421 = vunpack.c.l.bf16 %v1401
    %v1422 = vunpack.c.l.bf16 %v1402
    %v1423 = vunpack.c.l.bf16 %v1403
    %v1424 = vunpack.c.l.bf16 %v1404
    %v1425 = vunpack.c.l.bf16 %v1405
    %v1426 = vunpack.c.l.bf16 %v1406
    %v1427 = vunpack.c.l.bf16 %v1410
    %v1428 = vadd.f32 %v1411, %v1427
    %v1429 = vadd.f32 %v1412, %v1427
    %v1430 = vadd.f32 %v1413, %v1427
    %v1431 = vadd.f32 %v1414, %v1427
    %v1432 = vadd.f32 %v1415, %v1427
    %v1433 = vadd.f32 %v1416, %v1427
    %v1434 = vadd.f32 %v1417, %v1427
    %v1435 = vadd.f32 %v1418, %v1427
    %v1436 = vadd.f32 %v1419, %v1427
    %v1437 = vadd.f32 %v1420, %v1427
    %v1438 = vadd.f32 %v1421, %v1427
    %v1439 = vadd.f32 %v1422, %v1427
    %v1440 = vadd.f32 %v1423, %v1427
    %v1441 = vadd.f32 %v1424, %v1427
    %v1442 = vadd.f32 %v1425, %v1427
    %v1443 = vadd.f32 %v1426, %v1427
    %v1444 = vpack.c.bf16 %v1428, %v1428
    %v1445 = vpack.c.bf16 %v1429, %v1429
    %v1446 = vpack.c.bf16 %v1430, %v1430
    %v1447 = vpack.c.bf16 %v1431, %v1431
    %v1448 = vpack.c.bf16 %v1432, %v1432
    %v1449 = vpack.c.bf16 %v1433, %v1433
    %v1450 = vpack.c.bf16 %v1434, %v1434
    %v1451 = vpack.c.bf16 %v1435, %v1435
    %v1452 = vpack.c.bf16 %v1436, %v1436
    %v1453 = vpack.c.bf16 %v1437, %v1437
    %v1454 = vpack.c.bf16 %v1438, %v1438
    %v1455 = vpack.c.bf16 %v1439, %v1439
    %v1456 = vpack.c.bf16 %v1440, %v1440
    %v1457 = vpack.c.bf16 %v1441, %v1441
    %v1458 = vpack.c.bf16 %v1442, %v1442
    %v1459 = vpack.c.bf16 %v1443, %v1443
    %v1460 = vunpack.c.l.bf16 %v1444
    %v1461 = vunpack.c.l.bf16 %v1445
    %v1462 = vunpack.c.l.bf16 %v1446
    %v1463 = vunpack.c.l.bf16 %v1447
    %v1464 = vunpack.c.l.bf16 %v1448
    %v1465 = vunpack.c.l.bf16 %v1449
    %v1466 = vunpack.c.l.bf16 %v1450
    %v1467 = vunpack.c.l.bf16 %v1451
    %v1468 = vunpack.c.l.bf16 %v1452
    %v1469 = vunpack.c.l.bf16 %v1453
    %v1470 = vunpack.c.l.bf16 %v1454
    %v1471 = vunpack.c.l.bf16 %v1455
    %v1472 = vunpack.c.l.bf16 %v1456
    %v1473 = vunpack.c.l.bf16 %v1457
    %v1474 = vunpack.c.l.bf16 %v1458
    %v1475 = vunpack.c.l.bf16 %v1459
    %v1476 = vmax.f32 %v1460, 0.0
    %v1477 = vmax.f32 %v1461, 0.0
    %v1478 = vmax.f32 %v1462, 0.0
    %v1479 = vmax.f32 %v1463, 0.0
    %v1480 = vmax.f32 %v1464, 0.0
    %v1481 = vmax.f32 %v1465, 0.0
    %v1482 = vmax.f32 %v1466, 0.0
    %v1483 = vmax.f32 %v1467, 0.0
    %v1484 = vmax.f32 %v1468, 0.0
    %v1485 = vmax.f32 %v1469, 0.0
    %v1486 = vmax.f32 %v1470, 0.0
    %v1487 = vmax.f32 %v1471, 0.0
    %v1488 = vmax.f32 %v1472, 0.0
    %v1489 = vmax.f32 %v1473, 0.0
    %v1490 = vmax.f32 %v1474, 0.0
    %v1491 = vmax.f32 %v1475, 0.0
    %v1492 = vpack.c.bf16 %v1477, %v1476
    %v1493 = vpack.c.bf16 %v1479, %v1478
    %v1494 = vpack.c.bf16 %v1481, %v1480
    %v1495 = vpack.c.bf16 %v1483, %v1482
    %v1496 = vpack.c.bf16 %v1485, %v1484
    %v1497 = vpack.c.bf16 %v1487, %v1486
    %v1498 = vpack.c.bf16 %v1489, %v1488
    %v1499 = vpack.c.bf16 %v1491, %v1490
    %v1500 = vld [vmem:[#allocation8] sm:$0xf]
    %v1501 = vld [vmem:[#allocation8 + $0x4] sm:$0xf]
    %v1502 = vld [vmem:[#allocation8 + $0x8] sm:$0xf]
    %v1503 = vld [vmem:[#allocation8 + $0xc] sm:$0xf]
    %v1504 = vld [vmem:[#allocation8 + $0x10] sm:$0xf]
    %v1505 = vld [vmem:[#allocation8 + $0x14] sm:$0xf]
    %v1506 = vld [vmem:[#allocation8 + $0x18] sm:$0xf]
    %v1507 = vld [vmem:[#allocation8 + $0x1c] sm:$0xf]
    %v1508 = vld [vmem:[#allocation8 + $0x20] sm:$0xf]
    %v1509 = vld [vmem:[#allocation8 + $0x24] sm:$0xf]
    %v1510 = vld [vmem:[#allocation8 + $0x28] sm:$0xf]
    %v1511 = vld [vmem:[#allocation8 + $0x2c] sm:$0xf]
    %v1512 = vld [vmem:[#allocation8 + $0x30] sm:$0xf]
    %v1513 = vld [vmem:[#allocation8 + $0x34] sm:$0xf]
    %v1514 = vld [vmem:[#allocation8 + $0x38] sm:$0xf]
    %v1515 = vld [vmem:[#allocation8 + $0x3c] sm:$0xf]
    %v1516 = vld [vmem:[%s10] sm:$0x1]
    %v1518 = vperm.slane %v1516, 0
    %v1536 = vunpack.c.l.b16 %v1500
    %v1537 = vunpack.c.l.b16 %v1501
    %v1538 = vunpack.c.l.b16 %v1502
    %v1539 = vunpack.c.l.b16 %v1503
    %v1540 = vunpack.c.l.b16 %v1504
    %v1541 = vunpack.c.l.b16 %v1505
    %v1542 = vunpack.c.l.b16 %v1506
    %v1543 = vunpack.c.l.b16 %v1507
    %v1544 = vunpack.c.l.b16 %v1508
    %v1545 = vunpack.c.l.b16 %v1509
    %v1546 = vunpack.c.l.b16 %v1510
    %v1547 = vunpack.c.l.b16 %v1511
    %v1548 = vunpack.c.l.b16 %v1512
    %v1549 = vunpack.c.l.b16 %v1513
    %v1550 = vunpack.c.l.b16 %v1514
    %v1551 = vunpack.c.l.b16 %v1515
    %v1552 = vpack.c.b16 %v1537, %v1536
    %v1553 = vpack.c.b16 %v1539, %v1538
    %v1554 = vpack.c.b16 %v1541, %v1540
    %v1555 = vpack.c.b16 %v1543, %v1542
    %v1556 = vpack.c.b16 %v1545, %v1544
    %v1557 = vpack.c.b16 %v1547, %v1546
    %v1558 = vpack.c.b16 %v1549, %v1548
    %v1559 = vpack.c.b16 %v1551, %v1550
    %1568 = vmatpush.bf16.msra.mxu0 %v1559
    %1569 = vmatpush.bf16.msra.mxu0 %v1558
    %1570 = vmatpush.bf16.msra.mxu0 %v1557
    %1571 = vmatpush.bf16.msra.mxu0 %v1556
    %1572 = vmatpush.bf16.msra.mxu0 %v1555
    %1573 = vmatpush.bf16.msra.mxu0 %v1554
    %1574 = vmatpush.bf16.msra.mxu0 %v1553
    %1575 = vmatpush.bf16.msra.mxu0 %v1552
    %1576 = vmatmul.bf16.gmra.mxu0 %v1492
    %v1577 = vpop.f32.mrf.mxu0
    %v1578 = vadd.f32 %v1518, %v1577
    %v1579 = vpop.f32.mrf.mxu0
    %v1580 = vadd.f32 %v1518, %v1579
    %1581 = vmatmul.bf16.gmra.mxu0 %v1493
    %v1582 = vpop.f32.mrf.mxu0
    %v1583 = vadd.f32 %v1518, %v1582
    %v1584 = vpop.f32.mrf.mxu0
    %v1585 = vadd.f32 %v1518, %v1584
    %1586 = vmatmul.bf16.gmra.mxu0 %v1494
    %v1587 = vpop.f32.mrf.mxu0
    %v1588 = vadd.f32 %v1518, %v1587
    %v1589 = vpop.f32.mrf.mxu0
    %v1590 = vadd.f32 %v1518, %v1589
    %1591 = vmatmul.bf16.gmra.mxu0 %v1495
    %v1592 = vpop.f32.mrf.mxu0
    %v1593 = vadd.f32 %v1518, %v1592
    %v1594 = vpop.f32.mrf.mxu0
    %v1595 = vadd.f32 %v1518, %v1594
    %1596 = vmatmul.bf16.gmra.mxu0 %v1496
    %v1597 = vpop.f32.mrf.mxu0
    %v1598 = vadd.f32 %v1518, %v1597
    %v1599 = vpop.f32.mrf.mxu0
    %v1600 = vadd.f32 %v1518, %v1599
    %1601 = vmatmul.bf16.gmra.mxu0 %v1497
    %v1602 = vpop.f32.mrf.mxu0
    %v1603 = vadd.f32 %v1518, %v1602
    %v1604 = vpop.f32.mrf.mxu0
    %v1605 = vadd.f32 %v1518, %v1604
    %1606 = vmatmul.bf16.gmra.mxu0 %v1498
    %v1607 = vpop.f32.mrf.mxu0
    %v1608 = vadd.f32 %v1518, %v1607
    %v1609 = vpop.f32.mrf.mxu0
    %v1610 = vadd.f32 %v1518, %v1609
    %1611 = vmatmul.bf16.gmra.mxu0 %v1499
    %v1612 = vpop.f32.mrf.mxu0
    %v1613 = vadd.f32 %v1518, %v1612
    %v1614 = vpop.f32.mrf.mxu0
    %v1615 = vadd.f32 %v1518, %v1614
    %1616 = vdwg.mxu0
    %1617 = vst [vmem:[#allocation10] sm:$0xff] %v1578
    %1618 = vst [vmem:[#allocation10 + $0x8] sm:$0xff] %v1580
    %1619 = vst [vmem:[#allocation10 + $0x10] sm:$0xff] %v1583
    %1620 = vst [vmem:[#allocation10 + $0x18] sm:$0xff] %v1585
    %1621 = vst [vmem:[#allocation10 + $0x20] sm:$0xff] %v1588
    %1622 = vst [vmem:[#allocation10 + $0x28] sm:$0xff] %v1590
    %1623 = vst [vmem:[#allocation10 + $0x30] sm:$0xff] %v1593
    %1624 = vst [vmem:[#allocation10 + $0x38] sm:$0xff] %v1595
    %1625 = vst [vmem:[#allocation10 + $0x40] sm:$0xff] %v1598
    %1626 = vst [vmem:[#allocation10 + $0x48] sm:$0xff] %v1600
    %1627 = vst [vmem:[#allocation10 + $0x50] sm:$0xff] %v1603
    %1628 = vst [vmem:[#allocation10 + $0x58] sm:$0xff] %v1605
    %1629 = vst [vmem:[#allocation10 + $0x60] sm:$0xff] %v1608
    %1630 = vst [vmem:[#allocation10 + $0x68] sm:$0xff] %v1610
    %1631 = vst [vmem:[#allocation10 + $0x70] sm:$0xff] %v1613
    %1632 = vst [vmem:[#allocation10 + $0x78] sm:$0xff] %v1615
    // Predicated region
    $region62: #{tpu_custom_call.1} parent=1 // pred_check
      _
    $region63: #{tpu_custom_call.1} parent=1 // pred_check_branch
      %1634 = sbr.rel (0) target = $region65
    $region64: #{tpu_custom_call.1} parent=1 // pred_region
      %1636 = vsyncadd [#allocation4], 0
      %s1637 = sshll.u32 [#allocation10], 4
      %s1638 = int_to_ptr.vmem [resolvable:$true] %s1637
      %s1639 = sshll.u32 %s11, 4
      %s1640 = int_to_ptr.hbm [resolvable:$true] %s1639
      %1645 = dma.vmem_to_hbm [thread:$0]  %s1638, 2048, %s1640, [#allocation4], 128, 128, 8
    $region65: #{tpu_custom_call.1} parent=1 // pred_fallthru
      _
    // Predicated region
    $region66: #{tpu_custom_call.1} parent=1 // pred_check
      _
    $region67: #{tpu_custom_call.1} parent=1 // pred_check_branch
      %1647 = sbr.rel (0) target = $region69
    $region68: #{tpu_custom_call.1} parent=1 // pred_region
      %1649 = dma.done [#allocation4], 2048
    $region69: #{tpu_custom_call.1} parent=1 // pred_fallthru
      _
    %1650 = vsyncpa [#allocation3], 1
    %1651 = vsyncpa [#allocation6], 1
    %1652 = vsyncpa [#allocation9], 1
    %1653 = vsyncpa [#allocation4], 1

</llo_original>
